<compile_context>
chip_gen: v6e
topology: v6e:2x2x1
jax: 0.10.0
libtpu: 0.0.40
codegen_flags: <defaults>
</compile_context>

<pallas_src>
import functools

import jax
import jax.numpy as jnp
import numpy as np
from jax.experimental import pallas as pl
from jax.experimental.pallas import tpu as pltpu


def _round_up(x, m):
    return (x + m - 1) // m * m


# ---------------------------------------------------------------------------
# Kernel: for one (batch, P-tile) grid step
#   out = relu6( sum_{kh,kw} W[kh,kw] @ x_flat[:, q0+off(kh,kw) : +TP]
#                + bias + x2 )
#   w_ref : (kH*kW, C_out_pad, C_in_pad)  bf16   (whole, resident)
#   b_ref : (C_out_pad, 1)                f32    (whole, resident)
#   x_ref : (1, C_in_pad, Lpad)           bf16   (whole per batch, resident)
#   x2_ref: (1, C_out_pad, TP)            bf16   (tiled over flat-wide P)
#   o_ref : (1, C_out_pad, TP)            out dtype
# ---------------------------------------------------------------------------
def _make_kernel(offsets, tp, window_w):
    def kernel(w_ref, b_ref, x_ref, x2_ref, o_ref):
        q0 = pl.multiple_of(pl.program_id(1) * tp, 128)
        # One aligned load covering all taps of this tile; per-tap patches are
        # cheap static lane-shifted slices of it (no HBM im2col).
        window = x_ref[0, :, pl.ds(q0, window_w)]          # (C_in_pad, window_w)
        acc = b_ref[...] + x2_ref[0].astype(jnp.float32)   # (C_out_pad, tp)
        for idx, off in enumerate(offsets):
            patch = window[:, off:off + tp]                # (C_in_pad, tp) bf16
            acc = acc + jnp.dot(w_ref[idx], patch,
                                preferred_element_type=jnp.float32)
        o_ref[0] = jnp.minimum(jnp.maximum(acc, 0.0), 6.0).astype(o_ref.dtype)
    return kernel


# ---------------------------------------------------------------------------
# ConvTransposeAddReLU62d.forward equivalent:
#   relu6(conv_transpose2d(x1, weight, bias) + x2)
# weight layout follows PyTorch ConvTranspose2d: (C_in, C_out, kH, kW).
# ---------------------------------------------------------------------------
@functools.partial(jax.jit, static_argnames=("stride", "padding",
                                             "output_padding", "dilation"))
def conv_transpose_add_relu6_2d(x1, x2, weight, bias,
                                stride=(1, 1), padding=(0, 0),
                                output_padding=(0, 0), dilation=(1, 1)):
    N, C_in, H, W = x1.shape
    _, C_out, kH, kW = weight.shape
    sH, sW = stride
    pH, pW = padding
    opH, opW = output_padding
    dH, dW = dilation

    Ho = (H - 1) * sH - 2 * pH + dH * (kH - 1) + opH + 1
    Wo = (W - 1) * sW - 2 * pW + dW * (kW - 1) + opW + 1
    assert x2.shape == (N, C_out, Ho, Wo), (x2.shape, (N, C_out, Ho, Wo))

    # --- static geometry ---------------------------------------------------
    Hp = Ho + dH * (kH - 1)        # zero-stuffed + edge-padded height
    Wp = Wo + dW * (kW - 1)        # zero-stuffed + edge-padded width
    C_in_pad = _round_up(C_in, 8)
    C_out_pad = _round_up(C_out, 8)

    # Wide-flat output domain: Ho rows of width Wp (the extra Wp-Wo columns per
    # row are junk, sliced off at the end).  In this domain each tap offset is
    # a constant:  src(q; kh, kw) = q + kh*dH*Wp + kw*dW.
    Q = Ho * Wp
    p_steps = max(1, -(-4 // N))                   # keep >= 4 total grid steps
    tp = _round_up(-(-Q // p_steps), 128)
    tp = max(128, min(tp, 2048))
    Qp = _round_up(Q, tp)
    max_off = (kH - 1) * dH * Wp + (kW - 1) * dW
    ext = _round_up(max_off, 128)
    Lpad = Qp + ext                                # flat input length (128-mult)
    window_w = tp + ext

    # --- input: zero-stuff + pad (lax.pad handles crop for big padding),
    #     cast to bf16 early, flatten with width Wp ---------------------------
    lo_h = dH * (kH - 1) - pH
    lo_w = dW * (kW - 1) - pW
    x_p = jax.lax.pad(
        x1.astype(jnp.bfloat16), jnp.zeros((), jnp.bfloat16),
        [(0, 0, 0), (0, 0, 0),
         (lo_h, lo_h + opH, sH - 1),
         (lo_w, lo_w + opW, sW - 1)])                        # (N, C_in, Hp, Wp)
    x_p = jnp.pad(x_p, ((0, 0), (0, C_in_pad - C_in), (0, 0), (0, 0)))
    x_flat = x_p.reshape(N, C_in_pad, Hp * Wp)
    x_flat = jnp.pad(x_flat, ((0, 0), (0, 0), (0, Lpad - Hp * Wp)))

    # --- weights: flip, reorder to (kH*kW, C_out, C_in), pad, bf16 ----------
    w_k = jnp.transpose(weight[:, :, ::-1, ::-1], (2, 3, 1, 0))  # (kH,kW,Co,Ci)
    w_k = w_k.reshape(kH * kW, C_out, C_in)
    w_k = jnp.pad(w_k, ((0, 0), (0, C_out_pad - C_out),
                        (0, C_in_pad - C_in))).astype(jnp.bfloat16)
    b_p = jnp.pad(bias.astype(jnp.float32),
                  (0, C_out_pad - C_out)).reshape(C_out_pad, 1)

    # --- residual: channel/width pad + bf16 cast in one fused pass ----------
    x2_w = jnp.pad(x2.astype(jnp.bfloat16),
                   ((0, 0), (0, C_out_pad - C_out), (0, 0), (0, Wp - Wo)))
    x2_w = x2_w.reshape(N, C_out_pad, Q)
    x2_w = jnp.pad(x2_w, ((0, 0), (0, 0), (0, Qp - Q)))

    out_dtype = x1.dtype
    offsets = tuple(kh * dH * Wp + kw * dW
                    for kh in range(kH) for kw in range(kW))
    kernel = _make_kernel(offsets, tp, window_w)

    # Explicit VMEM budget (v7x has the smallest VMEM): double-buffered blocks
    # plus headroom.
    blk_bytes = (kH * kW * C_out_pad * C_in_pad * 2        # weights (bf16)
                 + C_out_pad * 4                            # bias (f32)
                 + C_in_pad * Lpad * 2                      # resident input
                 + C_out_pad * tp * 2                       # x2 tile (bf16)
                 + C_out_pad * tp * jnp.dtype(out_dtype).itemsize)
    vmem_limit = int(min(100 << 20, max(8 << 20, 2 * blk_bytes + (4 << 20))))

    out_w = pl.pallas_call(
        kernel,
        out_shape=jax.ShapeDtypeStruct((N, C_out_pad, Qp), out_dtype),
        grid_spec=pltpu.PrefetchScalarGridSpec(
            num_scalar_prefetch=0,
            grid=(N, Qp // tp),
            in_specs=[
                pl.BlockSpec((kH * kW, C_out_pad, C_in_pad),
                             lambda n, p: (0, 0, 0)),
                pl.BlockSpec((C_out_pad, 1), lambda n, p: (0, 0)),
                pl.BlockSpec((1, C_in_pad, Lpad), lambda n, p: (n, 0, 0)),
                pl.BlockSpec((1, C_out_pad, tp), lambda n, p: (n, 0, p)),
            ],
            out_specs=pl.BlockSpec((1, C_out_pad, tp), lambda n, p: (n, 0, p)),
        ),
        compiler_params=pltpu.CompilerParams(
            dimension_semantics=("parallel", "parallel"),
            vmem_limit_bytes=vmem_limit),
    )(w_k, b_p, x_flat, x2_w)

    # Drop padded channels, junk width columns and the flat-tail padding.
    out = out_w[:, :C_out, :Q].reshape(N, C_out, Ho, Wp)[:, :, :, :Wo]
    return out


# ---------------------------------------------------------------------------
# Pure-JAX (XLA) reference of the same forward pass, in full f32.
# ---------------------------------------------------------------------------
def _reference(x1, x2, weight, bias, stride, padding, output_padding, dilation):
    kH, kW = weight.shape[2], weight.shape[3]
    w_conv = jnp.transpose(weight[:, :, ::-1, ::-1], (1, 0, 2, 3))
    pad_h = dilation[0] * (kH - 1) - padding[0]
    pad_w = dilation[1] * (kW - 1) - padding[1]
    y = jax.lax.conv_general_dilated(
        x1, w_conv,
        window_strides=(1, 1),
        padding=[(pad_h, pad_h + output_padding[0]),
                 (pad_w, pad_w + output_padding[1])],
        lhs_dilation=stride,
        rhs_dilation=dilation,
        dimension_numbers=("NCHW", "OIHW", "NCHW"))
    y = y + bias[None, :, None, None] + x2
    return jnp.clip(y, 0.0, 6.0)


if __name__ == "__main__":
    key = jax.random.PRNGKey(0)
    N, C_in, H, W = 2, 4, 16, 16
    C_out, kH, kW = 8, 4, 4
    stride, padding = (2, 2), (1, 1)
    output_padding, dilation = (0, 0), (1, 1)

    Ho = (H - 1) * stride[0] - 2 * padding[0] + dilation[0] * (kH - 1) \
        + output_padding[0] + 1
    Wo = (W - 1) * stride[1] - 2 * padding[1] + dilation[1] * (kW - 1) \
        + output_padding[1] + 1

    k1, k2, k3, k4 = jax.random.split(key, 4)
    x1 = jax.random.normal(k1, (N, C_in, H, W), jnp.float32)
    weight = 0.1 * jax.random.normal(k2, (C_in, C_out, kH, kW), jnp.float32)
    bias = 0.1 * jax.random.normal(k3, (C_out,), jnp.float32)
    x2 = jax.random.normal(k4, (N, C_out, Ho, Wo), jnp.float32)

    out = conv_transpose_add_relu6_2d(
        x1, x2, weight, bias,
        stride=stride, padding=padding,
        output_padding=output_padding, dilation=dilation)
    out = jax.block_until_ready(out)
    assert out.shape == (N, C_out, Ho, Wo)
    assert out.dtype == x1.dtype

    ref = _reference(x1, x2, weight, bias, stride, padding,
                     output_padding, dilation)
    # bf16 GEMM operands + bf16 residual vs. f32 reference -> loose tolerance.
    np.testing.assert_allclose(np.asarray(out), np.asarray(ref),
                               rtol=5e-2, atol=5e-2)

    print("KERNEL_OK")
</pallas_src>

<mosaic_0001>
module attributes {stable_mosaic.version = 11 : i64} {
  func.func @kernel(%arg0: i32, %arg1: i32, %arg2: memref<16x8x8xbf16, #tpu.memory_space<vmem>>, %arg3: memref<8x1xf32, #tpu.memory_space<vmem>>, %arg4: memref<1x8x1408xbf16, #tpu.memory_space<vmem>>, %arg5: memref<1x8x640xbf16, #tpu.memory_space<vmem>>, %arg6: memref<1x8x640xf32, #tpu.memory_space<vmem>>) attributes {dimension_semantics = [#tpu.dimension_semantics<parallel>, #tpu.dimension_semantics<parallel>], iteration_bounds = array<i64: 2, 2>, scalar_prefetch = 0 : i64, scratch_operands = 0 : i64, tpu.core_type = #tpu.core_type<tc>, window_params = [{pipeline_mode = #tpu.pipeline_mode<synchronous>, transform_indices = @transform_0, window_bounds = array<i64: 16, 8, 8>}, {pipeline_mode = #tpu.pipeline_mode<synchronous>, transform_indices = @transform_1, window_bounds = array<i64: 8, 1>}, {transform_indices = @transform_2, window_bounds = array<i64: 1, 8, 1408>}, {transform_indices = @transform_3, window_bounds = array<i64: 1, 8, 640>}, {transform_indices = @transform_4, window_bounds = array<i64: 1, 8, 640>}]} {
    %c640_i32 = arith.constant 640 : i32
    %0 = arith.muli %arg1, %c640_i32 : i32
    %1 = tpu.assume_multiple %0, 128 : i32
    %c0 = arith.constant 0 : index
    %c0_0 = arith.constant 0 : index
    %2 = arith.index_cast %1 : i32 to index
    %3 = vector.load %arg4[%c0, %c0_0, %2] : memref<1x8x1408xbf16, #tpu.memory_space<vmem>>, vector<1x8x768xbf16>
    %4 = vector.shape_cast %3 : vector<1x8x768xbf16> to vector<8x768xbf16>
    %c0_1 = arith.constant 0 : index
    %c0_2 = arith.constant 0 : index
    %5 = vector.load %arg3[%c0_1, %c0_2] : memref<8x1xf32, #tpu.memory_space<vmem>>, vector<8x1xf32>
    %c0_3 = arith.constant 0 : index
    %c0_4 = arith.constant 0 : index
    %c0_5 = arith.constant 0 : index
    %6 = vector.load %arg5[%c0_3, %c0_4, %c0_5] : memref<1x8x640xbf16, #tpu.memory_space<vmem>>, vector<1x8x640xbf16>
    %7 = vector.shape_cast %6 : vector<1x8x640xbf16> to vector<8x640xbf16>
    %8 = arith.extf %7 : vector<8x640xbf16> to vector<8x640xf32>
    %9 = vector.broadcast %5 : vector<8x1xf32> to vector<8x640xf32>
    %10 = arith.addf %9, %8 : vector<8x640xf32>
    %11 = vector.extract_strided_slice %4 {offsets = [0, 0], sizes = [8, 640], strides = [1, 1]} : vector<8x768xbf16> to vector<8x640xbf16>
    %c0_6 = arith.constant 0 : index
    %c0_7 = arith.constant 0 : index
    %c0_8 = arith.constant 0 : index
    %12 = vector.load %arg2[%c0_6, %c0_7, %c0_8] : memref<16x8x8xbf16, #tpu.memory_space<vmem>>, vector<1x8x8xbf16>
    %13 = vector.shape_cast %12 : vector<1x8x8xbf16> to vector<8x8xbf16>
    %cst = arith.constant dense<0.000000e+00> : vector<8x640xf32>
    %14 = tpu.matmul %13, %11, %cst {dimension_numbers = #tpu.dot_dimension_numbers<[1], [0], [0], [1], [0, 0, 1, 1], [], []>} : vector<8x8xbf16>, vector<8x640xbf16>, vector<8x640xf32> -> vector<8x640xf32>
    %15 = arith.addf %10, %14 : vector<8x640xf32>
    %16 = vector.extract_strided_slice %4 {offsets = [0, 1], sizes = [8, 640], strides = [1, 1]} : vector<8x768xbf16> to vector<8x640xbf16>
    %c1 = arith.constant 1 : index
    %c0_9 = arith.constant 0 : index
    %c0_10 = arith.constant 0 : index
    %17 = vector.load %arg2[%c1, %c0_9, %c0_10] : memref<16x8x8xbf16, #tpu.memory_space<vmem>>, vector<1x8x8xbf16>
    %18 = vector.shape_cast %17 : vector<1x8x8xbf16> to vector<8x8xbf16>
    %cst_11 = arith.constant dense<0.000000e+00> : vector<8x640xf32>
    %19 = tpu.matmul %18, %16, %cst_11 {dimension_numbers = #tpu.dot_dimension_numbers<[1], [0], [0], [1], [0, 0, 1, 1], [], []>} : vector<8x8xbf16>, vector<8x640xbf16>, vector<8x640xf32> -> vector<8x640xf32>
    %20 = arith.addf %15, %19 : vector<8x640xf32>
    %21 = vector.extract_strided_slice %4 {offsets = [0, 2], sizes = [8, 640], strides = [1, 1]} : vector<8x768xbf16> to vector<8x640xbf16>
    %c2 = arith.constant 2 : index
    %c0_12 = arith.constant 0 : index
    %c0_13 = arith.constant 0 : index
    %22 = vector.load %arg2[%c2, %c0_12, %c0_13] : memref<16x8x8xbf16, #tpu.memory_space<vmem>>, vector<1x8x8xbf16>
    %23 = vector.shape_cast %22 : vector<1x8x8xbf16> to vector<8x8xbf16>
    %cst_14 = arith.constant dense<0.000000e+00> : vector<8x640xf32>
    %24 = tpu.matmul %23, %21, %cst_14 {dimension_numbers = #tpu.dot_dimension_numbers<[1], [0], [0], [1], [0, 0, 1, 1], [], []>} : vector<8x8xbf16>, vector<8x640xbf16>, vector<8x640xf32> -> vector<8x640xf32>
    %25 = arith.addf %20, %24 : vector<8x640xf32>
    %26 = vector.extract_strided_slice %4 {offsets = [0, 3], sizes = [8, 640], strides = [1, 1]} : vector<8x768xbf16> to vector<8x640xbf16>
    %c3 = arith.constant 3 : index
    %c0_15 = arith.constant 0 : index
    %c0_16 = arith.constant 0 : index
    %27 = vector.load %arg2[%c3, %c0_15, %c0_16] : memref<16x8x8xbf16, #tpu.memory_space<vmem>>, vector<1x8x8xbf16>
    %28 = vector.shape_cast %27 : vector<1x8x8xbf16> to vector<8x8xbf16>
    %cst_17 = arith.constant dense<0.000000e+00> : vector<8x640xf32>
    %29 = tpu.matmul %28, %26, %cst_17 {dimension_numbers = #tpu.dot_dimension_numbers<[1], [0], [0], [1], [0, 0, 1, 1], [], []>} : vector<8x8xbf16>, vector<8x640xbf16>, vector<8x640xf32> -> vector<8x640xf32>
    %30 = arith.addf %25, %29 : vector<8x640xf32>
    %31 = vector.extract_strided_slice %4 {offsets = [0, 35], sizes = [8, 640], strides = [1, 1]} : vector<8x768xbf16> to vector<8x640xbf16>
    %c4 = arith.constant 4 : index
    %c0_18 = arith.constant 0 : index
    %c0_19 = arith.constant 0 : index
    %32 = vector.load %arg2[%c4, %c0_18, %c0_19] : memref<16x8x8xbf16, #tpu.memory_space<vmem>>, vector<1x8x8xbf16>
    %33 = vector.shape_cast %32 : vector<1x8x8xbf16> to vector<8x8xbf16>
    %cst_20 = arith.constant dense<0.000000e+00> : vector<8x640xf32>
    %34 = tpu.matmul %33, %31, %cst_20 {dimension_numbers = #tpu.dot_dimension_numbers<[1], [0], [0], [1], [0, 0, 1, 1], [], []>} : vector<8x8xbf16>, vector<8x640xbf16>, vector<8x640xf32> -> vector<8x640xf32>
    %35 = arith.addf %30, %34 : vector<8x640xf32>
    %36 = vector.extract_strided_slice %4 {offsets = [0, 36], sizes = [8, 640], strides = [1, 1]} : vector<8x768xbf16> to vector<8x640xbf16>
    %c5 = arith.constant 5 : index
    %c0_21 = arith.constant 0 : index
    %c0_22 = arith.constant 0 : index
    %37 = vector.load %arg2[%c5, %c0_21, %c0_22] : memref<16x8x8xbf16, #tpu.memory_space<vmem>>, vector<1x8x8xbf16>
    %38 = vector.shape_cast %37 : vector<1x8x8xbf16> to vector<8x8xbf16>
    %cst_23 = arith.constant dense<0.000000e+00> : vector<8x640xf32>
    %39 = tpu.matmul %38, %36, %cst_23 {dimension_numbers = #tpu.dot_dimension_numbers<[1], [0], [0], [1], [0, 0, 1, 1], [], []>} : vector<8x8xbf16>, vector<8x640xbf16>, vector<8x640xf32> -> vector<8x640xf32>
    %40 = arith.addf %35, %39 : vector<8x640xf32>
    %41 = vector.extract_strided_slice %4 {offsets = [0, 37], sizes = [8, 640], strides = [1, 1]} : vector<8x768xbf16> to vector<8x640xbf16>
    %c6 = arith.constant 6 : index
    %c0_24 = arith.constant 0 : index
    %c0_25 = arith.constant 0 : index
    %42 = vector.load %arg2[%c6, %c0_24, %c0_25] : memref<16x8x8xbf16, #tpu.memory_space<vmem>>, vector<1x8x8xbf16>
    %43 = vector.shape_cast %42 : vector<1x8x8xbf16> to vector<8x8xbf16>
    %cst_26 = arith.constant dense<0.000000e+00> : vector<8x640xf32>
    %44 = tpu.matmul %43, %41, %cst_26 {dimension_numbers = #tpu.dot_dimension_numbers<[1], [0], [0], [1], [0, 0, 1, 1], [], []>} : vector<8x8xbf16>, vector<8x640xbf16>, vector<8x640xf32> -> vector<8x640xf32>
    %45 = arith.addf %40, %44 : vector<8x640xf32>
    %46 = vector.extract_strided_slice %4 {offsets = [0, 38], sizes = [8, 640], strides = [1, 1]} : vector<8x768xbf16> to vector<8x640xbf16>
    %c7 = arith.constant 7 : index
    %c0_27 = arith.constant 0 : index
    %c0_28 = arith.constant 0 : index
    %47 = vector.load %arg2[%c7, %c0_27, %c0_28] : memref<16x8x8xbf16, #tpu.memory_space<vmem>>, vector<1x8x8xbf16>
    %48 = vector.shape_cast %47 : vector<1x8x8xbf16> to vector<8x8xbf16>
    %cst_29 = arith.constant dense<0.000000e+00> : vector<8x640xf32>
    %49 = tpu.matmul %48, %46, %cst_29 {dimension_numbers = #tpu.dot_dimension_numbers<[1], [0], [0], [1], [0, 0, 1, 1], [], []>} : vector<8x8xbf16>, vector<8x640xbf16>, vector<8x640xf32> -> vector<8x640xf32>
    %50 = arith.addf %45, %49 : vector<8x640xf32>
    %51 = vector.extract_strided_slice %4 {offsets = [0, 70], sizes = [8, 640], strides = [1, 1]} : vector<8x768xbf16> to vector<8x640xbf16>
    %c8 = arith.constant 8 : index
    %c0_30 = arith.constant 0 : index
    %c0_31 = arith.constant 0 : index
    %52 = vector.load %arg2[%c8, %c0_30, %c0_31] : memref<16x8x8xbf16, #tpu.memory_space<vmem>>, vector<1x8x8xbf16>
    %53 = vector.shape_cast %52 : vector<1x8x8xbf16> to vector<8x8xbf16>
    %cst_32 = arith.constant dense<0.000000e+00> : vector<8x640xf32>
    %54 = tpu.matmul %53, %51, %cst_32 {dimension_numbers = #tpu.dot_dimension_numbers<[1], [0], [0], [1], [0, 0, 1, 1], [], []>} : vector<8x8xbf16>, vector<8x640xbf16>, vector<8x640xf32> -> vector<8x640xf32>
    %55 = arith.addf %50, %54 : vector<8x640xf32>
    %56 = vector.extract_strided_slice %4 {offsets = [0, 71], sizes = [8, 640], strides = [1, 1]} : vector<8x768xbf16> to vector<8x640xbf16>
    %c9 = arith.constant 9 : index
    %c0_33 = arith.constant 0 : index
    %c0_34 = arith.constant 0 : index
    %57 = vector.load %arg2[%c9, %c0_33, %c0_34] : memref<16x8x8xbf16, #tpu.memory_space<vmem>>, vector<1x8x8xbf16>
    %58 = vector.shape_cast %57 : vector<1x8x8xbf16> to vector<8x8xbf16>
    %cst_35 = arith.constant dense<0.000000e+00> : vector<8x640xf32>
    %59 = tpu.matmul %58, %56, %cst_35 {dimension_numbers = #tpu.dot_dimension_numbers<[1], [0], [0], [1], [0, 0, 1, 1], [], []>} : vector<8x8xbf16>, vector<8x640xbf16>, vector<8x640xf32> -> vector<8x640xf32>
    %60 = arith.addf %55, %59 : vector<8x640xf32>
    %61 = vector.extract_strided_slice %4 {offsets = [0, 72], sizes = [8, 640], strides = [1, 1]} : vector<8x768xbf16> to vector<8x640xbf16>
    %c10 = arith.constant 10 : index
    %c0_36 = arith.constant 0 : index
    %c0_37 = arith.constant 0 : index
    %62 = vector.load %arg2[%c10, %c0_36, %c0_37] : memref<16x8x8xbf16, #tpu.memory_space<vmem>>, vector<1x8x8xbf16>
    %63 = vector.shape_cast %62 : vector<1x8x8xbf16> to vector<8x8xbf16>
    %cst_38 = arith.constant dense<0.000000e+00> : vector<8x640xf32>
    %64 = tpu.matmul %63, %61, %cst_38 {dimension_numbers = #tpu.dot_dimension_numbers<[1], [0], [0], [1], [0, 0, 1, 1], [], []>} : vector<8x8xbf16>, vector<8x640xbf16>, vector<8x640xf32> -> vector<8x640xf32>
    %65 = arith.addf %60, %64 : vector<8x640xf32>
    %66 = vector.extract_strided_slice %4 {offsets = [0, 73], sizes = [8, 640], strides = [1, 1]} : vector<8x768xbf16> to vector<8x640xbf16>
    %c11 = arith.constant 11 : index
    %c0_39 = arith.constant 0 : index
    %c0_40 = arith.constant 0 : index
    %67 = vector.load %arg2[%c11, %c0_39, %c0_40] : memref<16x8x8xbf16, #tpu.memory_space<vmem>>, vector<1x8x8xbf16>
    %68 = vector.shape_cast %67 : vector<1x8x8xbf16> to vector<8x8xbf16>
    %cst_41 = arith.constant dense<0.000000e+00> : vector<8x640xf32>
    %69 = tpu.matmul %68, %66, %cst_41 {dimension_numbers = #tpu.dot_dimension_numbers<[1], [0], [0], [1], [0, 0, 1, 1], [], []>} : vector<8x8xbf16>, vector<8x640xbf16>, vector<8x640xf32> -> vector<8x640xf32>
    %70 = arith.addf %65, %69 : vector<8x640xf32>
    %71 = vector.extract_strided_slice %4 {offsets = [0, 105], sizes = [8, 640], strides = [1, 1]} : vector<8x768xbf16> to vector<8x640xbf16>
    %c12 = arith.constant 12 : index
    %c0_42 = arith.constant 0 : index
    %c0_43 = arith.constant 0 : index
    %72 = vector.load %arg2[%c12, %c0_42, %c0_43] : memref<16x8x8xbf16, #tpu.memory_space<vmem>>, vector<1x8x8xbf16>
    %73 = vector.shape_cast %72 : vector<1x8x8xbf16> to vector<8x8xbf16>
    %cst_44 = arith.constant dense<0.000000e+00> : vector<8x640xf32>
    %74 = tpu.matmul %73, %71, %cst_44 {dimension_numbers = #tpu.dot_dimension_numbers<[1], [0], [0], [1], [0, 0, 1, 1], [], []>} : vector<8x8xbf16>, vector<8x640xbf16>, vector<8x640xf32> -> vector<8x640xf32>
    %75 = arith.addf %70, %74 : vector<8x640xf32>
    %76 = vector.extract_strided_slice %4 {offsets = [0, 106], sizes = [8, 640], strides = [1, 1]} : vector<8x768xbf16> to vector<8x640xbf16>
    %c13 = arith.constant 13 : index
    %c0_45 = arith.constant 0 : index
    %c0_46 = arith.constant 0 : index
    %77 = vector.load %arg2[%c13, %c0_45, %c0_46] : memref<16x8x8xbf16, #tpu.memory_space<vmem>>, vector<1x8x8xbf16>
    %78 = vector.shape_cast %77 : vector<1x8x8xbf16> to vector<8x8xbf16>
    %cst_47 = arith.constant dense<0.000000e+00> : vector<8x640xf32>
    %79 = tpu.matmul %78, %76, %cst_47 {dimension_numbers = #tpu.dot_dimension_numbers<[1], [0], [0], [1], [0, 0, 1, 1], [], []>} : vector<8x8xbf16>, vector<8x640xbf16>, vector<8x640xf32> -> vector<8x640xf32>
    %80 = arith.addf %75, %79 : vector<8x640xf32>
    %81 = vector.extract_strided_slice %4 {offsets = [0, 107], sizes = [8, 640], strides = [1, 1]} : vector<8x768xbf16> to vector<8x640xbf16>
    %c14 = arith.constant 14 : index
    %c0_48 = arith.constant 0 : index
    %c0_49 = arith.constant 0 : index
    %82 = vector.load %arg2[%c14, %c0_48, %c0_49] : memref<16x8x8xbf16, #tpu.memory_space<vmem>>, vector<1x8x8xbf16>
    %83 = vector.shape_cast %82 : vector<1x8x8xbf16> to vector<8x8xbf16>
    %cst_50 = arith.constant dense<0.000000e+00> : vector<8x640xf32>
    %84 = tpu.matmul %83, %81, %cst_50 {dimension_numbers = #tpu.dot_dimension_numbers<[1], [0], [0], [1], [0, 0, 1, 1], [], []>} : vector<8x8xbf16>, vector<8x640xbf16>, vector<8x640xf32> -> vector<8x640xf32>
    %85 = arith.addf %80, %84 : vector<8x640xf32>
    %86 = vector.extract_strided_slice %4 {offsets = [0, 108], sizes = [8, 640], strides = [1, 1]} : vector<8x768xbf16> to vector<8x640xbf16>
    %c15 = arith.constant 15 : index
    %c0_51 = arith.constant 0 : index
    %c0_52 = arith.constant 0 : index
    %87 = vector.load %arg2[%c15, %c0_51, %c0_52] : memref<16x8x8xbf16, #tpu.memory_space<vmem>>, vector<1x8x8xbf16>
    %88 = vector.shape_cast %87 : vector<1x8x8xbf16> to vector<8x8xbf16>
    %cst_53 = arith.constant dense<0.000000e+00> : vector<8x640xf32>
    %89 = tpu.matmul %88, %86, %cst_53 {dimension_numbers = #tpu.dot_dimension_numbers<[1], [0], [0], [1], [0, 0, 1, 1], [], []>} : vector<8x8xbf16>, vector<8x640xbf16>, vector<8x640xf32> -> vector<8x640xf32>
    %90 = arith.addf %85, %89 : vector<8x640xf32>
    %cst_54 = arith.constant 0.000000e+00 : f32
    %91 = vector.broadcast %cst_54 : f32 to vector<8x640xf32>
    %92 = arith.maximumf %90, %91 : vector<8x640xf32>
    %cst_55 = arith.constant 6.000000e+00 : f32
    %93 = vector.broadcast %cst_55 : f32 to vector<8x640xf32>
    %94 = arith.minimumf %92, %93 : vector<8x640xf32>
    %c0_56 = arith.constant 0 : index
    %c0_57 = arith.constant 0 : index
    %c0_58 = arith.constant 0 : index
    %95 = vector.load %arg6[%c0_56, %c0_57, %c0_58] : memref<1x8x640xf32, #tpu.memory_space<vmem>>, vector<1x8x640xf32>
    %96 = vector.shape_cast %95 : vector<1x8x640xf32> to vector<8x640xf32>
    %97 = vector.shape_cast %94 : vector<8x640xf32> to vector<1x8x640xf32>
    tpu.vector_store %arg6[%c0_56, %c0_57, %c0_58], %97 {strides = array<i32>} : memref<1x8x640xf32, #tpu.memory_space<vmem>>, vector<1x8x640xf32>,
    return
  }
  func.func @transform_0(%arg0: i32, %arg1: i32) -> (i32, i32, i32) {
    %c0_i32 = arith.constant 0 : i32
    %c0_i32_0 = arith.constant 0 : i32
    %c0_i32_1 = arith.constant 0 : i32
    %c0_i32_2 = arith.constant 0 : i32
    return %c0_i32, %c0_i32_0, %c0_i32_1 : i32, i32, i32
  }
  func.func @transform_1(%arg0: i32, %arg1: i32) -> (i32, i32) {
    %c0_i32 = arith.constant 0 : i32
    %c0_i32_0 = arith.constant 0 : i32
    %c0_i32_1 = arith.constant 0 : i32
    return %c0_i32, %c0_i32_0 : i32, i32
  }
  func.func @transform_2(%arg0: i32, %arg1: i32) -> (i32, i32, i32) {
    %c0_i32 = arith.constant 0 : i32
    %c0_i32_0 = arith.constant 0 : i32
    %c0_i32_1 = arith.constant 0 : i32
    return %arg0, %c0_i32, %c0_i32_0 : i32, i32, i32
  }
  func.func @transform_3(%arg0: i32, %arg1: i32) -> (i32, i32, i32) {
    %c0_i32 = arith.constant 0 : i32
    %c0_i32_0 = arith.constant 0 : i32
    return %arg0, %c0_i32, %arg1 : i32, i32, i32
  }
  func.func @transform_4(%arg0: i32, %arg1: i32) -> (i32, i32, i32) {
    %c0_i32 = arith.constant 0 : i32
    %c0_i32_0 = arith.constant 0 : i32
    return %arg0, %c0_i32, %arg1 : i32, i32, i32
  }
}

</mosaic_0001>

<llo_original>
// kernel: conv_transpose_add_relu6_2d.1
$region0: #{conv_transpose_add_relu6_2d.1}
  #allocation0 [shape = 'u32[]', space=smem, size = 0x4, offset = 0x4, fixed_abs, tag = 'smem constant byte address 0x4 - core index']
  #allocation1 [shape = 'u32[144,128]{1,0:T(1,128)}', space=vmem, size = 0x12000, scoped, tag = 'internal scratch']
  %s0 = inlined_call_operand.vmem [shape: bf16[16,8,8], index: 0, kind: input, shape index: {}]
  %s1 = inlined_call_operand.vmem [shape: f32[8,1], index: 1, kind: input, shape index: {}]
  %s2 = inlined_call_operand.vmem [shape: bf16[2,8,1408], index: 2, kind: input, shape index: {}]
  %s3 = inlined_call_operand.vmem [shape: bf16[2,8,1280], index: 3, kind: input, shape index: {}]
  %s4 = inlined_call_operand.vmem [shape: f32[2,8,1280], index: 4, kind: output, shape index: {}]
  %s5 = sld [smem:[#allocation0]]
  $region49: #{conv_transpose_add_relu6_2d.1} parent=0
    _
  %s7 = ssub.s32 1, %s5
  %s8 = scalar_select 0, %s7, %s5
  loop: start=0, step=1, limit=6
  $region2: #{conv_transpose_add_relu6_2d.1} parent=0 // loop_pre_header
    _
  $region3: #{conv_transpose_add_relu6_2d.1} parent=0 // loop_header
    %s10 = sphi 0, %s14
    %p11 = scmp.ge.s32.totalorder %s10, 6
    %s17 = sphi 0, %s29
    %s18 = sphi 0, %s25
    %s19 = sphi 0, %s17
    %s20 = sphi 0, %s18
    %s21 = sphi 0, %s19
    %s22 = sphi 0, %s20
    %s30 = sphi 0, %s30
    %s32 = sphi 0, %s30
    %s33 = sphi 0, %s32
    %s47 = sphi 0, %s33
    %s51 = sphi 0, %s51
    %s53 = sphi 0, %s51
    %s54 = sphi 0, %s53
    %s68 = sphi 0, %s54
    %s74 = sphi 0, %s76
    %s77 = sphi 0, %s74
    %s78 = sphi 0, %s77
    %s94 = sphi 0, %s78
    %s102 = sphi 0, %s104
    %s105 = sphi 0, %s102
    %s106 = sphi 0, %s105
    %s122 = sphi 0, %s106
    %s130 = sphi 0, %s132
    %s133 = sphi 0, %s130
    %s134 = sphi 0, %s133
    %s150 = sphi 0, %s134
  $region4: #{conv_transpose_add_relu6_2d.1} parent=0 // loop_header_branch
    %13 = sbr.rel (%p11) target = $region8
  $region5: #{conv_transpose_add_relu6_2d.1} parent=0 // loop_body
    %s15 = ssub.s32 %s10, 1
    %s16 = ssub.s32 %s10, 2
    %s23 = sadd.s32 1, %s18
    %p24 = scmp.ge.s32.totalorder %s23, 2
    %s25 = scalar_select %p24, 0, %s23
    %s26 = sadd.s32 1, %s17
    %s27 = scalar_select %p24, %s26, %s17
    %p28 = scmp.ge.s32.totalorder %s27, 2
    %s29 = scalar_select %p28, 0, %s27
    %s31 = sadd.s32 %s30, 1
    %p34 = scmp.eq.s32.totalorder %s10, 3
    %p35 = scmp.ne.s32.totalorder %s30, %s32
    %p36 = scmp.eq.s32.totalorder %s10, 0
    %p37 = por %p35, %p36
    %p38 = scmp.ne.s32.totalorder %s30, %s32
    %p39 = scmp.eq.s32.totalorder %s15, 3
    %p40 = por %p38, %p39
    %p41 = scmp.ne.s32.totalorder %s32, %s33
    %p42 = scmp.eq.s32.totalorder %s15, 0
    %p43 = por %p41, %p42
    %p44 = scmp.ne.s32.totalorder %s32, %s33
    %p45 = scmp.eq.s32.totalorder %s16, 3
    %p46 = por %p44, %p45
    %p48 = scmp.ne.s32.totalorder %s33, %s47
    %p49 = scmp.eq.s32.totalorder %s16, 0
    %p50 = por %p48, %p49
    %s52 = sadd.s32 %s51, 1
    %p55 = scmp.eq.s32.totalorder %s10, 3
    %p56 = scmp.ne.s32.totalorder %s51, %s53
    %p57 = scmp.eq.s32.totalorder %s10, 0
    %p58 = por %p56, %p57
    %p59 = scmp.ne.s32.totalorder %s51, %s53
    %p60 = scmp.eq.s32.totalorder %s15, 3
    %p61 = por %p59, %p60
    %p62 = scmp.ne.s32.totalorder %s53, %s54
    %p63 = scmp.eq.s32.totalorder %s15, 0
    %p64 = por %p62, %p63
    %p65 = scmp.ne.s32.totalorder %s53, %s54
    %p66 = scmp.eq.s32.totalorder %s16, 3
    %p67 = por %p65, %p66
    %p69 = scmp.ne.s32.totalorder %s54, %s68
    %p70 = scmp.eq.s32.totalorder %s16, 0
    %p71 = por %p69, %p70
    %s72 = ssub.s32 %s17, %s29
    %p73 = scmp.eq.s32.totalorder %s72, 0
    %s75 = sadd.s32 %s74, 1
    %s76 = scalar_select %p73, %s74, %s75
    %p79 = pneg %p73
    %p80 = scmp.eq.s32.totalorder %s10, 3
    %p81 = por %p79, %p80
    %p82 = scmp.ne.s32.totalorder %s74, %s77
    %p83 = scmp.eq.s32.totalorder %s10, 0
    %p84 = por %p82, %p83
    %p85 = scmp.ne.s32.totalorder %s74, %s77
    %p86 = scmp.eq.s32.totalorder %s15, 3
    %p87 = por %p85, %p86
    %p88 = scmp.ne.s32.totalorder %s77, %s78
    %p89 = scmp.eq.s32.totalorder %s15, 0
    %p90 = por %p88, %p89
    %p91 = scmp.ne.s32.totalorder %s77, %s78
    %p92 = scmp.eq.s32.totalorder %s16, 3
    %p93 = por %p91, %p92
    %p95 = scmp.ne.s32.totalorder %s78, %s94
    %p96 = scmp.eq.s32.totalorder %s16, 0
    %p97 = por %p95, %p96
    %s98 = ssub.s32 %s17, %s29
    %s99 = ssub.s32 %s18, %s25
    %s100 = sor.u32 %s98, %s99
    %p101 = scmp.eq.s32.totalorder %s100, 0
    %s103 = sadd.s32 %s102, 1
    %s104 = scalar_select %p101, %s102, %s103
    %p107 = pneg %p101
    %p108 = scmp.eq.s32.totalorder %s10, 3
    %p109 = por %p107, %p108
    %p110 = scmp.ne.s32.totalorder %s102, %s105
    %p111 = scmp.eq.s32.totalorder %s10, 0
    %p112 = por %p110, %p111
    %p113 = scmp.ne.s32.totalorder %s102, %s105
    %p114 = scmp.eq.s32.totalorder %s15, 3
    %p115 = por %p113, %p114
    %p116 = scmp.ne.s32.totalorder %s105, %s106
    %p117 = scmp.eq.s32.totalorder %s15, 0
    %p118 = por %p116, %p117
    %p119 = scmp.ne.s32.totalorder %s105, %s106
    %p120 = scmp.eq.s32.totalorder %s16, 3
    %p121 = por %p119, %p120
    %p123 = scmp.ne.s32.totalorder %s106, %s122
    %p124 = scmp.eq.s32.totalorder %s16, 0
    %p125 = por %p123, %p124
    %s126 = ssub.s32 %s17, %s29
    %s127 = ssub.s32 %s18, %s25
    %s128 = sor.u32 %s126, %s127
    %p129 = scmp.eq.s32.totalorder %s128, 0
    %s131 = sadd.s32 %s130, 1
    %s132 = scalar_select %p129, %s130, %s131
    %p135 = pneg %p129
    %p136 = scmp.eq.s32.totalorder %s10, 3
    %p137 = por %p135, %p136
    %p138 = scmp.ne.s32.totalorder %s130, %s133
    %p139 = scmp.eq.s32.totalorder %s10, 0
    %p140 = por %p138, %p139
    %p141 = scmp.ne.s32.totalorder %s130, %s133
    %p142 = scmp.eq.s32.totalorder %s15, 3
    %p143 = por %p141, %p142
    %p144 = scmp.ne.s32.totalorder %s133, %s134
    %p145 = scmp.eq.s32.totalorder %s15, 0
    %p146 = por %p144, %p145
    %p147 = scmp.ne.s32.totalorder %s133, %s134
    %p148 = scmp.eq.s32.totalorder %s16, 3
    %p149 = por %p147, %p148
    %p151 = scmp.ne.s32.totalorder %s134, %s150
    %p152 = scmp.eq.s32.totalorder %s16, 0
    %p153 = por %p151, %p152
    %p154 = scmp.le.s32.totalorder 1, %s10
    %p155 = scmp.lt.s32.totalorder %s10, 5
    %p156 = pnand %p154, %p155
    %p157 = pneg %p156
    // Predicated region
    $region9: #{conv_transpose_add_relu6_2d.1} parent=5 // pred_check
      _
    $region10: #{conv_transpose_add_relu6_2d.1} parent=5 // pred_check_branch
      %159 = sbr.rel (%p156) target = $region12
    $region11: #{conv_transpose_add_relu6_2d.1} parent=5 // pred_region
      %s160 = ssub.s32 %s10, 1
      // Predicated region
      $region13: #{conv_transpose_add_relu6_2d.1} parent=11 // pred_check
        %p161 = pneg %p43
      $region14: #{conv_transpose_add_relu6_2d.1} parent=11 // pred_check_branch
        %163 = sbr.rel (%p161) target = $region16
      $region15: #{conv_transpose_add_relu6_2d.1} parent=11 // pred_region
        _
      $region16: #{conv_transpose_add_relu6_2d.1} parent=11 // pred_fallthru
        _
      // Predicated region
      $region17: #{conv_transpose_add_relu6_2d.1} parent=11 // pred_check
        %p164 = pneg %p64
      $region18: #{conv_transpose_add_relu6_2d.1} parent=11 // pred_check_branch
        %166 = sbr.rel (%p164) target = $region20
      $region19: #{conv_transpose_add_relu6_2d.1} parent=11 // pred_region
        _
      $region20: #{conv_transpose_add_relu6_2d.1} parent=11 // pred_fallthru
        _
    $region12: #{conv_transpose_add_relu6_2d.1} parent=5 // pred_fallthru
      _
    %p167 = scmp.lt.s32.totalorder %s10, 4
    // Predicated region
    $region21: #{conv_transpose_add_relu6_2d.1} parent=5 // pred_check
      %p168 = pneg %p167
    $region22: #{conv_transpose_add_relu6_2d.1} parent=5 // pred_check_branch
      %170 = sbr.rel (%p168) target = $region24
    $region23: #{conv_transpose_add_relu6_2d.1} parent=5 // pred_region
      // Predicated region
      $region25: #{conv_transpose_add_relu6_2d.1} parent=23 // pred_check
        %p171 = pneg %p84
      $region26: #{conv_transpose_add_relu6_2d.1} parent=23 // pred_check_branch
        %173 = sbr.rel (%p171) target = $region28
      $region27: #{conv_transpose_add_relu6_2d.1} parent=23 // pred_region
        %p174 = scmp.lt.s32.totalorder %s17, 1
        %s175 = scalar_select %p174, %s17, 1
        %s176 = smul.addr %s175, 11
        %s177 = smul.addr %s176, 4
        %s178 = scalar_lea.vmem %s2, %s177
      $region28: #{conv_transpose_add_relu6_2d.1} parent=23 // pred_fallthru
        _
      // Predicated region
      $region29: #{conv_transpose_add_relu6_2d.1} parent=23 // pred_check
        %p179 = pneg %p112
      $region30: #{conv_transpose_add_relu6_2d.1} parent=23 // pred_check_branch
        %181 = sbr.rel (%p179) target = $region32
      $region31: #{conv_transpose_add_relu6_2d.1} parent=23 // pred_region
        %s182 = smul.u32 5, %s18
        %p183 = scmp.lt.s32.totalorder %s17, 1
        %s184 = scalar_select %p183, %s17, 1
        %p185 = scmp.lt.s32.totalorder %s182, 9
        %s186 = scalar_select %p185, %s182, 9
        %s187 = smul.addr %s184, 10
        %s188 = sadd.s32 %s186, %s187
        %s189 = smul.addr %s188, 4
        %s190 = scalar_lea.vmem %s3, %s189
        %s191 = smul.u32 5, %s18
      $region32: #{conv_transpose_add_relu6_2d.1} parent=23 // pred_fallthru
        _
    $region24: #{conv_transpose_add_relu6_2d.1} parent=5 // pred_fallthru
      _
    %p192 = scmp.le.s32.totalorder 1, %s10
    %p193 = scmp.lt.s32.totalorder %s10, 5
    %p194 = pnand %p192, %p193
    %p195 = pneg %p194
    // Predicated region
    $region33: #{conv_transpose_add_relu6_2d.1} parent=5 // pred_check
      _
    $region34: #{conv_transpose_add_relu6_2d.1} parent=5 // pred_check_branch
      %197 = sbr.rel (%p194) target = $region36
    $region35: #{conv_transpose_add_relu6_2d.1} parent=5 // pred_region
      %s198 = ssub.s32 %s10, 1
      %p199 = pneg %p43
      %p200 = pneg %p40
      %p201 = pneg %p64
      %p202 = pneg %p61
      %p203 = scmp.lt.s32.totalorder %s19, 1
      %s204 = scalar_select %p203, %s19, 1
      %s205 = smul.addr %s204, 11
      %s206 = smul.addr %s205, 4
      %s207 = scalar_lea.vmem %s2, %s206
      %p208 = pneg %p90
      %p209 = pneg %p87
      %s210 = smul.u32 5, %s20
      %p211 = scmp.lt.s32.totalorder %s19, 1
      %s212 = scalar_select %p211, %s19, 1
      %p213 = scmp.lt.s32.totalorder %s210, 9
      %s214 = scalar_select %p213, %s210, 9
      %s215 = smul.addr %s212, 10
      %s216 = sadd.s32 %s214, %s215
      %s217 = smul.addr %s216, 4
      %s218 = scalar_lea.vmem %s3, %s217
      %p219 = pneg %p118
      %p220 = pneg %p115
      %p221 = pneg %p146
      %p222 = pneg %p143
      %s223 = smul.u32 5, %s20
      %p224 = scmp.lt.s32.totalorder %s19, 1
      %s225 = scalar_select %p224, %s19, 1
      %p226 = scmp.lt.s32.totalorder %s223, 9
      %s227 = scalar_select %p226, %s223, 9
      %s228 = smul.addr %s225, 10
      %s229 = sadd.s32 %s227, %s228
      %s230 = smul.addr %s229, 8
      %s231 = scalar_lea.vmem %s4, %s230
      %p232 = scmp.lt.s32.totalorder %s19, 1
      %s233 = scalar_select %p232, %s19, 1
      %s234 = smul.addr %s233, 11
      %s235 = smul.addr %s234, 4
      %s236 = scalar_lea.vmem %s2, %s235
      %s237 = smul.u32 5, %s20
      %p238 = scmp.lt.s32.totalorder %s19, 1
      %s239 = scalar_select %p238, %s19, 1
      %p240 = scmp.lt.s32.totalorder %s237, 9
      %s241 = scalar_select %p240, %s237, 9
      %s242 = smul.addr %s239, 10
      %s243 = sadd.s32 %s241, %s242
      %s244 = smul.addr %s243, 4
      %s245 = scalar_lea.vmem %s3, %s244
      %s246 = smul.u32 5, %s20
      %s247 = smul.u32 5, %s20
      %p248 = scmp.lt.s32.totalorder %s19, 1
      %s249 = scalar_select %p248, %s19, 1
      %p250 = scmp.lt.s32.totalorder %s247, 9
      %s251 = scalar_select %p250, %s247, 9
      %s252 = smul.addr %s249, 10
      %s253 = sadd.s32 %s251, %s252
      %s254 = smul.addr %s253, 8
      %s255 = scalar_lea.vmem %s4, %s254
      %s256 = smul.u32 5, %s20
      %s258 = smul.u32 %s20, 640
      %s259 = sshra.s32 %s258, 7
      %s260 = sand.u32 %s258, 127
      %s261 = smul.addr %s259, 4
      %s262 = scalar_lea.vmem %s236, %s261
      %v263 = vld [vmem:[%s262] sm:$0xff]
      %v264 = vld [vmem:[%s262 + $0x8] sm:$0xff]
      %v265 = vld [vmem:[%s262 + $0x10] sm:$0xff]
      %v266 = vld [vmem:[%s1] sm:$0xff]
      %v267 = vld [vmem:[%s245] sm:$0xff]
      %v268 = vld [vmem:[%s245 + $0x8] sm:$0xff]
      %v269 = vld [vmem:[%s245 + $0x10] sm:$0xf]
      %v270 = vunpack.c.l.bf16 %v267
      %v271 = vunpack.c.h.bf16 %v267
      %v272 = vunpack.c.l.bf16 %v268
      %v273 = vunpack.c.h.bf16 %v268
      %v274 = vunpack.c.l.bf16 %v269
      %276 = vset.pattern.permute.xlu0 0
      %277 = vperm.xlu0 %276, %v266
      %v278 = vpop.permute.xlu0 %277
      %v280 = vadd.f32 %v278, %v270
      %v281 = vadd.f32 %v278, %v271
      %v282 = vadd.f32 %v278, %v272
      %v283 = vadd.f32 %v278, %v273
      %v284 = vadd.f32 %v278, %v274
      %v285 = vld [vmem:[%s0] sm:$0xf]
      %v289 = vunpack.c.l.b16 %v263
      %v290 = vunpack.c.h.b16 %v263
      %v291 = vunpack.c.l.b16 %v264
      %v292 = vunpack.c.h.b16 %v264
      %v293 = vunpack.c.l.b16 %v265
      %v294 = vpack.c.b16 %v289, %v289
      %v295 = vpack.c.b16 %v290, %v290
      %v296 = vpack.c.b16 %v291, %v291
      %v297 = vpack.c.b16 %v292, %v292
      %v298 = vpack.c.b16 %v293, %v293
      %vm299 = vcmask 64512
      %v301 = vsel %vm299, %v285, 0
      %vm303 = vcmask 1043456
      %v305 = vsel %vm303, %v294, 0
      %v308 = vsel %vm303, %v295, 0
      %v311 = vsel %vm303, %v296, 0
      %v314 = vsel %vm303, %v297, 0
      %v317 = vsel %vm303, %v298, 0
      %319 = vmatprep.subr.bf16.mxu0 0
      %320 = vmatpush1.bf16.msra.mxu0 0
      %321 = vmatprep.subr.bf16.mxu0 0
      %322 = vmatpush1.bf16.msra.mxu0 0
      %323 = vmatprep.subr.bf16.mxu0 0
      %324 = vmatpush1.bf16.msra.mxu0 0
      %325 = vmatprep.subr.bf16.mxu0 0
      %326 = vmatpush1.bf16.msra.mxu0 0
      %327 = vmatprep.subr.bf16.mxu0 0
      %328 = vmatpush1.bf16.msra.mxu0 0
      %329 = vmatprep.subr.bf16.mxu0 0
      %330 = vmatpush1.bf16.msra.mxu0 0
      %331 = vmatprep.subr.bf16.mxu0 0
      %332 = vmatpush1.bf16.msra.mxu0 0
      %333 = vmatprep.subr.bf16.mxu0 %v308
      %334 = vmatpush1.bf16.msra.mxu0 %v305
      %335 = vmatprep.subr.bf16.mxu0 0
      %336 = vmatpush2.bf16.msra.mxu0 0
      %337 = vmatprep.subr.bf16.mxu0 0
      %338 = vmatpush2.bf16.msra.mxu0 0
      %339 = vmatprep.subr.bf16.mxu0 0
      %340 = vmatpush2.bf16.msra.mxu0 0
      %341 = vmatprep.subr.bf16.mxu0 0
      %342 = vmatpush2.bf16.msra.mxu0 0
      %343 = vmatprep.subr.bf16.mxu0 0
      %344 = vmatpush2.bf16.msra.mxu0 0
      %345 = vmatprep.subr.bf16.mxu0 0
      %346 = vmatpush2.bf16.msra.mxu0 0
      %347 = vmatprep.subr.bf16.mxu0 0
      %348 = vmatpush2.bf16.msra.mxu0 0
      %349 = vmatprep.subr.bf16.mxu0 0
      %350 = vmatpush2.bf16.msra.mxu0 0
      %351 = vmatprep.mubr.bf16.mxu0 0
      %352 = vmatmul.mubr.bf16.gmra.mxu0 %v301
      %v353 = vpop.f32.mrf.mxu0
      %v354 = vadd.f32 0.0, %v353
      %v355 = vpop.f32.mrf.mxu0
      %v356 = vadd.f32 0.0, %v355
      %v357 = vpop.f32.mrf.mxu0
      %v358 = vpop.f32.mrf.mxu0
      %359 = vdwg.mxu0
      %360 = vmatprep.subr.bf16.mxu0 0
      %361 = vmatpush1.bf16.msra.mxu0 0
      %362 = vmatprep.subr.bf16.mxu0 0
      %363 = vmatpush1.bf16.msra.mxu0 0
      %364 = vmatprep.subr.bf16.mxu0 0
      %365 = vmatpush1.bf16.msra.mxu0 0
      %366 = vmatprep.subr.bf16.mxu0 0
      %367 = vmatpush1.bf16.msra.mxu0 0
      %368 = vmatprep.subr.bf16.mxu0 0
      %369 = vmatpush1.bf16.msra.mxu0 0
      %370 = vmatprep.subr.bf16.mxu0 0
      %371 = vmatpush1.bf16.msra.mxu0 0
      %372 = vmatprep.subr.bf16.mxu0 0
      %373 = vmatpush1.bf16.msra.mxu0 0
      %374 = vmatprep.subr.bf16.mxu0 %v314
      %375 = vmatpush1.bf16.msra.mxu0 %v311
      %376 = vmatprep.subr.bf16.mxu0 0
      %377 = vmatpush2.bf16.msra.mxu0 0
      %378 = vmatprep.subr.bf16.mxu0 0
      %379 = vmatpush2.bf16.msra.mxu0 0
      %380 = vmatprep.subr.bf16.mxu0 0
      %381 = vmatpush2.bf16.msra.mxu0 0
      %382 = vmatprep.subr.bf16.mxu0 0
      %383 = vmatpush2.bf16.msra.mxu0 0
      %384 = vmatprep.subr.bf16.mxu0 0
      %385 = vmatpush2.bf16.msra.mxu0 0
      %386 = vmatprep.subr.bf16.mxu0 0
      %387 = vmatpush2.bf16.msra.mxu0 0
      %388 = vmatprep.subr.bf16.mxu0 0
      %389 = vmatpush2.bf16.msra.mxu0 0
      %390 = vmatprep.subr.bf16.mxu0 0
      %391 = vmatpush2.bf16.msra.mxu0 0
      %392 = vmatprep.mubr.bf16.mxu0 0
      %393 = vmatmul.mubr.bf16.gmra.mxu0 %v301
      %v394 = vpop.f32.mrf.mxu0
      %v395 = vadd.f32 0.0, %v394
      %v396 = vpop.f32.mrf.mxu0
      %v397 = vadd.f32 0.0, %v396
      %v398 = vpop.f32.mrf.mxu0
      %v399 = vpop.f32.mrf.mxu0
      %400 = vdwg.mxu0
      %401 = vmatprep.subr.bf16.mxu0 0
      %402 = vmatpush1.bf16.msra.mxu0 0
      %403 = vmatprep.subr.bf16.mxu0 0
      %404 = vmatpush1.bf16.msra.mxu0 0
      %405 = vmatprep.subr.bf16.mxu0 0
      %406 = vmatpush1.bf16.msra.mxu0 0
      %407 = vmatprep.subr.bf16.mxu0 0
      %408 = vmatpush1.bf16.msra.mxu0 0
      %409 = vmatprep.subr.bf16.mxu0 0
      %410 = vmatpush1.bf16.msra.mxu0 0
      %411 = vmatprep.subr.bf16.mxu0 0
      %412 = vmatpush1.bf16.msra.mxu0 0
      %413 = vmatprep.subr.bf16.mxu0 0
      %414 = vmatpush1.bf16.msra.mxu0 0
      %415 = vmatprep.subr.bf16.mxu0 0
      %416 = vmatpush1.bf16.msra.mxu0 %v317
      %417 = vmatprep.subr.bf16.mxu0 0
      %418 = vmatpush2.bf16.msra.mxu0 0
      %419 = vmatprep.subr.bf16.mxu0 0
      %420 = vmatpush2.bf16.msra.mxu0 0
      %421 = vmatprep.subr.bf16.mxu0 0
      %422 = vmatpush2.bf16.msra.mxu0 0
      %423 = vmatprep.subr.bf16.mxu0 0
      %424 = vmatpush2.bf16.msra.mxu0 0
      %425 = vmatprep.subr.bf16.mxu0 0
      %426 = vmatpush2.bf16.msra.mxu0 0
      %427 = vmatprep.subr.bf16.mxu0 0
      %428 = vmatpush2.bf16.msra.mxu0 0
      %429 = vmatprep.subr.bf16.mxu0 0
      %430 = vmatpush2.bf16.msra.mxu0 0
      %431 = vmatprep.subr.bf16.mxu0 0
      %432 = vmatpush2.bf16.msra.mxu0 0
      %433 = vmatprep.mubr.bf16.mxu0 0
      %434 = vmatmul.mubr.bf16.gmra.mxu0 %v301
      %v435 = vpop.f32.mrf.mxu0
      %v436 = vadd.f32 0.0, %v435
      %v437 = vpop.f32.mrf.mxu0
      %v438 = vpop.f32.mrf.mxu0
      %v439 = vpop.f32.mrf.mxu0
      %440 = vdwg.mxu0
      %v441 = vadd.f32 %v280, %v354
      %v442 = vadd.f32 %v281, %v356
      %v443 = vadd.f32 %v282, %v395
      %v444 = vadd.f32 %v283, %v397
      %v445 = vadd.f32 %v284, %v436
      %s446 = scalar_lea.vmem %s0, 4
      %v447 = vld [vmem:[%s446] sm:$0xf]
      %v448 = vunpack.c.h.b16 %v265
      %v449 = vpack.c.b16 %v448, %v448
      %450 = vrot.lane.b32.xlu0 %v294, 127
      %v451 = vpop.permute.xlu0 %450
      %452 = vrot.lane.b32.xlu0 %v295, 127
      %v453 = vpop.permute.xlu0 %452
      %454 = vrot.lane.b32.xlu0 %v296, 127
      %v455 = vpop.permute.xlu0 %454
      %456 = vrot.lane.b32.xlu0 %v297, 127
      %v457 = vpop.permute.xlu0 %456
      %458 = vrot.lane.b32.xlu0 %v298, 127
      %v459 = vpop.permute.xlu0 %458
      %460 = vrot.lane.b32.xlu0 %v449, 127
      %v461 = vpop.permute.xlu0 %460
      %vm462 = vcmask 1039360
      %v463 = vsel %vm462, %v451, %v453
      %v464 = vsel %vm462, %v453, %v455
      %v465 = vsel %vm462, %v455, %v457
      %v466 = vsel %vm462, %v457, %v459
      %v467 = vsel %vm462, %v459, %v461
      %v469 = vsel %vm299, %v447, 0
      %v472 = vsel %vm303, %v463, 0
      %v475 = vsel %vm303, %v464, 0
      %v478 = vsel %vm303, %v465, 0
      %v481 = vsel %vm303, %v466, 0
      %v484 = vsel %vm303, %v467, 0
      %486 = vmatprep.subr.bf16.mxu0 0
      %487 = vmatpush1.bf16.msra.mxu0 0
      %488 = vmatprep.subr.bf16.mxu0 0
      %489 = vmatpush1.bf16.msra.mxu0 0
      %490 = vmatprep.subr.bf16.mxu0 0
      %491 = vmatpush1.bf16.msra.mxu0 0
      %492 = vmatprep.subr.bf16.mxu0 0
      %493 = vmatpush1.bf16.msra.mxu0 0
      %494 = vmatprep.subr.bf16.mxu0 0
      %495 = vmatpush1.bf16.msra.mxu0 0
      %496 = vmatprep.subr.bf16.mxu0 0
      %497 = vmatpush1.bf16.msra.mxu0 0
      %498 = vmatprep.subr.bf16.mxu0 0
      %499 = vmatpush1.bf16.msra.mxu0 0
      %500 = vmatprep.subr.bf16.mxu0 %v475
      %501 = vmatpush1.bf16.msra.mxu0 %v472
      %502 = vmatprep.subr.bf16.mxu0 0
      %503 = vmatpush2.bf16.msra.mxu0 0
      %504 = vmatprep.subr.bf16.mxu0 0
      %505 = vmatpush2.bf16.msra.mxu0 0
      %506 = vmatprep.subr.bf16.mxu0 0
      %507 = vmatpush2.bf16.msra.mxu0 0
      %508 = vmatprep.subr.bf16.mxu0 0
      %509 = vmatpush2.bf16.msra.mxu0 0
      %510 = vmatprep.subr.bf16.mxu0 0
      %511 = vmatpush2.bf16.msra.mxu0 0
      %512 = vmatprep.subr.bf16.mxu0 0
      %513 = vmatpush2.bf16.msra.mxu0 0
      %514 = vmatprep.subr.bf16.mxu0 0
      %515 = vmatpush2.bf16.msra.mxu0 0
      %516 = vmatprep.subr.bf16.mxu0 0
      %517 = vmatpush2.bf16.msra.mxu0 0
      %518 = vmatprep.mubr.bf16.mxu0 0
      %519 = vmatmul.mubr.bf16.gmra.mxu0 %v469
      %v520 = vpop.f32.mrf.mxu0
      %v521 = vadd.f32 0.0, %v520
      %v522 = vpop.f32.mrf.mxu0
      %v523 = vadd.f32 0.0, %v522
      %v524 = vpop.f32.mrf.mxu0
      %v525 = vpop.f32.mrf.mxu0
      %526 = vdwg.mxu0
      %527 = vmatprep.subr.bf16.mxu0 0
      %528 = vmatpush1.bf16.msra.mxu0 0
      %529 = vmatprep.subr.bf16.mxu0 0
      %530 = vmatpush1.bf16.msra.mxu0 0
      %531 = vmatprep.subr.bf16.mxu0 0
      %532 = vmatpush1.bf16.msra.mxu0 0
      %533 = vmatprep.subr.bf16.mxu0 0
      %534 = vmatpush1.bf16.msra.mxu0 0
      %535 = vmatprep.subr.bf16.mxu0 0
      %536 = vmatpush1.bf16.msra.mxu0 0
      %537 = vmatprep.subr.bf16.mxu0 0
      %538 = vmatpush1.bf16.msra.mxu0 0
      %539 = vmatprep.subr.bf16.mxu0 0
      %540 = vmatpush1.bf16.msra.mxu0 0
      %541 = vmatprep.subr.bf16.mxu0 %v481
      %542 = vmatpush1.bf16.msra.mxu0 %v478
      %543 = vmatprep.subr.bf16.mxu0 0
      %544 = vmatpush2.bf16.msra.mxu0 0
      %545 = vmatprep.subr.bf16.mxu0 0
      %546 = vmatpush2.bf16.msra.mxu0 0
      %547 = vmatprep.subr.bf16.mxu0 0
      %548 = vmatpush2.bf16.msra.mxu0 0
      %549 = vmatprep.subr.bf16.mxu0 0
      %550 = vmatpush2.bf16.msra.mxu0 0
      %551 = vmatprep.subr.bf16.mxu0 0
      %552 = vmatpush2.bf16.msra.mxu0 0
      %553 = vmatprep.subr.bf16.mxu0 0
      %554 = vmatpush2.bf16.msra.mxu0 0
      %555 = vmatprep.subr.bf16.mxu0 0
      %556 = vmatpush2.bf16.msra.mxu0 0
      %557 = vmatprep.subr.bf16.mxu0 0
      %558 = vmatpush2.bf16.msra.mxu0 0
      %559 = vmatprep.mubr.bf16.mxu0 0
      %560 = vmatmul.mubr.bf16.gmra.mxu0 %v469
      %v561 = vpop.f32.mrf.mxu0
      %v562 = vadd.f32 0.0, %v561
      %v563 = vpop.f32.mrf.mxu0
      %v564 = vadd.f32 0.0, %v563
      %v565 = vpop.f32.mrf.mxu0
      %v566 = vpop.f32.mrf.mxu0
      %567 = vdwg.mxu0
      %568 = vmatprep.subr.bf16.mxu0 0
      %569 = vmatpush1.bf16.msra.mxu0 0
      %570 = vmatprep.subr.bf16.mxu0 0
      %571 = vmatpush1.bf16.msra.mxu0 0
      %572 = vmatprep.subr.bf16.mxu0 0
      %573 = vmatpush1.bf16.msra.mxu0 0
      %574 = vmatprep.subr.bf16.mxu0 0
      %575 = vmatpush1.bf16.msra.mxu0 0
      %576 = vmatprep.subr.bf16.mxu0 0
      %577 = vmatpush1.bf16.msra.mxu0 0
      %578 = vmatprep.subr.bf16.mxu0 0
      %579 = vmatpush1.bf16.msra.mxu0 0
      %580 = vmatprep.subr.bf16.mxu0 0
      %581 = vmatpush1.bf16.msra.mxu0 0
      %582 = vmatprep.subr.bf16.mxu0 0
      %583 = vmatpush1.bf16.msra.mxu0 %v484
      %584 = vmatprep.subr.bf16.mxu0 0
      %585 = vmatpush2.bf16.msra.mxu0 0
      %586 = vmatprep.subr.bf16.mxu0 0
      %587 = vmatpush2.bf16.msra.mxu0 0
      %588 = vmatprep.subr.bf16.mxu0 0
      %589 = vmatpush2.bf16.msra.mxu0 0
      %590 = vmatprep.subr.bf16.mxu0 0
      %591 = vmatpush2.bf16.msra.mxu0 0
      %592 = vmatprep.subr.bf16.mxu0 0
      %593 = vmatpush2.bf16.msra.mxu0 0
      %594 = vmatprep.subr.bf16.mxu0 0
      %595 = vmatpush2.bf16.msra.mxu0 0
      %596 = vmatprep.subr.bf16.mxu0 0
      %597 = vmatpush2.bf16.msra.mxu0 0
      %598 = vmatprep.subr.bf16.mxu0 0
      %599 = vmatpush2.bf16.msra.mxu0 0
      %600 = vmatprep.mubr.bf16.mxu0 0
      %601 = vmatmul.mubr.bf16.gmra.mxu0 %v469
      %v602 = vpop.f32.mrf.mxu0
      %v603 = vadd.f32 0.0, %v602
      %v604 = vpop.f32.mrf.mxu0
      %v605 = vpop.f32.mrf.mxu0
      %v606 = vpop.f32.mrf.mxu0
      %607 = vdwg.mxu0
      %v608 = vadd.f32 %v441, %v521
      %v609 = vadd.f32 %v442, %v523
      %v610 = vadd.f32 %v443, %v562
      %v611 = vadd.f32 %v444, %v564
      %v612 = vadd.f32 %v445, %v603
      %s613 = scalar_lea.vmem %s0, 8
      %v614 = vld [vmem:[%s613] sm:$0xf]
      %615 = vrot.lane.b32.xlu0 %v294, 126
      %v616 = vpop.permute.xlu0 %615
      %617 = vrot.lane.b32.xlu0 %v295, 126
      %v618 = vpop.permute.xlu0 %617
      %619 = vrot.lane.b32.xlu0 %v296, 126
      %v620 = vpop.permute.xlu0 %619
      %621 = vrot.lane.b32.xlu0 %v297, 126
      %v622 = vpop.permute.xlu0 %621
      %623 = vrot.lane.b32.xlu0 %v298, 126
      %v624 = vpop.permute.xlu0 %623
      %625 = vrot.lane.b32.xlu0 %v449, 126
      %v626 = vpop.permute.xlu0 %625
      %vm627 = vcmask 1031168
      %v628 = vsel %vm627, %v616, %v618
      %v629 = vsel %vm627, %v618, %v620
      %v630 = vsel %vm627, %v620, %v622
      %v631 = vsel %vm627, %v622, %v624
      %v632 = vsel %vm627, %v624, %v626
      %v634 = vsel %vm299, %v614, 0
      %v637 = vsel %vm303, %v628, 0
      %v640 = vsel %vm303, %v629, 0
      %v643 = vsel %vm303, %v630, 0
      %v646 = vsel %vm303, %v631, 0
      %v649 = vsel %vm303, %v632, 0
      %651 = vmatprep.subr.bf16.mxu0 0
      %652 = vmatpush1.bf16.msra.mxu0 0
      %653 = vmatprep.subr.bf16.mxu0 0
      %654 = vmatpush1.bf16.msra.mxu0 0
      %655 = vmatprep.subr.bf16.mxu0 0
      %656 = vmatpush1.bf16.msra.mxu0 0
      %657 = vmatprep.subr.bf16.mxu0 0
      %658 = vmatpush1.bf16.msra.mxu0 0
      %659 = vmatprep.subr.bf16.mxu0 0
      %660 = vmatpush1.bf16.msra.mxu0 0
      %661 = vmatprep.subr.bf16.mxu0 0
      %662 = vmatpush1.bf16.msra.mxu0 0
      %663 = vmatprep.subr.bf16.mxu0 0
      %664 = vmatpush1.bf16.msra.mxu0 0
      %665 = vmatprep.subr.bf16.mxu0 %v640
      %666 = vmatpush1.bf16.msra.mxu0 %v637
      %667 = vmatprep.subr.bf16.mxu0 0
      %668 = vmatpush2.bf16.msra.mxu0 0
      %669 = vmatprep.subr.bf16.mxu0 0
      %670 = vmatpush2.bf16.msra.mxu0 0
      %671 = vmatprep.subr.bf16.mxu0 0
      %672 = vmatpush2.bf16.msra.mxu0 0
      %673 = vmatprep.subr.bf16.mxu0 0
      %674 = vmatpush2.bf16.msra.mxu0 0
      %675 = vmatprep.subr.bf16.mxu0 0
      %676 = vmatpush2.bf16.msra.mxu0 0
      %677 = vmatprep.subr.bf16.mxu0 0
      %678 = vmatpush2.bf16.msra.mxu0 0
      %679 = vmatprep.subr.bf16.mxu0 0
      %680 = vmatpush2.bf16.msra.mxu0 0
      %681 = vmatprep.subr.bf16.mxu0 0
      %682 = vmatpush2.bf16.msra.mxu0 0
      %683 = vmatprep.mubr.bf16.mxu0 0
      %684 = vmatmul.mubr.bf16.gmra.mxu0 %v634
      %v685 = vpop.f32.mrf.mxu0
      %v686 = vadd.f32 0.0, %v685
      %v687 = vpop.f32.mrf.mxu0
      %v688 = vadd.f32 0.0, %v687
      %v689 = vpop.f32.mrf.mxu0
      %v690 = vpop.f32.mrf.mxu0
      %691 = vdwg.mxu0
      %692 = vmatprep.subr.bf16.mxu0 0
      %693 = vmatpush1.bf16.msra.mxu0 0
      %694 = vmatprep.subr.bf16.mxu0 0
      %695 = vmatpush1.bf16.msra.mxu0 0
      %696 = vmatprep.subr.bf16.mxu0 0
      %697 = vmatpush1.bf16.msra.mxu0 0
      %698 = vmatprep.subr.bf16.mxu0 0
      %699 = vmatpush1.bf16.msra.mxu0 0
      %700 = vmatprep.subr.bf16.mxu0 0
      %701 = vmatpush1.bf16.msra.mxu0 0
      %702 = vmatprep.subr.bf16.mxu0 0
      %703 = vmatpush1.bf16.msra.mxu0 0
      %704 = vmatprep.subr.bf16.mxu0 0
      %705 = vmatpush1.bf16.msra.mxu0 0
      %706 = vmatprep.subr.bf16.mxu0 %v646
      %707 = vmatpush1.bf16.msra.mxu0 %v643
      %708 = vmatprep.subr.bf16.mxu0 0
      %709 = vmatpush2.bf16.msra.mxu0 0
      %710 = vmatprep.subr.bf16.mxu0 0
      %711 = vmatpush2.bf16.msra.mxu0 0
      %712 = vmatprep.subr.bf16.mxu0 0
      %713 = vmatpush2.bf16.msra.mxu0 0
      %714 = vmatprep.subr.bf16.mxu0 0
      %715 = vmatpush2.bf16.msra.mxu0 0
      %716 = vmatprep.subr.bf16.mxu0 0
      %717 = vmatpush2.bf16.msra.mxu0 0
      %718 = vmatprep.subr.bf16.mxu0 0
      %719 = vmatpush2.bf16.msra.mxu0 0
      %720 = vmatprep.subr.bf16.mxu0 0
      %721 = vmatpush2.bf16.msra.mxu0 0
      %722 = vmatprep.subr.bf16.mxu0 0
      %723 = vmatpush2.bf16.msra.mxu0 0
      %724 = vmatprep.mubr.bf16.mxu0 0
      %725 = vmatmul.mubr.bf16.gmra.mxu0 %v634
      %v726 = vpop.f32.mrf.mxu0
      %v727 = vadd.f32 0.0, %v726
      %v728 = vpop.f32.mrf.mxu0
      %v729 = vadd.f32 0.0, %v728
      %v730 = vpop.f32.mrf.mxu0
      %v731 = vpop.f32.mrf.mxu0
      %732 = vdwg.mxu0
      %733 = vmatprep.subr.bf16.mxu0 0
      %734 = vmatpush1.bf16.msra.mxu0 0
      %735 = vmatprep.subr.bf16.mxu0 0
      %736 = vmatpush1.bf16.msra.mxu0 0
      %737 = vmatprep.subr.bf16.mxu0 0
      %738 = vmatpush1.bf16.msra.mxu0 0
      %739 = vmatprep.subr.bf16.mxu0 0
      %740 = vmatpush1.bf16.msra.mxu0 0
      %741 = vmatprep.subr.bf16.mxu0 0
      %742 = vmatpush1.bf16.msra.mxu0 0
      %743 = vmatprep.subr.bf16.mxu0 0
      %744 = vmatpush1.bf16.msra.mxu0 0
      %745 = vmatprep.subr.bf16.mxu0 0
      %746 = vmatpush1.bf16.msra.mxu0 0
      %747 = vmatprep.subr.bf16.mxu0 0
      %748 = vmatpush1.bf16.msra.mxu0 %v649
      %749 = vmatprep.subr.bf16.mxu0 0
      %750 = vmatpush2.bf16.msra.mxu0 0
      %751 = vmatprep.subr.bf16.mxu0 0
      %752 = vmatpush2.bf16.msra.mxu0 0
      %753 = vmatprep.subr.bf16.mxu0 0
      %754 = vmatpush2.bf16.msra.mxu0 0
      %755 = vmatprep.subr.bf16.mxu0 0
      %756 = vmatpush2.bf16.msra.mxu0 0
      %757 = vmatprep.subr.bf16.mxu0 0
      %758 = vmatpush2.bf16.msra.mxu0 0
      %759 = vmatprep.subr.bf16.mxu0 0
      %760 = vmatpush2.bf16.msra.mxu0 0
      %761 = vmatprep.subr.bf16.mxu0 0
      %762 = vmatpush2.bf16.msra.mxu0 0
      %763 = vmatprep.subr.bf16.mxu0 0
      %764 = vmatpush2.bf16.msra.mxu0 0
      %765 = vmatprep.mubr.bf16.mxu0 0
      %766 = vmatmul.mubr.bf16.gmra.mxu0 %v634
      %v767 = vpop.f32.mrf.mxu0
      %v768 = vadd.f32 0.0, %v767
      %v769 = vpop.f32.mrf.mxu0
      %v770 = vpop.f32.mrf.mxu0
      %v771 = vpop.f32.mrf.mxu0
      %772 = vdwg.mxu0
      %v773 = vadd.f32 %v608, %v686
      %v774 = vadd.f32 %v609, %v688
      %v775 = vadd.f32 %v610, %v727
      %v776 = vadd.f32 %v611, %v729
      %v777 = vadd.f32 %v612, %v768
      %s778 = scalar_lea.vmem %s0, 12
      %v779 = vld [vmem:[%s778] sm:$0xf]
      %780 = vrot.lane.b32.xlu0 %v294, 125
      %v781 = vpop.permute.xlu0 %780
      %782 = vrot.lane.b32.xlu0 %v295, 125
      %v783 = vpop.permute.xlu0 %782
      %784 = vrot.lane.b32.xlu0 %v296, 125
      %v785 = vpop.permute.xlu0 %784
      %786 = vrot.lane.b32.xlu0 %v297, 125
      %v787 = vpop.permute.xlu0 %786
      %788 = vrot.lane.b32.xlu0 %v298, 125
      %v789 = vpop.permute.xlu0 %788
      %790 = vrot.lane.b32.xlu0 %v449, 125
      %v791 = vpop.permute.xlu0 %790
      %vm792 = vcmask 1022976
      %v793 = vsel %vm792, %v781, %v783
      %v794 = vsel %vm792, %v783, %v785
      %v795 = vsel %vm792, %v785, %v787
      %v796 = vsel %vm792, %v787, %v789
      %v797 = vsel %vm792, %v789, %v791
      %v799 = vsel %vm299, %v779, 0
      %v802 = vsel %vm303, %v793, 0
      %v805 = vsel %vm303, %v794, 0
      %v808 = vsel %vm303, %v795, 0
      %v811 = vsel %vm303, %v796, 0
      %v814 = vsel %vm303, %v797, 0
      %816 = vmatprep.subr.bf16.mxu0 0
      %817 = vmatpush1.bf16.msra.mxu0 0
      %818 = vmatprep.subr.bf16.mxu0 0
      %819 = vmatpush1.bf16.msra.mxu0 0
      %820 = vmatprep.subr.bf16.mxu0 0
      %821 = vmatpush1.bf16.msra.mxu0 0
      %822 = vmatprep.subr.bf16.mxu0 0
      %823 = vmatpush1.bf16.msra.mxu0 0
      %824 = vmatprep.subr.bf16.mxu0 0
      %825 = vmatpush1.bf16.msra.mxu0 0
      %826 = vmatprep.subr.bf16.mxu0 0
      %827 = vmatpush1.bf16.msra.mxu0 0
      %828 = vmatprep.subr.bf16.mxu0 0
      %829 = vmatpush1.bf16.msra.mxu0 0
      %830 = vmatprep.subr.bf16.mxu0 %v805
      %831 = vmatpush1.bf16.msra.mxu0 %v802
      %832 = vmatprep.subr.bf16.mxu0 0
      %833 = vmatpush2.bf16.msra.mxu0 0
      %834 = vmatprep.subr.bf16.mxu0 0
      %835 = vmatpush2.bf16.msra.mxu0 0
      %836 = vmatprep.subr.bf16.mxu0 0
      %837 = vmatpush2.bf16.msra.mxu0 0
      %838 = vmatprep.subr.bf16.mxu0 0
      %839 = vmatpush2.bf16.msra.mxu0 0
      %840 = vmatprep.subr.bf16.mxu0 0
      %841 = vmatpush2.bf16.msra.mxu0 0
      %842 = vmatprep.subr.bf16.mxu0 0
      %843 = vmatpush2.bf16.msra.mxu0 0
      %844 = vmatprep.subr.bf16.mxu0 0
      %845 = vmatpush2.bf16.msra.mxu0 0
      %846 = vmatprep.subr.bf16.mxu0 0
      %847 = vmatpush2.bf16.msra.mxu0 0
      %848 = vmatprep.mubr.bf16.mxu0 0
      %849 = vmatmul.mubr.bf16.gmra.mxu0 %v799
      %v850 = vpop.f32.mrf.mxu0
      %v851 = vadd.f32 0.0, %v850
      %v852 = vpop.f32.mrf.mxu0
      %v853 = vadd.f32 0.0, %v852
      %v854 = vpop.f32.mrf.mxu0
      %v855 = vpop.f32.mrf.mxu0
      %856 = vdwg.mxu0
      %857 = vmatprep.subr.bf16.mxu0 0
      %858 = vmatpush1.bf16.msra.mxu0 0
      %859 = vmatprep.subr.bf16.mxu0 0
      %860 = vmatpush1.bf16.msra.mxu0 0
      %861 = vmatprep.subr.bf16.mxu0 0
      %862 = vmatpush1.bf16.msra.mxu0 0
      %863 = vmatprep.subr.bf16.mxu0 0
      %864 = vmatpush1.bf16.msra.mxu0 0
      %865 = vmatprep.subr.bf16.mxu0 0
      %866 = vmatpush1.bf16.msra.mxu0 0
      %867 = vmatprep.subr.bf16.mxu0 0
      %868 = vmatpush1.bf16.msra.mxu0 0
      %869 = vmatprep.subr.bf16.mxu0 0
      %870 = vmatpush1.bf16.msra.mxu0 0
      %871 = vmatprep.subr.bf16.mxu0 %v811
      %872 = vmatpush1.bf16.msra.mxu0 %v808
      %873 = vmatprep.subr.bf16.mxu0 0
      %874 = vmatpush2.bf16.msra.mxu0 0
      %875 = vmatprep.subr.bf16.mxu0 0
      %876 = vmatpush2.bf16.msra.mxu0 0
      %877 = vmatprep.subr.bf16.mxu0 0
      %878 = vmatpush2.bf16.msra.mxu0 0
      %879 = vmatprep.subr.bf16.mxu0 0
      %880 = vmatpush2.bf16.msra.mxu0 0
      %881 = vmatprep.subr.bf16.mxu0 0
      %882 = vmatpush2.bf16.msra.mxu0 0
      %883 = vmatprep.subr.bf16.mxu0 0
      %884 = vmatpush2.bf16.msra.mxu0 0
      %885 = vmatprep.subr.bf16.mxu0 0
      %886 = vmatpush2.bf16.msra.mxu0 0
      %887 = vmatprep.subr.bf16.mxu0 0
      %888 = vmatpush2.bf16.msra.mxu0 0
      %889 = vmatprep.mubr.bf16.mxu0 0
      %890 = vmatmul.mubr.bf16.gmra.mxu0 %v799
      %v891 = vpop.f32.mrf.mxu0
      %v892 = vadd.f32 0.0, %v891
      %v893 = vpop.f32.mrf.mxu0
      %v894 = vadd.f32 0.0, %v893
      %v895 = vpop.f32.mrf.mxu0
      %v896 = vpop.f32.mrf.mxu0
      %897 = vdwg.mxu0
      %898 = vmatprep.subr.bf16.mxu0 0
      %899 = vmatpush1.bf16.msra.mxu0 0
      %900 = vmatprep.subr.bf16.mxu0 0
      %901 = vmatpush1.bf16.msra.mxu0 0
      %902 = vmatprep.subr.bf16.mxu0 0
      %903 = vmatpush1.bf16.msra.mxu0 0
      %904 = vmatprep.subr.bf16.mxu0 0
      %905 = vmatpush1.bf16.msra.mxu0 0
      %906 = vmatprep.subr.bf16.mxu0 0
      %907 = vmatpush1.bf16.msra.mxu0 0
      %908 = vmatprep.subr.bf16.mxu0 0
      %909 = vmatpush1.bf16.msra.mxu0 0
      %910 = vmatprep.subr.bf16.mxu0 0
      %911 = vmatpush1.bf16.msra.mxu0 0
      %912 = vmatprep.subr.bf16.mxu0 0
      %913 = vmatpush1.bf16.msra.mxu0 %v814
      %914 = vmatprep.subr.bf16.mxu0 0
      %915 = vmatpush2.bf16.msra.mxu0 0
      %916 = vmatprep.subr.bf16.mxu0 0
      %917 = vmatpush2.bf16.msra.mxu0 0
      %918 = vmatprep.subr.bf16.mxu0 0
      %919 = vmatpush2.bf16.msra.mxu0 0
      %920 = vmatprep.subr.bf16.mxu0 0
      %921 = vmatpush2.bf16.msra.mxu0 0
      %922 = vmatprep.subr.bf16.mxu0 0
      %923 = vmatpush2.bf16.msra.mxu0 0
      %924 = vmatprep.subr.bf16.mxu0 0
      %925 = vmatpush2.bf16.msra.mxu0 0
      %926 = vmatprep.subr.bf16.mxu0 0
      %927 = vmatpush2.bf16.msra.mxu0 0
      %928 = vmatprep.subr.bf16.mxu0 0
      %929 = vmatpush2.bf16.msra.mxu0 0
      %930 = vmatprep.mubr.bf16.mxu0 0
      %931 = vmatmul.mubr.bf16.gmra.mxu0 %v799
      %v932 = vpop.f32.mrf.mxu0
      %v933 = vadd.f32 0.0, %v932
      %v934 = vpop.f32.mrf.mxu0
      %v935 = vpop.f32.mrf.mxu0
      %v936 = vpop.f32.mrf.mxu0
      %937 = vdwg.mxu0
      %v938 = vadd.f32 %v773, %v851
      %v939 = vadd.f32 %v774, %v853
      %v940 = vadd.f32 %v775, %v892
      %v941 = vadd.f32 %v776, %v894
      %v942 = vadd.f32 %v777, %v933
      %s943 = scalar_lea.vmem %s0, 16
      %v944 = vld [vmem:[%s943] sm:$0xf]
      %945 = vrot.lane.b32.xlu0 %v294, 93
      %v946 = vpop.permute.xlu0 %945
      %947 = vrot.lane.b32.xlu0 %v295, 93
      %v948 = vpop.permute.xlu0 %947
      %949 = vrot.lane.b32.xlu0 %v296, 93
      %v950 = vpop.permute.xlu0 %949
      %951 = vrot.lane.b32.xlu0 %v297, 93
      %v952 = vpop.permute.xlu0 %951
      %953 = vrot.lane.b32.xlu0 %v298, 93
      %v954 = vpop.permute.xlu0 %953
      %955 = vrot.lane.b32.xlu0 %v449, 93
      %v956 = vpop.permute.xlu0 %955
      %vm957 = vcmask 760832
      %v958 = vsel %vm957, %v946, %v948
      %v959 = vsel %vm957, %v948, %v950
      %v960 = vsel %vm957, %v950, %v952
      %v961 = vsel %vm957, %v952, %v954
      %v962 = vsel %vm957, %v954, %v956
      %v964 = vsel %vm299, %v944, 0
      %v967 = vsel %vm303, %v958, 0
      %v970 = vsel %vm303, %v959, 0
      %v973 = vsel %vm303, %v960, 0
      %v976 = vsel %vm303, %v961, 0
      %v979 = vsel %vm303, %v962, 0
      %981 = vmatprep.subr.bf16.mxu0 0
      %982 = vmatpush1.bf16.msra.mxu0 0
      %983 = vmatprep.subr.bf16.mxu0 0
      %984 = vmatpush1.bf16.msra.mxu0 0
      %985 = vmatprep.subr.bf16.mxu0 0
      %986 = vmatpush1.bf16.msra.mxu0 0
      %987 = vmatprep.subr.bf16.mxu0 0
      %988 = vmatpush1.bf16.msra.mxu0 0
      %989 = vmatprep.subr.bf16.mxu0 0
      %990 = vmatpush1.bf16.msra.mxu0 0
      %991 = vmatprep.subr.bf16.mxu0 0
      %992 = vmatpush1.bf16.msra.mxu0 0
      %993 = vmatprep.subr.bf16.mxu0 0
      %994 = vmatpush1.bf16.msra.mxu0 0
      %995 = vmatprep.subr.bf16.mxu0 %v970
      %996 = vmatpush1.bf16.msra.mxu0 %v967
      %997 = vmatprep.subr.bf16.mxu0 0
      %998 = vmatpush2.bf16.msra.mxu0 0
      %999 = vmatprep.subr.bf16.mxu0 0
      %1000 = vmatpush2.bf16.msra.mxu0 0
      %1001 = vmatprep.subr.bf16.mxu0 0
      %1002 = vmatpush2.bf16.msra.mxu0 0
      %1003 = vmatprep.subr.bf16.mxu0 0
      %1004 = vmatpush2.bf16.msra.mxu0 0
      %1005 = vmatprep.subr.bf16.mxu0 0
      %1006 = vmatpush2.bf16.msra.mxu0 0
      %1007 = vmatprep.subr.bf16.mxu0 0
      %1008 = vmatpush2.bf16.msra.mxu0 0
      %1009 = vmatprep.subr.bf16.mxu0 0
      %1010 = vmatpush2.bf16.msra.mxu0 0
      %1011 = vmatprep.subr.bf16.mxu0 0
      %1012 = vmatpush2.bf16.msra.mxu0 0
      %1013 = vmatprep.mubr.bf16.mxu0 0
      %1014 = vmatmul.mubr.bf16.gmra.mxu0 %v964
      %v1015 = vpop.f32.mrf.mxu0
      %v1016 = vadd.f32 0.0, %v1015
      %v1017 = vpop.f32.mrf.mxu0
      %v1018 = vadd.f32 0.0, %v1017
      %v1019 = vpop.f32.mrf.mxu0
      %v1020 = vpop.f32.mrf.mxu0
      %1021 = vdwg.mxu0
      %1022 = vmatprep.subr.bf16.mxu0 0
      %1023 = vmatpush1.bf16.msra.mxu0 0
      %1024 = vmatprep.subr.bf16.mxu0 0
      %1025 = vmatpush1.bf16.msra.mxu0 0
      %1026 = vmatprep.subr.bf16.mxu0 0
      %1027 = vmatpush1.bf16.msra.mxu0 0
      %1028 = vmatprep.subr.bf16.mxu0 0
      %1029 = vmatpush1.bf16.msra.mxu0 0
      %1030 = vmatprep.subr.bf16.mxu0 0
      %1031 = vmatpush1.bf16.msra.mxu0 0
      %1032 = vmatprep.subr.bf16.mxu0 0
      %1033 = vmatpush1.bf16.msra.mxu0 0
      %1034 = vmatprep.subr.bf16.mxu0 0
      %1035 = vmatpush1.bf16.msra.mxu0 0
      %1036 = vmatprep.subr.bf16.mxu0 %v976
      %1037 = vmatpush1.bf16.msra.mxu0 %v973
      %1038 = vmatprep.subr.bf16.mxu0 0
      %1039 = vmatpush2.bf16.msra.mxu0 0
      %1040 = vmatprep.subr.bf16.mxu0 0
      %1041 = vmatpush2.bf16.msra.mxu0 0
      %1042 = vmatprep.subr.bf16.mxu0 0
      %1043 = vmatpush2.bf16.msra.mxu0 0
      %1044 = vmatprep.subr.bf16.mxu0 0
      %1045 = vmatpush2.bf16.msra.mxu0 0
      %1046 = vmatprep.subr.bf16.mxu0 0
      %1047 = vmatpush2.bf16.msra.mxu0 0
      %1048 = vmatprep.subr.bf16.mxu0 0
      %1049 = vmatpush2.bf16.msra.mxu0 0
      %1050 = vmatprep.subr.bf16.mxu0 0
      %1051 = vmatpush2.bf16.msra.mxu0 0
      %1052 = vmatprep.subr.bf16.mxu0 0
      %1053 = vmatpush2.bf16.msra.mxu0 0
      %1054 = vmatprep.mubr.bf16.mxu0 0
      %1055 = vmatmul.mubr.bf16.gmra.mxu0 %v964
      %v1056 = vpop.f32.mrf.mxu0
      %v1057 = vadd.f32 0.0, %v1056
      %v1058 = vpop.f32.mrf.mxu0
      %v1059 = vadd.f32 0.0, %v1058
      %v1060 = vpop.f32.mrf.mxu0
      %v1061 = vpop.f32.mrf.mxu0
      %1062 = vdwg.mxu0
      %1063 = vmatprep.subr.bf16.mxu0 0
      %1064 = vmatpush1.bf16.msra.mxu0 0
      %1065 = vmatprep.subr.bf16.mxu0 0
      %1066 = vmatpush1.bf16.msra.mxu0 0
      %1067 = vmatprep.subr.bf16.mxu0 0
      %1068 = vmatpush1.bf16.msra.mxu0 0
      %1069 = vmatprep.subr.bf16.mxu0 0
      %1070 = vmatpush1.bf16.msra.mxu0 0
      %1071 = vmatprep.subr.bf16.mxu0 0
      %1072 = vmatpush1.bf16.msra.mxu0 0
      %1073 = vmatprep.subr.bf16.mxu0 0
      %1074 = vmatpush1.bf16.msra.mxu0 0
      %1075 = vmatprep.subr.bf16.mxu0 0
      %1076 = vmatpush1.bf16.msra.mxu0 0
      %1077 = vmatprep.subr.bf16.mxu0 0
      %1078 = vmatpush1.bf16.msra.mxu0 %v979
      %1079 = vmatprep.subr.bf16.mxu0 0
      %1080 = vmatpush2.bf16.msra.mxu0 0
      %1081 = vmatprep.subr.bf16.mxu0 0
      %1082 = vmatpush2.bf16.msra.mxu0 0
      %1083 = vmatprep.subr.bf16.mxu0 0
      %1084 = vmatpush2.bf16.msra.mxu0 0
      %1085 = vmatprep.subr.bf16.mxu0 0
      %1086 = vmatpush2.bf16.msra.mxu0 0
      %1087 = vmatprep.subr.bf16.mxu0 0
      %1088 = vmatpush2.bf16.msra.mxu0 0
      %1089 = vmatprep.subr.bf16.mxu0 0
      %1090 = vmatpush2.bf16.msra.mxu0 0
      %1091 = vmatprep.subr.bf16.mxu0 0
      %1092 = vmatpush2.bf16.msra.mxu0 0
      %1093 = vmatprep.subr.bf16.mxu0 0
      %1094 = vmatpush2.bf16.msra.mxu0 0
      %1095 = vmatprep.mubr.bf16.mxu0 0
      %1096 = vmatmul.mubr.bf16.gmra.mxu0 %v964
      %v1097 = vpop.f32.mrf.mxu0
      %v1098 = vadd.f32 0.0, %v1097
      %v1099 = vpop.f32.mrf.mxu0
      %v1100 = vpop.f32.mrf.mxu0
      %v1101 = vpop.f32.mrf.mxu0
      %1102 = vdwg.mxu0
      %v1103 = vadd.f32 %v938, %v1016
      %v1104 = vadd.f32 %v939, %v1018
      %v1105 = vadd.f32 %v940, %v1057
      %v1106 = vadd.f32 %v941, %v1059
      %v1107 = vadd.f32 %v942, %v1098
      %s1108 = scalar_lea.vmem %s0, 20
      %v1109 = vld [vmem:[%s1108] sm:$0xf]
      %1110 = vrot.lane.b32.xlu0 %v294, 92
      %v1111 = vpop.permute.xlu0 %1110
      %1112 = vrot.lane.b32.xlu0 %v295, 92
      %v1113 = vpop.permute.xlu0 %1112
      %1114 = vrot.lane.b32.xlu0 %v296, 92
      %v1115 = vpop.permute.xlu0 %1114
      %1116 = vrot.lane.b32.xlu0 %v297, 92
      %v1117 = vpop.permute.xlu0 %1116
      %1118 = vrot.lane.b32.xlu0 %v298, 92
      %v1119 = vpop.permute.xlu0 %1118
      %1120 = vrot.lane.b32.xlu0 %v449, 92
      %v1121 = vpop.permute.xlu0 %1120
      %vm1122 = vcmask 752640
      %v1123 = vsel %vm1122, %v1111, %v1113
      %v1124 = vsel %vm1122, %v1113, %v1115
      %v1125 = vsel %vm1122, %v1115, %v1117
      %v1126 = vsel %vm1122, %v1117, %v1119
      %v1127 = vsel %vm1122, %v1119, %v1121
      %v1129 = vsel %vm299, %v1109, 0
      %v1132 = vsel %vm303, %v1123, 0
      %v1135 = vsel %vm303, %v1124, 0
      %v1138 = vsel %vm303, %v1125, 0
      %v1141 = vsel %vm303, %v1126, 0
      %v1144 = vsel %vm303, %v1127, 0
      %1146 = vmatprep.subr.bf16.mxu0 0
      %1147 = vmatpush1.bf16.msra.mxu0 0
      %1148 = vmatprep.subr.bf16.mxu0 0
      %1149 = vmatpush1.bf16.msra.mxu0 0
      %1150 = vmatprep.subr.bf16.mxu0 0
      %1151 = vmatpush1.bf16.msra.mxu0 0
      %1152 = vmatprep.subr.bf16.mxu0 0
      %1153 = vmatpush1.bf16.msra.mxu0 0
      %1154 = vmatprep.subr.bf16.mxu0 0
      %1155 = vmatpush1.bf16.msra.mxu0 0
      %1156 = vmatprep.subr.bf16.mxu0 0
      %1157 = vmatpush1.bf16.msra.mxu0 0
      %1158 = vmatprep.subr.bf16.mxu0 0
      %1159 = vmatpush1.bf16.msra.mxu0 0
      %1160 = vmatprep.subr.bf16.mxu0 %v1135
      %1161 = vmatpush1.bf16.msra.mxu0 %v1132
      %1162 = vmatprep.subr.bf16.mxu0 0
      %1163 = vmatpush2.bf16.msra.mxu0 0
      %1164 = vmatprep.subr.bf16.mxu0 0
      %1165 = vmatpush2.bf16.msra.mxu0 0
      %1166 = vmatprep.subr.bf16.mxu0 0
      %1167 = vmatpush2.bf16.msra.mxu0 0
      %1168 = vmatprep.subr.bf16.mxu0 0
      %1169 = vmatpush2.bf16.msra.mxu0 0
      %1170 = vmatprep.subr.bf16.mxu0 0
      %1171 = vmatpush2.bf16.msra.mxu0 0
      %1172 = vmatprep.subr.bf16.mxu0 0
      %1173 = vmatpush2.bf16.msra.mxu0 0
      %1174 = vmatprep.subr.bf16.mxu0 0
      %1175 = vmatpush2.bf16.msra.mxu0 0
      %1176 = vmatprep.subr.bf16.mxu0 0
      %1177 = vmatpush2.bf16.msra.mxu0 0
      %1178 = vmatprep.mubr.bf16.mxu0 0
      %1179 = vmatmul.mubr.bf16.gmra.mxu0 %v1129
      %v1180 = vpop.f32.mrf.mxu0
      %v1181 = vadd.f32 0.0, %v1180
      %v1182 = vpop.f32.mrf.mxu0
      %v1183 = vadd.f32 0.0, %v1182
      %v1184 = vpop.f32.mrf.mxu0
      %v1185 = vpop.f32.mrf.mxu0
      %1186 = vdwg.mxu0
      %1187 = vmatprep.subr.bf16.mxu0 0
      %1188 = vmatpush1.bf16.msra.mxu0 0
      %1189 = vmatprep.subr.bf16.mxu0 0
      %1190 = vmatpush1.bf16.msra.mxu0 0
      %1191 = vmatprep.subr.bf16.mxu0 0
      %1192 = vmatpush1.bf16.msra.mxu0 0
      %1193 = vmatprep.subr.bf16.mxu0 0
      %1194 = vmatpush1.bf16.msra.mxu0 0
      %1195 = vmatprep.subr.bf16.mxu0 0
      %1196 = vmatpush1.bf16.msra.mxu0 0
      %1197 = vmatprep.subr.bf16.mxu0 0
      %1198 = vmatpush1.bf16.msra.mxu0 0
      %1199 = vmatprep.subr.bf16.mxu0 0
      %1200 = vmatpush1.bf16.msra.mxu0 0
      %1201 = vmatprep.subr.bf16.mxu0 %v1141
      %1202 = vmatpush1.bf16.msra.mxu0 %v1138
      %1203 = vmatprep.subr.bf16.mxu0 0
      %1204 = vmatpush2.bf16.msra.mxu0 0
      %1205 = vmatprep.subr.bf16.mxu0 0
      %1206 = vmatpush2.bf16.msra.mxu0 0
      %1207 = vmatprep.subr.bf16.mxu0 0
      %1208 = vmatpush2.bf16.msra.mxu0 0
      %1209 = vmatprep.subr.bf16.mxu0 0
      %1210 = vmatpush2.bf16.msra.mxu0 0
      %1211 = vmatprep.subr.bf16.mxu0 0
      %1212 = vmatpush2.bf16.msra.mxu0 0
      %1213 = vmatprep.subr.bf16.mxu0 0
      %1214 = vmatpush2.bf16.msra.mxu0 0
      %1215 = vmatprep.subr.bf16.mxu0 0
      %1216 = vmatpush2.bf16.msra.mxu0 0
      %1217 = vmatprep.subr.bf16.mxu0 0
      %1218 = vmatpush2.bf16.msra.mxu0 0
      %1219 = vmatprep.mubr.bf16.mxu0 0
      %1220 = vmatmul.mubr.bf16.gmra.mxu0 %v1129
      %v1221 = vpop.f32.mrf.mxu0
      %v1222 = vadd.f32 0.0, %v1221
      %v1223 = vpop.f32.mrf.mxu0
      %v1224 = vadd.f32 0.0, %v1223
      %v1225 = vpop.f32.mrf.mxu0
      %v1226 = vpop.f32.mrf.mxu0
      %1227 = vdwg.mxu0
      %1228 = vmatprep.subr.bf16.mxu0 0
      %1229 = vmatpush1.bf16.msra.mxu0 0
      %1230 = vmatprep.subr.bf16.mxu0 0
      %1231 = vmatpush1.bf16.msra.mxu0 0
      %1232 = vmatprep.subr.bf16.mxu0 0
      %1233 = vmatpush1.bf16.msra.mxu0 0
      %1234 = vmatprep.subr.bf16.mxu0 0
      %1235 = vmatpush1.bf16.msra.mxu0 0
      %1236 = vmatprep.subr.bf16.mxu0 0
      %1237 = vmatpush1.bf16.msra.mxu0 0
      %1238 = vmatprep.subr.bf16.mxu0 0
      %1239 = vmatpush1.bf16.msra.mxu0 0
      %1240 = vmatprep.subr.bf16.mxu0 0
      %1241 = vmatpush1.bf16.msra.mxu0 0
      %1242 = vmatprep.subr.bf16.mxu0 0
      %1243 = vmatpush1.bf16.msra.mxu0 %v1144
      %1244 = vmatprep.subr.bf16.mxu0 0
      %1245 = vmatpush2.bf16.msra.mxu0 0
      %1246 = vmatprep.subr.bf16.mxu0 0
      %1247 = vmatpush2.bf16.msra.mxu0 0
      %1248 = vmatprep.subr.bf16.mxu0 0
      %1249 = vmatpush2.bf16.msra.mxu0 0
      %1250 = vmatprep.subr.bf16.mxu0 0
      %1251 = vmatpush2.bf16.msra.mxu0 0
      %1252 = vmatprep.subr.bf16.mxu0 0
      %1253 = vmatpush2.bf16.msra.mxu0 0
      %1254 = vmatprep.subr.bf16.mxu0 0
      %1255 = vmatpush2.bf16.msra.mxu0 0
      %1256 = vmatprep.subr.bf16.mxu0 0
      %1257 = vmatpush2.bf16.msra.mxu0 0
      %1258 = vmatprep.subr.bf16.mxu0 0
      %1259 = vmatpush2.bf16.msra.mxu0 0
      %1260 = vmatprep.mubr.bf16.mxu0 0
      %1261 = vmatmul.mubr.bf16.gmra.mxu0 %v1129
      %v1262 = vpop.f32.mrf.mxu0
      %v1263 = vadd.f32 0.0, %v1262
      %v1264 = vpop.f32.mrf.mxu0
      %v1265 = vpop.f32.mrf.mxu0
      %v1266 = vpop.f32.mrf.mxu0
      %1267 = vdwg.mxu0
      %v1268 = vadd.f32 %v1103, %v1181
      %v1269 = vadd.f32 %v1104, %v1183
      %v1270 = vadd.f32 %v1105, %v1222
      %v1271 = vadd.f32 %v1106, %v1224
      %v1272 = vadd.f32 %v1107, %v1263
      %s1273 = scalar_lea.vmem %s0, 24
      %v1274 = vld [vmem:[%s1273] sm:$0xf]
      %1275 = vrot.lane.b32.xlu0 %v294, 91
      %v1276 = vpop.permute.xlu0 %1275
      %1277 = vrot.lane.b32.xlu0 %v295, 91
      %v1278 = vpop.permute.xlu0 %1277
      %1279 = vrot.lane.b32.xlu0 %v296, 91
      %v1280 = vpop.permute.xlu0 %1279
      %1281 = vrot.lane.b32.xlu0 %v297, 91
      %v1282 = vpop.permute.xlu0 %1281
      %1283 = vrot.lane.b32.xlu0 %v298, 91
      %v1284 = vpop.permute.xlu0 %1283
      %1285 = vrot.lane.b32.xlu0 %v449, 91
      %v1286 = vpop.permute.xlu0 %1285
      %vm1287 = vcmask 744448
      %v1288 = vsel %vm1287, %v1276, %v1278
      %v1289 = vsel %vm1287, %v1278, %v1280
      %v1290 = vsel %vm1287, %v1280, %v1282
      %v1291 = vsel %vm1287, %v1282, %v1284
      %v1292 = vsel %vm1287, %v1284, %v1286
      %v1294 = vsel %vm299, %v1274, 0
      %v1297 = vsel %vm303, %v1288, 0
      %v1300 = vsel %vm303, %v1289, 0
      %v1303 = vsel %vm303, %v1290, 0
      %v1306 = vsel %vm303, %v1291, 0
      %v1309 = vsel %vm303, %v1292, 0
      %1311 = vmatprep.subr.bf16.mxu0 0
      %1312 = vmatpush1.bf16.msra.mxu0 0
      %1313 = vmatprep.subr.bf16.mxu0 0
      %1314 = vmatpush1.bf16.msra.mxu0 0
      %1315 = vmatprep.subr.bf16.mxu0 0
      %1316 = vmatpush1.bf16.msra.mxu0 0
      %1317 = vmatprep.subr.bf16.mxu0 0
      %1318 = vmatpush1.bf16.msra.mxu0 0
      %1319 = vmatprep.subr.bf16.mxu0 0
      %1320 = vmatpush1.bf16.msra.mxu0 0
      %1321 = vmatprep.subr.bf16.mxu0 0
      %1322 = vmatpush1.bf16.msra.mxu0 0
      %1323 = vmatprep.subr.bf16.mxu0 0
      %1324 = vmatpush1.bf16.msra.mxu0 0
      %1325 = vmatprep.subr.bf16.mxu0 %v1300
      %1326 = vmatpush1.bf16.msra.mxu0 %v1297
      %1327 = vmatprep.subr.bf16.mxu0 0
      %1328 = vmatpush2.bf16.msra.mxu0 0
      %1329 = vmatprep.subr.bf16.mxu0 0
      %1330 = vmatpush2.bf16.msra.mxu0 0
      %1331 = vmatprep.subr.bf16.mxu0 0
      %1332 = vmatpush2.bf16.msra.mxu0 0
      %1333 = vmatprep.subr.bf16.mxu0 0
      %1334 = vmatpush2.bf16.msra.mxu0 0
      %1335 = vmatprep.subr.bf16.mxu0 0
      %1336 = vmatpush2.bf16.msra.mxu0 0
      %1337 = vmatprep.subr.bf16.mxu0 0
      %1338 = vmatpush2.bf16.msra.mxu0 0
      %1339 = vmatprep.subr.bf16.mxu0 0
      %1340 = vmatpush2.bf16.msra.mxu0 0
      %1341 = vmatprep.subr.bf16.mxu0 0
      %1342 = vmatpush2.bf16.msra.mxu0 0
      %1343 = vmatprep.mubr.bf16.mxu0 0
      %1344 = vmatmul.mubr.bf16.gmra.mxu0 %v1294
      %v1345 = vpop.f32.mrf.mxu0
      %v1346 = vadd.f32 0.0, %v1345
      %v1347 = vpop.f32.mrf.mxu0
      %v1348 = vadd.f32 0.0, %v1347
      %v1349 = vpop.f32.mrf.mxu0
      %v1350 = vpop.f32.mrf.mxu0
      %1351 = vdwg.mxu0
      %1352 = vmatprep.subr.bf16.mxu0 0
      %1353 = vmatpush1.bf16.msra.mxu0 0
      %1354 = vmatprep.subr.bf16.mxu0 0
      %1355 = vmatpush1.bf16.msra.mxu0 0
      %1356 = vmatprep.subr.bf16.mxu0 0
      %1357 = vmatpush1.bf16.msra.mxu0 0
      %1358 = vmatprep.subr.bf16.mxu0 0
      %1359 = vmatpush1.bf16.msra.mxu0 0
      %1360 = vmatprep.subr.bf16.mxu0 0
      %1361 = vmatpush1.bf16.msra.mxu0 0
      %1362 = vmatprep.subr.bf16.mxu0 0
      %1363 = vmatpush1.bf16.msra.mxu0 0
      %1364 = vmatprep.subr.bf16.mxu0 0
      %1365 = vmatpush1.bf16.msra.mxu0 0
      %1366 = vmatprep.subr.bf16.mxu0 %v1306
      %1367 = vmatpush1.bf16.msra.mxu0 %v1303
      %1368 = vmatprep.subr.bf16.mxu0 0
      %1369 = vmatpush2.bf16.msra.mxu0 0
      %1370 = vmatprep.subr.bf16.mxu0 0
      %1371 = vmatpush2.bf16.msra.mxu0 0
      %1372 = vmatprep.subr.bf16.mxu0 0
      %1373 = vmatpush2.bf16.msra.mxu0 0
      %1374 = vmatprep.subr.bf16.mxu0 0
      %1375 = vmatpush2.bf16.msra.mxu0 0
      %1376 = vmatprep.subr.bf16.mxu0 0
      %1377 = vmatpush2.bf16.msra.mxu0 0
      %1378 = vmatprep.subr.bf16.mxu0 0
      %1379 = vmatpush2.bf16.msra.mxu0 0
      %1380 = vmatprep.subr.bf16.mxu0 0
      %1381 = vmatpush2.bf16.msra.mxu0 0
      %1382 = vmatprep.subr.bf16.mxu0 0
      %1383 = vmatpush2.bf16.msra.mxu0 0
      %1384 = vmatprep.mubr.bf16.mxu0 0
      %1385 = vmatmul.mubr.bf16.gmra.mxu0 %v1294
      %v1386 = vpop.f32.mrf.mxu0
      %v1387 = vadd.f32 0.0, %v1386
      %v1388 = vpop.f32.mrf.mxu0
      %v1389 = vadd.f32 0.0, %v1388
      %v1390 = vpop.f32.mrf.mxu0
      %v1391 = vpop.f32.mrf.mxu0
      %1392 = vdwg.mxu0
      %1393 = vmatprep.subr.bf16.mxu0 0
      %1394 = vmatpush1.bf16.msra.mxu0 0
      %1395 = vmatprep.subr.bf16.mxu0 0
      %1396 = vmatpush1.bf16.msra.mxu0 0
      %1397 = vmatprep.subr.bf16.mxu0 0
      %1398 = vmatpush1.bf16.msra.mxu0 0
      %1399 = vmatprep.subr.bf16.mxu0 0
      %1400 = vmatpush1.bf16.msra.mxu0 0
      %1401 = vmatprep.subr.bf16.mxu0 0
      %1402 = vmatpush1.bf16.msra.mxu0 0
      %1403 = vmatprep.subr.bf16.mxu0 0
      %1404 = vmatpush1.bf16.msra.mxu0 0
      %1405 = vmatprep.subr.bf16.mxu0 0
      %1406 = vmatpush1.bf16.msra.mxu0 0
      %1407 = vmatprep.subr.bf16.mxu0 0
      %1408 = vmatpush1.bf16.msra.mxu0 %v1309
      %1409 = vmatprep.subr.bf16.mxu0 0
      %1410 = vmatpush2.bf16.msra.mxu0 0
      %1411 = vmatprep.subr.bf16.mxu0 0
      %1412 = vmatpush2.bf16.msra.mxu0 0
      %1413 = vmatprep.subr.bf16.mxu0 0
      %1414 = vmatpush2.bf16.msra.mxu0 0
      %1415 = vmatprep.subr.bf16.mxu0 0
      %1416 = vmatpush2.bf16.msra.mxu0 0
      %1417 = vmatprep.subr.bf16.mxu0 0
      %1418 = vmatpush2.bf16.msra.mxu0 0
      %1419 = vmatprep.subr.bf16.mxu0 0
      %1420 = vmatpush2.bf16.msra.mxu0 0
      %1421 = vmatprep.subr.bf16.mxu0 0
      %1422 = vmatpush2.bf16.msra.mxu0 0
      %1423 = vmatprep.subr.bf16.mxu0 0
      %1424 = vmatpush2.bf16.msra.mxu0 0
      %1425 = vmatprep.mubr.bf16.mxu0 0
      %1426 = vmatmul.mubr.bf16.gmra.mxu0 %v1294
      %v1427 = vpop.f32.mrf.mxu0
      %v1428 = vadd.f32 0.0, %v1427
      %v1429 = vpop.f32.mrf.mxu0
      %v1430 = vpop.f32.mrf.mxu0
      %v1431 = vpop.f32.mrf.mxu0
      %1432 = vdwg.mxu0
      %v1433 = vadd.f32 %v1268, %v1346
      %v1434 = vadd.f32 %v1269, %v1348
      %v1435 = vadd.f32 %v1270, %v1387
      %v1436 = vadd.f32 %v1271, %v1389
      %v1437 = vadd.f32 %v1272, %v1428
      %s1438 = scalar_lea.vmem %s0, 28
      %v1439 = vld [vmem:[%s1438] sm:$0xf]
      %1440 = vrot.lane.b32.xlu0 %v294, 90
      %v1441 = vpop.permute.xlu0 %1440
      %1442 = vrot.lane.b32.xlu0 %v295, 90
      %v1443 = vpop.permute.xlu0 %1442
      %1444 = vrot.lane.b32.xlu0 %v296, 90
      %v1445 = vpop.permute.xlu0 %1444
      %1446 = vrot.lane.b32.xlu0 %v297, 90
      %v1447 = vpop.permute.xlu0 %1446
      %1448 = vrot.lane.b32.xlu0 %v298, 90
      %v1449 = vpop.permute.xlu0 %1448
      %1450 = vrot.lane.b32.xlu0 %v449, 90
      %v1451 = vpop.permute.xlu0 %1450
      %vm1452 = vcmask 736256
      %v1453 = vsel %vm1452, %v1441, %v1443
      %v1454 = vsel %vm1452, %v1443, %v1445
      %v1455 = vsel %vm1452, %v1445, %v1447
      %v1456 = vsel %vm1452, %v1447, %v1449
      %v1457 = vsel %vm1452, %v1449, %v1451
      %v1459 = vsel %vm299, %v1439, 0
      %v1462 = vsel %vm303, %v1453, 0
      %v1465 = vsel %vm303, %v1454, 0
      %v1468 = vsel %vm303, %v1455, 0
      %v1471 = vsel %vm303, %v1456, 0
      %v1474 = vsel %vm303, %v1457, 0
      %1476 = vmatprep.subr.bf16.mxu0 0
      %1477 = vmatpush1.bf16.msra.mxu0 0
      %1478 = vmatprep.subr.bf16.mxu0 0
      %1479 = vmatpush1.bf16.msra.mxu0 0
      %1480 = vmatprep.subr.bf16.mxu0 0
      %1481 = vmatpush1.bf16.msra.mxu0 0
      %1482 = vmatprep.subr.bf16.mxu0 0
      %1483 = vmatpush1.bf16.msra.mxu0 0
      %1484 = vmatprep.subr.bf16.mxu0 0
      %1485 = vmatpush1.bf16.msra.mxu0 0
      %1486 = vmatprep.subr.bf16.mxu0 0
      %1487 = vmatpush1.bf16.msra.mxu0 0
      %1488 = vmatprep.subr.bf16.mxu0 0
      %1489 = vmatpush1.bf16.msra.mxu0 0
      %1490 = vmatprep.subr.bf16.mxu0 %v1465
      %1491 = vmatpush1.bf16.msra.mxu0 %v1462
      %1492 = vmatprep.subr.bf16.mxu0 0
      %1493 = vmatpush2.bf16.msra.mxu0 0
      %1494 = vmatprep.subr.bf16.mxu0 0
      %1495 = vmatpush2.bf16.msra.mxu0 0
      %1496 = vmatprep.subr.bf16.mxu0 0
      %1497 = vmatpush2.bf16.msra.mxu0 0
      %1498 = vmatprep.subr.bf16.mxu0 0
      %1499 = vmatpush2.bf16.msra.mxu0 0
      %1500 = vmatprep.subr.bf16.mxu0 0
      %1501 = vmatpush2.bf16.msra.mxu0 0
      %1502 = vmatprep.subr.bf16.mxu0 0
      %1503 = vmatpush2.bf16.msra.mxu0 0
      %1504 = vmatprep.subr.bf16.mxu0 0
      %1505 = vmatpush2.bf16.msra.mxu0 0
      %1506 = vmatprep.subr.bf16.mxu0 0
      %1507 = vmatpush2.bf16.msra.mxu0 0
      %1508 = vmatprep.mubr.bf16.mxu0 0
      %1509 = vmatmul.mubr.bf16.gmra.mxu0 %v1459
      %v1510 = vpop.f32.mrf.mxu0
      %v1511 = vadd.f32 0.0, %v1510
      %v1512 = vpop.f32.mrf.mxu0
      %v1513 = vadd.f32 0.0, %v1512
      %v1514 = vpop.f32.mrf.mxu0
      %v1515 = vpop.f32.mrf.mxu0
      %1516 = vdwg.mxu0
      %1517 = vmatprep.subr.bf16.mxu0 0
      %1518 = vmatpush1.bf16.msra.mxu0 0
      %1519 = vmatprep.subr.bf16.mxu0 0
      %1520 = vmatpush1.bf16.msra.mxu0 0
      %1521 = vmatprep.subr.bf16.mxu0 0
      %1522 = vmatpush1.bf16.msra.mxu0 0
      %1523 = vmatprep.subr.bf16.mxu0 0
      %1524 = vmatpush1.bf16.msra.mxu0 0
      %1525 = vmatprep.subr.bf16.mxu0 0
      %1526 = vmatpush1.bf16.msra.mxu0 0
      %1527 = vmatprep.subr.bf16.mxu0 0
      %1528 = vmatpush1.bf16.msra.mxu0 0
      %1529 = vmatprep.subr.bf16.mxu0 0
      %1530 = vmatpush1.bf16.msra.mxu0 0
      %1531 = vmatprep.subr.bf16.mxu0 %v1471
      %1532 = vmatpush1.bf16.msra.mxu0 %v1468
      %1533 = vmatprep.subr.bf16.mxu0 0
      %1534 = vmatpush2.bf16.msra.mxu0 0
      %1535 = vmatprep.subr.bf16.mxu0 0
      %1536 = vmatpush2.bf16.msra.mxu0 0
      %1537 = vmatprep.subr.bf16.mxu0 0
      %1538 = vmatpush2.bf16.msra.mxu0 0
      %1539 = vmatprep.subr.bf16.mxu0 0
      %1540 = vmatpush2.bf16.msra.mxu0 0
      %1541 = vmatprep.subr.bf16.mxu0 0
      %1542 = vmatpush2.bf16.msra.mxu0 0
      %1543 = vmatprep.subr.bf16.mxu0 0
      %1544 = vmatpush2.bf16.msra.mxu0 0
      %1545 = vmatprep.subr.bf16.mxu0 0
      %1546 = vmatpush2.bf16.msra.mxu0 0
      %1547 = vmatprep.subr.bf16.mxu0 0
      %1548 = vmatpush2.bf16.msra.mxu0 0
      %1549 = vmatprep.mubr.bf16.mxu0 0
      %1550 = vmatmul.mubr.bf16.gmra.mxu0 %v1459
      %v1551 = vpop.f32.mrf.mxu0
      %v1552 = vadd.f32 0.0, %v1551
      %v1553 = vpop.f32.mrf.mxu0
      %v1554 = vadd.f32 0.0, %v1553
      %v1555 = vpop.f32.mrf.mxu0
      %v1556 = vpop.f32.mrf.mxu0
      %1557 = vdwg.mxu0
      %1558 = vmatprep.subr.bf16.mxu0 0
      %1559 = vmatpush1.bf16.msra.mxu0 0
      %1560 = vmatprep.subr.bf16.mxu0 0
      %1561 = vmatpush1.bf16.msra.mxu0 0
      %1562 = vmatprep.subr.bf16.mxu0 0
      %1563 = vmatpush1.bf16.msra.mxu0 0
      %1564 = vmatprep.subr.bf16.mxu0 0
      %1565 = vmatpush1.bf16.msra.mxu0 0
      %1566 = vmatprep.subr.bf16.mxu0 0
      %1567 = vmatpush1.bf16.msra.mxu0 0
      %1568 = vmatprep.subr.bf16.mxu0 0
      %1569 = vmatpush1.bf16.msra.mxu0 0
      %1570 = vmatprep.subr.bf16.mxu0 0
      %1571 = vmatpush1.bf16.msra.mxu0 0
      %1572 = vmatprep.subr.bf16.mxu0 0
      %1573 = vmatpush1.bf16.msra.mxu0 %v1474
      %1574 = vmatprep.subr.bf16.mxu0 0
      %1575 = vmatpush2.bf16.msra.mxu0 0
      %1576 = vmatprep.subr.bf16.mxu0 0
      %1577 = vmatpush2.bf16.msra.mxu0 0
      %1578 = vmatprep.subr.bf16.mxu0 0
      %1579 = vmatpush2.bf16.msra.mxu0 0
      %1580 = vmatprep.subr.bf16.mxu0 0
      %1581 = vmatpush2.bf16.msra.mxu0 0
      %1582 = vmatprep.subr.bf16.mxu0 0
      %1583 = vmatpush2.bf16.msra.mxu0 0
      %1584 = vmatprep.subr.bf16.mxu0 0
      %1585 = vmatpush2.bf16.msra.mxu0 0
      %1586 = vmatprep.subr.bf16.mxu0 0
      %1587 = vmatpush2.bf16.msra.mxu0 0
      %1588 = vmatprep.subr.bf16.mxu0 0
      %1589 = vmatpush2.bf16.msra.mxu0 0
      %1590 = vmatprep.mubr.bf16.mxu0 0
      %1591 = vmatmul.mubr.bf16.gmra.mxu0 %v1459
      %v1592 = vpop.f32.mrf.mxu0
      %v1593 = vadd.f32 0.0, %v1592
      %v1594 = vpop.f32.mrf.mxu0
      %v1595 = vpop.f32.mrf.mxu0
      %v1596 = vpop.f32.mrf.mxu0
      %1597 = vdwg.mxu0
      %v1598 = vadd.f32 %v1433, %v1511
      %v1599 = vadd.f32 %v1434, %v1513
      %v1600 = vadd.f32 %v1435, %v1552
      %v1601 = vadd.f32 %v1436, %v1554
      %v1602 = vadd.f32 %v1437, %v1593
      %s1603 = scalar_lea.vmem %s0, 32
      %v1604 = vld [vmem:[%s1603] sm:$0xf]
      %1605 = vrot.lane.b32.xlu0 %v294, 58
      %v1606 = vpop.permute.xlu0 %1605
      %1607 = vrot.lane.b32.xlu0 %v295, 58
      %v1608 = vpop.permute.xlu0 %1607
      %1609 = vrot.lane.b32.xlu0 %v296, 58
      %v1610 = vpop.permute.xlu0 %1609
      %1611 = vrot.lane.b32.xlu0 %v297, 58
      %v1612 = vpop.permute.xlu0 %1611
      %1613 = vrot.lane.b32.xlu0 %v298, 58
      %v1614 = vpop.permute.xlu0 %1613
      %1615 = vrot.lane.b32.xlu0 %v449, 58
      %v1616 = vpop.permute.xlu0 %1615
      %vm1617 = vcmask 474112
      %v1618 = vsel %vm1617, %v1606, %v1608
      %v1619 = vsel %vm1617, %v1608, %v1610
      %v1620 = vsel %vm1617, %v1610, %v1612
      %v1621 = vsel %vm1617, %v1612, %v1614
      %v1622 = vsel %vm1617, %v1614, %v1616
      %v1624 = vsel %vm299, %v1604, 0
      %v1627 = vsel %vm303, %v1618, 0
      %v1630 = vsel %vm303, %v1619, 0
      %v1633 = vsel %vm303, %v1620, 0
      %v1636 = vsel %vm303, %v1621, 0
      %v1639 = vsel %vm303, %v1622, 0
      %1641 = vmatprep.subr.bf16.mxu0 0
      %1642 = vmatpush1.bf16.msra.mxu0 0
      %1643 = vmatprep.subr.bf16.mxu0 0
      %1644 = vmatpush1.bf16.msra.mxu0 0
      %1645 = vmatprep.subr.bf16.mxu0 0
      %1646 = vmatpush1.bf16.msra.mxu0 0
      %1647 = vmatprep.subr.bf16.mxu0 0
      %1648 = vmatpush1.bf16.msra.mxu0 0
      %1649 = vmatprep.subr.bf16.mxu0 0
      %1650 = vmatpush1.bf16.msra.mxu0 0
      %1651 = vmatprep.subr.bf16.mxu0 0
      %1652 = vmatpush1.bf16.msra.mxu0 0
      %1653 = vmatprep.subr.bf16.mxu0 0
      %1654 = vmatpush1.bf16.msra.mxu0 0
      %1655 = vmatprep.subr.bf16.mxu0 %v1630
      %1656 = vmatpush1.bf16.msra.mxu0 %v1627
      %1657 = vmatprep.subr.bf16.mxu0 0
      %1658 = vmatpush2.bf16.msra.mxu0 0
      %1659 = vmatprep.subr.bf16.mxu0 0
      %1660 = vmatpush2.bf16.msra.mxu0 0
      %1661 = vmatprep.subr.bf16.mxu0 0
      %1662 = vmatpush2.bf16.msra.mxu0 0
      %1663 = vmatprep.subr.bf16.mxu0 0
      %1664 = vmatpush2.bf16.msra.mxu0 0
      %1665 = vmatprep.subr.bf16.mxu0 0
      %1666 = vmatpush2.bf16.msra.mxu0 0
      %1667 = vmatprep.subr.bf16.mxu0 0
      %1668 = vmatpush2.bf16.msra.mxu0 0
      %1669 = vmatprep.subr.bf16.mxu0 0
      %1670 = vmatpush2.bf16.msra.mxu0 0
      %1671 = vmatprep.subr.bf16.mxu0 0
      %1672 = vmatpush2.bf16.msra.mxu0 0
      %1673 = vmatprep.mubr.bf16.mxu0 0
      %1674 = vmatmul.mubr.bf16.gmra.mxu0 %v1624
      %v1675 = vpop.f32.mrf.mxu0
      %v1676 = vadd.f32 0.0, %v1675
      %v1677 = vpop.f32.mrf.mxu0
      %v1678 = vadd.f32 0.0, %v1677
      %v1679 = vpop.f32.mrf.mxu0
      %v1680 = vpop.f32.mrf.mxu0
      %1681 = vdwg.mxu0
      %1682 = vmatprep.subr.bf16.mxu0 0
      %1683 = vmatpush1.bf16.msra.mxu0 0
      %1684 = vmatprep.subr.bf16.mxu0 0
      %1685 = vmatpush1.bf16.msra.mxu0 0
      %1686 = vmatprep.subr.bf16.mxu0 0
      %1687 = vmatpush1.bf16.msra.mxu0 0
      %1688 = vmatprep.subr.bf16.mxu0 0
      %1689 = vmatpush1.bf16.msra.mxu0 0
      %1690 = vmatprep.subr.bf16.mxu0 0
      %1691 = vmatpush1.bf16.msra.mxu0 0
      %1692 = vmatprep.subr.bf16.mxu0 0
      %1693 = vmatpush1.bf16.msra.mxu0 0
      %1694 = vmatprep.subr.bf16.mxu0 0
      %1695 = vmatpush1.bf16.msra.mxu0 0
      %1696 = vmatprep.subr.bf16.mxu0 %v1636
      %1697 = vmatpush1.bf16.msra.mxu0 %v1633
      %1698 = vmatprep.subr.bf16.mxu0 0
      %1699 = vmatpush2.bf16.msra.mxu0 0
      %1700 = vmatprep.subr.bf16.mxu0 0
      %1701 = vmatpush2.bf16.msra.mxu0 0
      %1702 = vmatprep.subr.bf16.mxu0 0
      %1703 = vmatpush2.bf16.msra.mxu0 0
      %1704 = vmatprep.subr.bf16.mxu0 0
      %1705 = vmatpush2.bf16.msra.mxu0 0
      %1706 = vmatprep.subr.bf16.mxu0 0
      %1707 = vmatpush2.bf16.msra.mxu0 0
      %1708 = vmatprep.subr.bf16.mxu0 0
      %1709 = vmatpush2.bf16.msra.mxu0 0
      %1710 = vmatprep.subr.bf16.mxu0 0
      %1711 = vmatpush2.bf16.msra.mxu0 0
      %1712 = vmatprep.subr.bf16.mxu0 0
      %1713 = vmatpush2.bf16.msra.mxu0 0
      %1714 = vmatprep.mubr.bf16.mxu0 0
      %1715 = vmatmul.mubr.bf16.gmra.mxu0 %v1624
      %v1716 = vpop.f32.mrf.mxu0
      %v1717 = vadd.f32 0.0, %v1716
      %v1718 = vpop.f32.mrf.mxu0
      %v1719 = vadd.f32 0.0, %v1718
      %v1720 = vpop.f32.mrf.mxu0
      %v1721 = vpop.f32.mrf.mxu0
      %1722 = vdwg.mxu0
      %1723 = vmatprep.subr.bf16.mxu0 0
      %1724 = vmatpush1.bf16.msra.mxu0 0
      %1725 = vmatprep.subr.bf16.mxu0 0
      %1726 = vmatpush1.bf16.msra.mxu0 0
      %1727 = vmatprep.subr.bf16.mxu0 0
      %1728 = vmatpush1.bf16.msra.mxu0 0
      %1729 = vmatprep.subr.bf16.mxu0 0
      %1730 = vmatpush1.bf16.msra.mxu0 0
      %1731 = vmatprep.subr.bf16.mxu0 0
      %1732 = vmatpush1.bf16.msra.mxu0 0
      %1733 = vmatprep.subr.bf16.mxu0 0
      %1734 = vmatpush1.bf16.msra.mxu0 0
      %1735 = vmatprep.subr.bf16.mxu0 0
      %1736 = vmatpush1.bf16.msra.mxu0 0
      %1737 = vmatprep.subr.bf16.mxu0 0
      %1738 = vmatpush1.bf16.msra.mxu0 %v1639
      %1739 = vmatprep.subr.bf16.mxu0 0
      %1740 = vmatpush2.bf16.msra.mxu0 0
      %1741 = vmatprep.subr.bf16.mxu0 0
      %1742 = vmatpush2.bf16.msra.mxu0 0
      %1743 = vmatprep.subr.bf16.mxu0 0
      %1744 = vmatpush2.bf16.msra.mxu0 0
      %1745 = vmatprep.subr.bf16.mxu0 0
      %1746 = vmatpush2.bf16.msra.mxu0 0
      %1747 = vmatprep.subr.bf16.mxu0 0
      %1748 = vmatpush2.bf16.msra.mxu0 0
      %1749 = vmatprep.subr.bf16.mxu0 0
      %1750 = vmatpush2.bf16.msra.mxu0 0
      %1751 = vmatprep.subr.bf16.mxu0 0
      %1752 = vmatpush2.bf16.msra.mxu0 0
      %1753 = vmatprep.subr.bf16.mxu0 0
      %1754 = vmatpush2.bf16.msra.mxu0 0
      %1755 = vmatprep.mubr.bf16.mxu0 0
      %1756 = vmatmul.mubr.bf16.gmra.mxu0 %v1624
      %v1757 = vpop.f32.mrf.mxu0
      %v1758 = vadd.f32 0.0, %v1757
      %v1759 = vpop.f32.mrf.mxu0
      %v1760 = vpop.f32.mrf.mxu0
      %v1761 = vpop.f32.mrf.mxu0
      %1762 = vdwg.mxu0
      %v1763 = vadd.f32 %v1598, %v1676
      %v1764 = vadd.f32 %v1599, %v1678
      %v1765 = vadd.f32 %v1600, %v1717
      %v1766 = vadd.f32 %v1601, %v1719
      %v1767 = vadd.f32 %v1602, %v1758
      %s1768 = scalar_lea.vmem %s0, 36
      %v1769 = vld [vmem:[%s1768] sm:$0xf]
      %1770 = vrot.lane.b32.xlu0 %v294, 57
      %v1771 = vpop.permute.xlu0 %1770
      %1772 = vrot.lane.b32.xlu0 %v295, 57
      %v1773 = vpop.permute.xlu0 %1772
      %1774 = vrot.lane.b32.xlu0 %v296, 57
      %v1775 = vpop.permute.xlu0 %1774
      %1776 = vrot.lane.b32.xlu0 %v297, 57
      %v1777 = vpop.permute.xlu0 %1776
      %1778 = vrot.lane.b32.xlu0 %v298, 57
      %v1779 = vpop.permute.xlu0 %1778
      %1780 = vrot.lane.b32.xlu0 %v449, 57
      %v1781 = vpop.permute.xlu0 %1780
      %vm1782 = vcmask 465920
      %v1783 = vsel %vm1782, %v1771, %v1773
      %v1784 = vsel %vm1782, %v1773, %v1775
      %v1785 = vsel %vm1782, %v1775, %v1777
      %v1786 = vsel %vm1782, %v1777, %v1779
      %v1787 = vsel %vm1782, %v1779, %v1781
      %v1789 = vsel %vm299, %v1769, 0
      %v1792 = vsel %vm303, %v1783, 0
      %v1795 = vsel %vm303, %v1784, 0
      %v1798 = vsel %vm303, %v1785, 0
      %v1801 = vsel %vm303, %v1786, 0
      %v1804 = vsel %vm303, %v1787, 0
      %1806 = vmatprep.subr.bf16.mxu0 0
      %1807 = vmatpush1.bf16.msra.mxu0 0
      %1808 = vmatprep.subr.bf16.mxu0 0
      %1809 = vmatpush1.bf16.msra.mxu0 0
      %1810 = vmatprep.subr.bf16.mxu0 0
      %1811 = vmatpush1.bf16.msra.mxu0 0
      %1812 = vmatprep.subr.bf16.mxu0 0
      %1813 = vmatpush1.bf16.msra.mxu0 0
      %1814 = vmatprep.subr.bf16.mxu0 0
      %1815 = vmatpush1.bf16.msra.mxu0 0
      %1816 = vmatprep.subr.bf16.mxu0 0
      %1817 = vmatpush1.bf16.msra.mxu0 0
      %1818 = vmatprep.subr.bf16.mxu0 0
      %1819 = vmatpush1.bf16.msra.mxu0 0
      %1820 = vmatprep.subr.bf16.mxu0 %v1795
      %1821 = vmatpush1.bf16.msra.mxu0 %v1792
      %1822 = vmatprep.subr.bf16.mxu0 0
      %1823 = vmatpush2.bf16.msra.mxu0 0
      %1824 = vmatprep.subr.bf16.mxu0 0
      %1825 = vmatpush2.bf16.msra.mxu0 0
      %1826 = vmatprep.subr.bf16.mxu0 0
      %1827 = vmatpush2.bf16.msra.mxu0 0
      %1828 = vmatprep.subr.bf16.mxu0 0
      %1829 = vmatpush2.bf16.msra.mxu0 0
      %1830 = vmatprep.subr.bf16.mxu0 0
      %1831 = vmatpush2.bf16.msra.mxu0 0
      %1832 = vmatprep.subr.bf16.mxu0 0
      %1833 = vmatpush2.bf16.msra.mxu0 0
      %1834 = vmatprep.subr.bf16.mxu0 0
      %1835 = vmatpush2.bf16.msra.mxu0 0
      %1836 = vmatprep.subr.bf16.mxu0 0
      %1837 = vmatpush2.bf16.msra.mxu0 0
      %1838 = vmatprep.mubr.bf16.mxu0 0
      %1839 = vmatmul.mubr.bf16.gmra.mxu0 %v1789
      %v1840 = vpop.f32.mrf.mxu0
      %v1841 = vadd.f32 0.0, %v1840
      %v1842 = vpop.f32.mrf.mxu0
      %v1843 = vadd.f32 0.0, %v1842
      %v1844 = vpop.f32.mrf.mxu0
      %v1845 = vpop.f32.mrf.mxu0
      %1846 = vdwg.mxu0
      %1847 = vmatprep.subr.bf16.mxu0 0
      %1848 = vmatpush1.bf16.msra.mxu0 0
      %1849 = vmatprep.subr.bf16.mxu0 0
      %1850 = vmatpush1.bf16.msra.mxu0 0
      %1851 = vmatprep.subr.bf16.mxu0 0
      %1852 = vmatpush1.bf16.msra.mxu0 0
      %1853 = vmatprep.subr.bf16.mxu0 0
      %1854 = vmatpush1.bf16.msra.mxu0 0
      %1855 = vmatprep.subr.bf16.mxu0 0
      %1856 = vmatpush1.bf16.msra.mxu0 0
      %1857 = vmatprep.subr.bf16.mxu0 0
      %1858 = vmatpush1.bf16.msra.mxu0 0
      %1859 = vmatprep.subr.bf16.mxu0 0
      %1860 = vmatpush1.bf16.msra.mxu0 0
      %1861 = vmatprep.subr.bf16.mxu0 %v1801
      %1862 = vmatpush1.bf16.msra.mxu0 %v1798
      %1863 = vmatprep.subr.bf16.mxu0 0
      %1864 = vmatpush2.bf16.msra.mxu0 0
      %1865 = vmatprep.subr.bf16.mxu0 0
      %1866 = vmatpush2.bf16.msra.mxu0 0
      %1867 = vmatprep.subr.bf16.mxu0 0
      %1868 = vmatpush2.bf16.msra.mxu0 0
      %1869 = vmatprep.subr.bf16.mxu0 0
      %1870 = vmatpush2.bf16.msra.mxu0 0
      %1871 = vmatprep.subr.bf16.mxu0 0
      %1872 = vmatpush2.bf16.msra.mxu0 0
      %1873 = vmatprep.subr.bf16.mxu0 0
      %1874 = vmatpush2.bf16.msra.mxu0 0
      %1875 = vmatprep.subr.bf16.mxu0 0
      %1876 = vmatpush2.bf16.msra.mxu0 0
      %1877 = vmatprep.subr.bf16.mxu0 0
      %1878 = vmatpush2.bf16.msra.mxu0 0
      %1879 = vmatprep.mubr.bf16.mxu0 0
      %1880 = vmatmul.mubr.bf16.gmra.mxu0 %v1789
      %v1881 = vpop.f32.mrf.mxu0
      %v1882 = vadd.f32 0.0, %v1881
      %v1883 = vpop.f32.mrf.mxu0
      %v1884 = vadd.f32 0.0, %v1883
      %v1885 = vpop.f32.mrf.mxu0
      %v1886 = vpop.f32.mrf.mxu0
      %1887 = vdwg.mxu0
      %1888 = vmatprep.subr.bf16.mxu0 0
      %1889 = vmatpush1.bf16.msra.mxu0 0
      %1890 = vmatprep.subr.bf16.mxu0 0
      %1891 = vmatpush1.bf16.msra.mxu0 0
      %1892 = vmatprep.subr.bf16.mxu0 0
      %1893 = vmatpush1.bf16.msra.mxu0 0
      %1894 = vmatprep.subr.bf16.mxu0 0
      %1895 = vmatpush1.bf16.msra.mxu0 0
      %1896 = vmatprep.subr.bf16.mxu0 0
      %1897 = vmatpush1.bf16.msra.mxu0 0
      %1898 = vmatprep.subr.bf16.mxu0 0
      %1899 = vmatpush1.bf16.msra.mxu0 0
      %1900 = vmatprep.subr.bf16.mxu0 0
      %1901 = vmatpush1.bf16.msra.mxu0 0
      %1902 = vmatprep.subr.bf16.mxu0 0
      %1903 = vmatpush1.bf16.msra.mxu0 %v1804
      %1904 = vmatprep.subr.bf16.mxu0 0
      %1905 = vmatpush2.bf16.msra.mxu0 0
      %1906 = vmatprep.subr.bf16.mxu0 0
      %1907 = vmatpush2.bf16.msra.mxu0 0
      %1908 = vmatprep.subr.bf16.mxu0 0
      %1909 = vmatpush2.bf16.msra.mxu0 0
      %1910 = vmatprep.subr.bf16.mxu0 0
      %1911 = vmatpush2.bf16.msra.mxu0 0
      %1912 = vmatprep.subr.bf16.mxu0 0
      %1913 = vmatpush2.bf16.msra.mxu0 0
      %1914 = vmatprep.subr.bf16.mxu0 0
      %1915 = vmatpush2.bf16.msra.mxu0 0
      %1916 = vmatprep.subr.bf16.mxu0 0
      %1917 = vmatpush2.bf16.msra.mxu0 0
      %1918 = vmatprep.subr.bf16.mxu0 0
      %1919 = vmatpush2.bf16.msra.mxu0 0
      %1920 = vmatprep.mubr.bf16.mxu0 0
      %1921 = vmatmul.mubr.bf16.gmra.mxu0 %v1789
      %v1922 = vpop.f32.mrf.mxu0
      %v1923 = vadd.f32 0.0, %v1922
      %v1924 = vpop.f32.mrf.mxu0
      %v1925 = vpop.f32.mrf.mxu0
      %v1926 = vpop.f32.mrf.mxu0
      %1927 = vdwg.mxu0
      %v1928 = vadd.f32 %v1763, %v1841
      %v1929 = vadd.f32 %v1764, %v1843
      %v1930 = vadd.f32 %v1765, %v1882
      %v1931 = vadd.f32 %v1766, %v1884
      %v1932 = vadd.f32 %v1767, %v1923
      %s1933 = scalar_lea.vmem %s0, 40
      %v1934 = vld [vmem:[%s1933] sm:$0xf]
      %1935 = vrot.lane.b32.xlu0 %v294, 56
      %v1936 = vpop.permute.xlu0 %1935
      %1937 = vrot.lane.b32.xlu0 %v295, 56
      %v1938 = vpop.permute.xlu0 %1937
      %1939 = vrot.lane.b32.xlu0 %v296, 56
      %v1940 = vpop.permute.xlu0 %1939
      %1941 = vrot.lane.b32.xlu0 %v297, 56
      %v1942 = vpop.permute.xlu0 %1941
      %1943 = vrot.lane.b32.xlu0 %v298, 56
      %v1944 = vpop.permute.xlu0 %1943
      %1945 = vrot.lane.b32.xlu0 %v449, 56
      %v1946 = vpop.permute.xlu0 %1945
      %vm1947 = vcmask 457728
      %v1948 = vsel %vm1947, %v1936, %v1938
      %v1949 = vsel %vm1947, %v1938, %v1940
      %v1950 = vsel %vm1947, %v1940, %v1942
      %v1951 = vsel %vm1947, %v1942, %v1944
      %v1952 = vsel %vm1947, %v1944, %v1946
      %v1954 = vsel %vm299, %v1934, 0
      %v1957 = vsel %vm303, %v1948, 0
      %v1960 = vsel %vm303, %v1949, 0
      %v1963 = vsel %vm303, %v1950, 0
      %v1966 = vsel %vm303, %v1951, 0
      %v1969 = vsel %vm303, %v1952, 0
      %1971 = vmatprep.subr.bf16.mxu0 0
      %1972 = vmatpush1.bf16.msra.mxu0 0
      %1973 = vmatprep.subr.bf16.mxu0 0
      %1974 = vmatpush1.bf16.msra.mxu0 0
      %1975 = vmatprep.subr.bf16.mxu0 0
      %1976 = vmatpush1.bf16.msra.mxu0 0
      %1977 = vmatprep.subr.bf16.mxu0 0
      %1978 = vmatpush1.bf16.msra.mxu0 0
      %1979 = vmatprep.subr.bf16.mxu0 0
      %1980 = vmatpush1.bf16.msra.mxu0 0
      %1981 = vmatprep.subr.bf16.mxu0 0
      %1982 = vmatpush1.bf16.msra.mxu0 0
      %1983 = vmatprep.subr.bf16.mxu0 0
      %1984 = vmatpush1.bf16.msra.mxu0 0
      %1985 = vmatprep.subr.bf16.mxu0 %v1960
      %1986 = vmatpush1.bf16.msra.mxu0 %v1957
      %1987 = vmatprep.subr.bf16.mxu0 0
      %1988 = vmatpush2.bf16.msra.mxu0 0
      %1989 = vmatprep.subr.bf16.mxu0 0
      %1990 = vmatpush2.bf16.msra.mxu0 0
      %1991 = vmatprep.subr.bf16.mxu0 0
      %1992 = vmatpush2.bf16.msra.mxu0 0
      %1993 = vmatprep.subr.bf16.mxu0 0
      %1994 = vmatpush2.bf16.msra.mxu0 0
      %1995 = vmatprep.subr.bf16.mxu0 0
      %1996 = vmatpush2.bf16.msra.mxu0 0
      %1997 = vmatprep.subr.bf16.mxu0 0
      %1998 = vmatpush2.bf16.msra.mxu0 0
      %1999 = vmatprep.subr.bf16.mxu0 0
      %2000 = vmatpush2.bf16.msra.mxu0 0
      %2001 = vmatprep.subr.bf16.mxu0 0
      %2002 = vmatpush2.bf16.msra.mxu0 0
      %2003 = vmatprep.mubr.bf16.mxu0 0
      %2004 = vmatmul.mubr.bf16.gmra.mxu0 %v1954
      %v2005 = vpop.f32.mrf.mxu0
      %v2006 = vadd.f32 0.0, %v2005
      %v2007 = vpop.f32.mrf.mxu0
      %v2008 = vadd.f32 0.0, %v2007
      %v2009 = vpop.f32.mrf.mxu0
      %v2010 = vpop.f32.mrf.mxu0
      %2011 = vdwg.mxu0
      %2012 = vmatprep.subr.bf16.mxu0 0
      %2013 = vmatpush1.bf16.msra.mxu0 0
      %2014 = vmatprep.subr.bf16.mxu0 0
      %2015 = vmatpush1.bf16.msra.mxu0 0
      %2016 = vmatprep.subr.bf16.mxu0 0
      %2017 = vmatpush1.bf16.msra.mxu0 0
      %2018 = vmatprep.subr.bf16.mxu0 0
      %2019 = vmatpush1.bf16.msra.mxu0 0
      %2020 = vmatprep.subr.bf16.mxu0 0
      %2021 = vmatpush1.bf16.msra.mxu0 0
      %2022 = vmatprep.subr.bf16.mxu0 0
      %2023 = vmatpush1.bf16.msra.mxu0 0
      %2024 = vmatprep.subr.bf16.mxu0 0
      %2025 = vmatpush1.bf16.msra.mxu0 0
      %2026 = vmatprep.subr.bf16.mxu0 %v1966
      %2027 = vmatpush1.bf16.msra.mxu0 %v1963
      %2028 = vmatprep.subr.bf16.mxu0 0
      %2029 = vmatpush2.bf16.msra.mxu0 0
      %2030 = vmatprep.subr.bf16.mxu0 0
      %2031 = vmatpush2.bf16.msra.mxu0 0
      %2032 = vmatprep.subr.bf16.mxu0 0
      %2033 = vmatpush2.bf16.msra.mxu0 0
      %2034 = vmatprep.subr.bf16.mxu0 0
      %2035 = vmatpush2.bf16.msra.mxu0 0
      %2036 = vmatprep.subr.bf16.mxu0 0
      %2037 = vmatpush2.bf16.msra.mxu0 0
      %2038 = vmatprep.subr.bf16.mxu0 0
      %2039 = vmatpush2.bf16.msra.mxu0 0
      %2040 = vmatprep.subr.bf16.mxu0 0
      %2041 = vmatpush2.bf16.msra.mxu0 0
      %2042 = vmatprep.subr.bf16.mxu0 0
      %2043 = vmatpush2.bf16.msra.mxu0 0
      %2044 = vmatprep.mubr.bf16.mxu0 0
      %2045 = vmatmul.mubr.bf16.gmra.mxu0 %v1954
      %v2046 = vpop.f32.mrf.mxu0
      %v2047 = vadd.f32 0.0, %v2046
      %v2048 = vpop.f32.mrf.mxu0
      %v2049 = vadd.f32 0.0, %v2048
      %v2050 = vpop.f32.mrf.mxu0
      %v2051 = vpop.f32.mrf.mxu0
      %2052 = vdwg.mxu0
      %2053 = vmatprep.subr.bf16.mxu0 0
      %2054 = vmatpush1.bf16.msra.mxu0 0
      %2055 = vmatprep.subr.bf16.mxu0 0
      %2056 = vmatpush1.bf16.msra.mxu0 0
      %2057 = vmatprep.subr.bf16.mxu0 0
      %2058 = vmatpush1.bf16.msra.mxu0 0
      %2059 = vmatprep.subr.bf16.mxu0 0
      %2060 = vmatpush1.bf16.msra.mxu0 0
      %2061 = vmatprep.subr.bf16.mxu0 0
      %2062 = vmatpush1.bf16.msra.mxu0 0
      %2063 = vmatprep.subr.bf16.mxu0 0
      %2064 = vmatpush1.bf16.msra.mxu0 0
      %2065 = vmatprep.subr.bf16.mxu0 0
      %2066 = vmatpush1.bf16.msra.mxu0 0
      %2067 = vmatprep.subr.bf16.mxu0 0
      %2068 = vmatpush1.bf16.msra.mxu0 %v1969
      %2069 = vmatprep.subr.bf16.mxu0 0
      %2070 = vmatpush2.bf16.msra.mxu0 0
      %2071 = vmatprep.subr.bf16.mxu0 0
      %2072 = vmatpush2.bf16.msra.mxu0 0
      %2073 = vmatprep.subr.bf16.mxu0 0
      %2074 = vmatpush2.bf16.msra.mxu0 0
      %2075 = vmatprep.subr.bf16.mxu0 0
      %2076 = vmatpush2.bf16.msra.mxu0 0
      %2077 = vmatprep.subr.bf16.mxu0 0
      %2078 = vmatpush2.bf16.msra.mxu0 0
      %2079 = vmatprep.subr.bf16.mxu0 0
      %2080 = vmatpush2.bf16.msra.mxu0 0
      %2081 = vmatprep.subr.bf16.mxu0 0
      %2082 = vmatpush2.bf16.msra.mxu0 0
      %2083 = vmatprep.subr.bf16.mxu0 0
      %2084 = vmatpush2.bf16.msra.mxu0 0
      %2085 = vmatprep.mubr.bf16.mxu0 0
      %2086 = vmatmul.mubr.bf16.gmra.mxu0 %v1954
      %v2087 = vpop.f32.mrf.mxu0
      %v2088 = vadd.f32 0.0, %v2087
      %v2089 = vpop.f32.mrf.mxu0
      %v2090 = vpop.f32.mrf.mxu0
      %v2091 = vpop.f32.mrf.mxu0
      %2092 = vdwg.mxu0
      %v2093 = vadd.f32 %v1928, %v2006
      %v2094 = vadd.f32 %v1929, %v2008
      %v2095 = vadd.f32 %v1930, %v2047
      %v2096 = vadd.f32 %v1931, %v2049
      %v2097 = vadd.f32 %v1932, %v2088
      %s2098 = scalar_lea.vmem %s0, 44
      %v2099 = vld [vmem:[%s2098] sm:$0xf]
      %2100 = vrot.lane.b32.xlu0 %v294, 55
      %v2101 = vpop.permute.xlu0 %2100
      %2102 = vrot.lane.b32.xlu0 %v295, 55
      %v2103 = vpop.permute.xlu0 %2102
      %2104 = vrot.lane.b32.xlu0 %v296, 55
      %v2105 = vpop.permute.xlu0 %2104
      %2106 = vrot.lane.b32.xlu0 %v297, 55
      %v2107 = vpop.permute.xlu0 %2106
      %2108 = vrot.lane.b32.xlu0 %v298, 55
      %v2109 = vpop.permute.xlu0 %2108
      %2110 = vrot.lane.b32.xlu0 %v449, 55
      %v2111 = vpop.permute.xlu0 %2110
      %vm2112 = vcmask 449536
      %v2113 = vsel %vm2112, %v2101, %v2103
      %v2114 = vsel %vm2112, %v2103, %v2105
      %v2115 = vsel %vm2112, %v2105, %v2107
      %v2116 = vsel %vm2112, %v2107, %v2109
      %v2117 = vsel %vm2112, %v2109, %v2111
      %v2119 = vsel %vm299, %v2099, 0
      %v2122 = vsel %vm303, %v2113, 0
      %v2125 = vsel %vm303, %v2114, 0
      %v2128 = vsel %vm303, %v2115, 0
      %v2131 = vsel %vm303, %v2116, 0
      %v2134 = vsel %vm303, %v2117, 0
      %2136 = vmatprep.subr.bf16.mxu0 0
      %2137 = vmatpush1.bf16.msra.mxu0 0
      %2138 = vmatprep.subr.bf16.mxu0 0
      %2139 = vmatpush1.bf16.msra.mxu0 0
      %2140 = vmatprep.subr.bf16.mxu0 0
      %2141 = vmatpush1.bf16.msra.mxu0 0
      %2142 = vmatprep.subr.bf16.mxu0 0
      %2143 = vmatpush1.bf16.msra.mxu0 0
      %2144 = vmatprep.subr.bf16.mxu0 0
      %2145 = vmatpush1.bf16.msra.mxu0 0
      %2146 = vmatprep.subr.bf16.mxu0 0
      %2147 = vmatpush1.bf16.msra.mxu0 0
      %2148 = vmatprep.subr.bf16.mxu0 0
      %2149 = vmatpush1.bf16.msra.mxu0 0
      %2150 = vmatprep.subr.bf16.mxu0 %v2125
      %2151 = vmatpush1.bf16.msra.mxu0 %v2122
      %2152 = vmatprep.subr.bf16.mxu0 0
      %2153 = vmatpush2.bf16.msra.mxu0 0
      %2154 = vmatprep.subr.bf16.mxu0 0
      %2155 = vmatpush2.bf16.msra.mxu0 0
      %2156 = vmatprep.subr.bf16.mxu0 0
      %2157 = vmatpush2.bf16.msra.mxu0 0
      %2158 = vmatprep.subr.bf16.mxu0 0
      %2159 = vmatpush2.bf16.msra.mxu0 0
      %2160 = vmatprep.subr.bf16.mxu0 0
      %2161 = vmatpush2.bf16.msra.mxu0 0
      %2162 = vmatprep.subr.bf16.mxu0 0
      %2163 = vmatpush2.bf16.msra.mxu0 0
      %2164 = vmatprep.subr.bf16.mxu0 0
      %2165 = vmatpush2.bf16.msra.mxu0 0
      %2166 = vmatprep.subr.bf16.mxu0 0
      %2167 = vmatpush2.bf16.msra.mxu0 0
      %2168 = vmatprep.mubr.bf16.mxu0 0
      %2169 = vmatmul.mubr.bf16.gmra.mxu0 %v2119
      %v2170 = vpop.f32.mrf.mxu0
      %v2171 = vadd.f32 0.0, %v2170
      %v2172 = vpop.f32.mrf.mxu0
      %v2173 = vadd.f32 0.0, %v2172
      %v2174 = vpop.f32.mrf.mxu0
      %v2175 = vpop.f32.mrf.mxu0
      %2176 = vdwg.mxu0
      %2177 = vmatprep.subr.bf16.mxu0 0
      %2178 = vmatpush1.bf16.msra.mxu0 0
      %2179 = vmatprep.subr.bf16.mxu0 0
      %2180 = vmatpush1.bf16.msra.mxu0 0
      %2181 = vmatprep.subr.bf16.mxu0 0
      %2182 = vmatpush1.bf16.msra.mxu0 0
      %2183 = vmatprep.subr.bf16.mxu0 0
      %2184 = vmatpush1.bf16.msra.mxu0 0
      %2185 = vmatprep.subr.bf16.mxu0 0
      %2186 = vmatpush1.bf16.msra.mxu0 0
      %2187 = vmatprep.subr.bf16.mxu0 0
      %2188 = vmatpush1.bf16.msra.mxu0 0
      %2189 = vmatprep.subr.bf16.mxu0 0
      %2190 = vmatpush1.bf16.msra.mxu0 0
      %2191 = vmatprep.subr.bf16.mxu0 %v2131
      %2192 = vmatpush1.bf16.msra.mxu0 %v2128
      %2193 = vmatprep.subr.bf16.mxu0 0
      %2194 = vmatpush2.bf16.msra.mxu0 0
      %2195 = vmatprep.subr.bf16.mxu0 0
      %2196 = vmatpush2.bf16.msra.mxu0 0
      %2197 = vmatprep.subr.bf16.mxu0 0
      %2198 = vmatpush2.bf16.msra.mxu0 0
      %2199 = vmatprep.subr.bf16.mxu0 0
      %2200 = vmatpush2.bf16.msra.mxu0 0
      %2201 = vmatprep.subr.bf16.mxu0 0
      %2202 = vmatpush2.bf16.msra.mxu0 0
      %2203 = vmatprep.subr.bf16.mxu0 0
      %2204 = vmatpush2.bf16.msra.mxu0 0
      %2205 = vmatprep.subr.bf16.mxu0 0
      %2206 = vmatpush2.bf16.msra.mxu0 0
      %2207 = vmatprep.subr.bf16.mxu0 0
      %2208 = vmatpush2.bf16.msra.mxu0 0
      %2209 = vmatprep.mubr.bf16.mxu0 0
      %2210 = vmatmul.mubr.bf16.gmra.mxu0 %v2119
      %v2211 = vpop.f32.mrf.mxu0
      %v2212 = vadd.f32 0.0, %v2211
      %v2213 = vpop.f32.mrf.mxu0
      %v2214 = vadd.f32 0.0, %v2213
      %v2215 = vpop.f32.mrf.mxu0
      %v2216 = vpop.f32.mrf.mxu0
      %2217 = vdwg.mxu0
      %2218 = vmatprep.subr.bf16.mxu0 0
      %2219 = vmatpush1.bf16.msra.mxu0 0
      %2220 = vmatprep.subr.bf16.mxu0 0
      %2221 = vmatpush1.bf16.msra.mxu0 0
      %2222 = vmatprep.subr.bf16.mxu0 0
      %2223 = vmatpush1.bf16.msra.mxu0 0
      %2224 = vmatprep.subr.bf16.mxu0 0
      %2225 = vmatpush1.bf16.msra.mxu0 0
      %2226 = vmatprep.subr.bf16.mxu0 0
      %2227 = vmatpush1.bf16.msra.mxu0 0
      %2228 = vmatprep.subr.bf16.mxu0 0
      %2229 = vmatpush1.bf16.msra.mxu0 0
      %2230 = vmatprep.subr.bf16.mxu0 0
      %2231 = vmatpush1.bf16.msra.mxu0 0
      %2232 = vmatprep.subr.bf16.mxu0 0
      %2233 = vmatpush1.bf16.msra.mxu0 %v2134
      %2234 = vmatprep.subr.bf16.mxu0 0
      %2235 = vmatpush2.bf16.msra.mxu0 0
      %2236 = vmatprep.subr.bf16.mxu0 0
      %2237 = vmatpush2.bf16.msra.mxu0 0
      %2238 = vmatprep.subr.bf16.mxu0 0
      %2239 = vmatpush2.bf16.msra.mxu0 0
      %2240 = vmatprep.subr.bf16.mxu0 0
      %2241 = vmatpush2.bf16.msra.mxu0 0
      %2242 = vmatprep.subr.bf16.mxu0 0
      %2243 = vmatpush2.bf16.msra.mxu0 0
      %2244 = vmatprep.subr.bf16.mxu0 0
      %2245 = vmatpush2.bf16.msra.mxu0 0
      %2246 = vmatprep.subr.bf16.mxu0 0
      %2247 = vmatpush2.bf16.msra.mxu0 0
      %2248 = vmatprep.subr.bf16.mxu0 0
      %2249 = vmatpush2.bf16.msra.mxu0 0
      %2250 = vmatprep.mubr.bf16.mxu0 0
      %2251 = vmatmul.mubr.bf16.gmra.mxu0 %v2119
      %v2252 = vpop.f32.mrf.mxu0
      %v2253 = vadd.f32 0.0, %v2252
      %v2254 = vpop.f32.mrf.mxu0
      %v2255 = vpop.f32.mrf.mxu0
      %v2256 = vpop.f32.mrf.mxu0
      %2257 = vdwg.mxu0
      %v2258 = vadd.f32 %v2093, %v2171
      %v2259 = vadd.f32 %v2094, %v2173
      %v2260 = vadd.f32 %v2095, %v2212
      %v2261 = vadd.f32 %v2096, %v2214
      %v2262 = vadd.f32 %v2097, %v2253
      %s2263 = scalar_lea.vmem %s0, 48
      %v2264 = vld [vmem:[%s2263] sm:$0xf]
      %2265 = vrot.lane.b32.xlu0 %v294, 23
      %v2266 = vpop.permute.xlu0 %2265
      %2267 = vrot.lane.b32.xlu0 %v295, 23
      %v2268 = vpop.permute.xlu0 %2267
      %2269 = vrot.lane.b32.xlu0 %v296, 23
      %v2270 = vpop.permute.xlu0 %2269
      %2271 = vrot.lane.b32.xlu0 %v297, 23
      %v2272 = vpop.permute.xlu0 %2271
      %2273 = vrot.lane.b32.xlu0 %v298, 23
      %v2274 = vpop.permute.xlu0 %2273
      %2275 = vrot.lane.b32.xlu0 %v449, 23
      %v2276 = vpop.permute.xlu0 %2275
      %vm2277 = vcmask 187392
      %v2278 = vsel %vm2277, %v2266, %v2268
      %v2279 = vsel %vm2277, %v2268, %v2270
      %v2280 = vsel %vm2277, %v2270, %v2272
      %v2281 = vsel %vm2277, %v2272, %v2274
      %v2282 = vsel %vm2277, %v2274, %v2276
      %v2284 = vsel %vm299, %v2264, 0
      %v2287 = vsel %vm303, %v2278, 0
      %v2290 = vsel %vm303, %v2279, 0
      %v2293 = vsel %vm303, %v2280, 0
      %v2296 = vsel %vm303, %v2281, 0
      %v2299 = vsel %vm303, %v2282, 0
      %2301 = vmatprep.subr.bf16.mxu0 0
      %2302 = vmatpush1.bf16.msra.mxu0 0
      %2303 = vmatprep.subr.bf16.mxu0 0
      %2304 = vmatpush1.bf16.msra.mxu0 0
      %2305 = vmatprep.subr.bf16.mxu0 0
      %2306 = vmatpush1.bf16.msra.mxu0 0
      %2307 = vmatprep.subr.bf16.mxu0 0
      %2308 = vmatpush1.bf16.msra.mxu0 0
      %2309 = vmatprep.subr.bf16.mxu0 0
      %2310 = vmatpush1.bf16.msra.mxu0 0
      %2311 = vmatprep.subr.bf16.mxu0 0
      %2312 = vmatpush1.bf16.msra.mxu0 0
      %2313 = vmatprep.subr.bf16.mxu0 0
      %2314 = vmatpush1.bf16.msra.mxu0 0
      %2315 = vmatprep.subr.bf16.mxu0 %v2290
      %2316 = vmatpush1.bf16.msra.mxu0 %v2287
      %2317 = vmatprep.subr.bf16.mxu0 0
      %2318 = vmatpush2.bf16.msra.mxu0 0
      %2319 = vmatprep.subr.bf16.mxu0 0
      %2320 = vmatpush2.bf16.msra.mxu0 0
      %2321 = vmatprep.subr.bf16.mxu0 0
      %2322 = vmatpush2.bf16.msra.mxu0 0
      %2323 = vmatprep.subr.bf16.mxu0 0
      %2324 = vmatpush2.bf16.msra.mxu0 0
      %2325 = vmatprep.subr.bf16.mxu0 0
      %2326 = vmatpush2.bf16.msra.mxu0 0
      %2327 = vmatprep.subr.bf16.mxu0 0
      %2328 = vmatpush2.bf16.msra.mxu0 0
      %2329 = vmatprep.subr.bf16.mxu0 0
      %2330 = vmatpush2.bf16.msra.mxu0 0
      %2331 = vmatprep.subr.bf16.mxu0 0
      %2332 = vmatpush2.bf16.msra.mxu0 0
      %2333 = vmatprep.mubr.bf16.mxu0 0
      %2334 = vmatmul.mubr.bf16.gmra.mxu0 %v2284
      %v2335 = vpop.f32.mrf.mxu0
      %v2336 = vadd.f32 0.0, %v2335
      %v2337 = vpop.f32.mrf.mxu0
      %v2338 = vadd.f32 0.0, %v2337
      %v2339 = vpop.f32.mrf.mxu0
      %v2340 = vpop.f32.mrf.mxu0
      %2341 = vdwg.mxu0
      %2342 = vmatprep.subr.bf16.mxu0 0
      %2343 = vmatpush1.bf16.msra.mxu0 0
      %2344 = vmatprep.subr.bf16.mxu0 0
      %2345 = vmatpush1.bf16.msra.mxu0 0
      %2346 = vmatprep.subr.bf16.mxu0 0
      %2347 = vmatpush1.bf16.msra.mxu0 0
      %2348 = vmatprep.subr.bf16.mxu0 0
      %2349 = vmatpush1.bf16.msra.mxu0 0
      %2350 = vmatprep.subr.bf16.mxu0 0
      %2351 = vmatpush1.bf16.msra.mxu0 0
      %2352 = vmatprep.subr.bf16.mxu0 0
      %2353 = vmatpush1.bf16.msra.mxu0 0
      %2354 = vmatprep.subr.bf16.mxu0 0
      %2355 = vmatpush1.bf16.msra.mxu0 0
      %2356 = vmatprep.subr.bf16.mxu0 %v2296
      %2357 = vmatpush1.bf16.msra.mxu0 %v2293
      %2358 = vmatprep.subr.bf16.mxu0 0
      %2359 = vmatpush2.bf16.msra.mxu0 0
      %2360 = vmatprep.subr.bf16.mxu0 0
      %2361 = vmatpush2.bf16.msra.mxu0 0
      %2362 = vmatprep.subr.bf16.mxu0 0
      %2363 = vmatpush2.bf16.msra.mxu0 0
      %2364 = vmatprep.subr.bf16.mxu0 0
      %2365 = vmatpush2.bf16.msra.mxu0 0
      %2366 = vmatprep.subr.bf16.mxu0 0
      %2367 = vmatpush2.bf16.msra.mxu0 0
      %2368 = vmatprep.subr.bf16.mxu0 0
      %2369 = vmatpush2.bf16.msra.mxu0 0
      %2370 = vmatprep.subr.bf16.mxu0 0
      %2371 = vmatpush2.bf16.msra.mxu0 0
      %2372 = vmatprep.subr.bf16.mxu0 0
      %2373 = vmatpush2.bf16.msra.mxu0 0
      %2374 = vmatprep.mubr.bf16.mxu0 0
      %2375 = vmatmul.mubr.bf16.gmra.mxu0 %v2284
      %v2376 = vpop.f32.mrf.mxu0
      %v2377 = vadd.f32 0.0, %v2376
      %v2378 = vpop.f32.mrf.mxu0
      %v2379 = vadd.f32 0.0, %v2378
      %v2380 = vpop.f32.mrf.mxu0
      %v2381 = vpop.f32.mrf.mxu0
      %2382 = vdwg.mxu0
      %2383 = vmatprep.subr.bf16.mxu0 0
      %2384 = vmatpush1.bf16.msra.mxu0 0
      %2385 = vmatprep.subr.bf16.mxu0 0
      %2386 = vmatpush1.bf16.msra.mxu0 0
      %2387 = vmatprep.subr.bf16.mxu0 0
      %2388 = vmatpush1.bf16.msra.mxu0 0
      %2389 = vmatprep.subr.bf16.mxu0 0
      %2390 = vmatpush1.bf16.msra.mxu0 0
      %2391 = vmatprep.subr.bf16.mxu0 0
      %2392 = vmatpush1.bf16.msra.mxu0 0
      %2393 = vmatprep.subr.bf16.mxu0 0
      %2394 = vmatpush1.bf16.msra.mxu0 0
      %2395 = vmatprep.subr.bf16.mxu0 0
      %2396 = vmatpush1.bf16.msra.mxu0 0
      %2397 = vmatprep.subr.bf16.mxu0 0
      %2398 = vmatpush1.bf16.msra.mxu0 %v2299
      %2399 = vmatprep.subr.bf16.mxu0 0
      %2400 = vmatpush2.bf16.msra.mxu0 0
      %2401 = vmatprep.subr.bf16.mxu0 0
      %2402 = vmatpush2.bf16.msra.mxu0 0
      %2403 = vmatprep.subr.bf16.mxu0 0
      %2404 = vmatpush2.bf16.msra.mxu0 0
      %2405 = vmatprep.subr.bf16.mxu0 0
      %2406 = vmatpush2.bf16.msra.mxu0 0
      %2407 = vmatprep.subr.bf16.mxu0 0
      %2408 = vmatpush2.bf16.msra.mxu0 0
      %2409 = vmatprep.subr.bf16.mxu0 0
      %2410 = vmatpush2.bf16.msra.mxu0 0
      %2411 = vmatprep.subr.bf16.mxu0 0
      %2412 = vmatpush2.bf16.msra.mxu0 0
      %2413 = vmatprep.subr.bf16.mxu0 0
      %2414 = vmatpush2.bf16.msra.mxu0 0
      %2415 = vmatprep.mubr.bf16.mxu0 0
      %2416 = vmatmul.mubr.bf16.gmra.mxu0 %v2284
      %v2417 = vpop.f32.mrf.mxu0
      %v2418 = vadd.f32 0.0, %v2417
      %v2419 = vpop.f32.mrf.mxu0
      %v2420 = vpop.f32.mrf.mxu0
      %v2421 = vpop.f32.mrf.mxu0
      %2422 = vdwg.mxu0
      %v2423 = vadd.f32 %v2258, %v2336
      %v2424 = vadd.f32 %v2259, %v2338
      %v2425 = vadd.f32 %v2260, %v2377
      %v2426 = vadd.f32 %v2261, %v2379
      %v2427 = vadd.f32 %v2262, %v2418
      %s2428 = scalar_lea.vmem %s0, 52
      %v2429 = vld [vmem:[%s2428] sm:$0xf]
      %2430 = vrot.lane.b32.xlu0 %v294, 22
      %v2431 = vpop.permute.xlu0 %2430
      %2432 = vrot.lane.b32.xlu0 %v295, 22
      %v2433 = vpop.permute.xlu0 %2432
      %2434 = vrot.lane.b32.xlu0 %v296, 22
      %v2435 = vpop.permute.xlu0 %2434
      %2436 = vrot.lane.b32.xlu0 %v297, 22
      %v2437 = vpop.permute.xlu0 %2436
      %2438 = vrot.lane.b32.xlu0 %v298, 22
      %v2439 = vpop.permute.xlu0 %2438
      %2440 = vrot.lane.b32.xlu0 %v449, 22
      %v2441 = vpop.permute.xlu0 %2440
      %vm2442 = vcmask 179200
      %v2443 = vsel %vm2442, %v2431, %v2433
      %v2444 = vsel %vm2442, %v2433, %v2435
      %v2445 = vsel %vm2442, %v2435, %v2437
      %v2446 = vsel %vm2442, %v2437, %v2439
      %v2447 = vsel %vm2442, %v2439, %v2441
      %v2449 = vsel %vm299, %v2429, 0
      %v2452 = vsel %vm303, %v2443, 0
      %v2455 = vsel %vm303, %v2444, 0
      %v2458 = vsel %vm303, %v2445, 0
      %v2461 = vsel %vm303, %v2446, 0
      %v2464 = vsel %vm303, %v2447, 0
      %2466 = vmatprep.subr.bf16.mxu0 0
      %2467 = vmatpush1.bf16.msra.mxu0 0
      %2468 = vmatprep.subr.bf16.mxu0 0
      %2469 = vmatpush1.bf16.msra.mxu0 0
      %2470 = vmatprep.subr.bf16.mxu0 0
      %2471 = vmatpush1.bf16.msra.mxu0 0
      %2472 = vmatprep.subr.bf16.mxu0 0
      %2473 = vmatpush1.bf16.msra.mxu0 0
      %2474 = vmatprep.subr.bf16.mxu0 0
      %2475 = vmatpush1.bf16.msra.mxu0 0
      %2476 = vmatprep.subr.bf16.mxu0 0
      %2477 = vmatpush1.bf16.msra.mxu0 0
      %2478 = vmatprep.subr.bf16.mxu0 0
      %2479 = vmatpush1.bf16.msra.mxu0 0
      %2480 = vmatprep.subr.bf16.mxu0 %v2455
      %2481 = vmatpush1.bf16.msra.mxu0 %v2452
      %2482 = vmatprep.subr.bf16.mxu0 0
      %2483 = vmatpush2.bf16.msra.mxu0 0
      %2484 = vmatprep.subr.bf16.mxu0 0
      %2485 = vmatpush2.bf16.msra.mxu0 0
      %2486 = vmatprep.subr.bf16.mxu0 0
      %2487 = vmatpush2.bf16.msra.mxu0 0
      %2488 = vmatprep.subr.bf16.mxu0 0
      %2489 = vmatpush2.bf16.msra.mxu0 0
      %2490 = vmatprep.subr.bf16.mxu0 0
      %2491 = vmatpush2.bf16.msra.mxu0 0
      %2492 = vmatprep.subr.bf16.mxu0 0
      %2493 = vmatpush2.bf16.msra.mxu0 0
      %2494 = vmatprep.subr.bf16.mxu0 0
      %2495 = vmatpush2.bf16.msra.mxu0 0
      %2496 = vmatprep.subr.bf16.mxu0 0
      %2497 = vmatpush2.bf16.msra.mxu0 0
      %2498 = vmatprep.mubr.bf16.mxu0 0
      %2499 = vmatmul.mubr.bf16.gmra.mxu0 %v2449
      %v2500 = vpop.f32.mrf.mxu0
      %v2501 = vadd.f32 0.0, %v2500
      %v2502 = vpop.f32.mrf.mxu0
      %v2503 = vadd.f32 0.0, %v2502
      %v2504 = vpop.f32.mrf.mxu0
      %v2505 = vpop.f32.mrf.mxu0
      %2506 = vdwg.mxu0
      %2507 = vmatprep.subr.bf16.mxu0 0
      %2508 = vmatpush1.bf16.msra.mxu0 0
      %2509 = vmatprep.subr.bf16.mxu0 0
      %2510 = vmatpush1.bf16.msra.mxu0 0
      %2511 = vmatprep.subr.bf16.mxu0 0
      %2512 = vmatpush1.bf16.msra.mxu0 0
      %2513 = vmatprep.subr.bf16.mxu0 0
      %2514 = vmatpush1.bf16.msra.mxu0 0
      %2515 = vmatprep.subr.bf16.mxu0 0
      %2516 = vmatpush1.bf16.msra.mxu0 0
      %2517 = vmatprep.subr.bf16.mxu0 0
      %2518 = vmatpush1.bf16.msra.mxu0 0
      %2519 = vmatprep.subr.bf16.mxu0 0
      %2520 = vmatpush1.bf16.msra.mxu0 0
      %2521 = vmatprep.subr.bf16.mxu0 %v2461
      %2522 = vmatpush1.bf16.msra.mxu0 %v2458
      %2523 = vmatprep.subr.bf16.mxu0 0
      %2524 = vmatpush2.bf16.msra.mxu0 0
      %2525 = vmatprep.subr.bf16.mxu0 0
      %2526 = vmatpush2.bf16.msra.mxu0 0
      %2527 = vmatprep.subr.bf16.mxu0 0
      %2528 = vmatpush2.bf16.msra.mxu0 0
      %2529 = vmatprep.subr.bf16.mxu0 0
      %2530 = vmatpush2.bf16.msra.mxu0 0
      %2531 = vmatprep.subr.bf16.mxu0 0
      %2532 = vmatpush2.bf16.msra.mxu0 0
      %2533 = vmatprep.subr.bf16.mxu0 0
      %2534 = vmatpush2.bf16.msra.mxu0 0
      %2535 = vmatprep.subr.bf16.mxu0 0
      %2536 = vmatpush2.bf16.msra.mxu0 0
      %2537 = vmatprep.subr.bf16.mxu0 0
      %2538 = vmatpush2.bf16.msra.mxu0 0
      %2539 = vmatprep.mubr.bf16.mxu0 0
      %2540 = vmatmul.mubr.bf16.gmra.mxu0 %v2449
      %v2541 = vpop.f32.mrf.mxu0
      %v2542 = vadd.f32 0.0, %v2541
      %v2543 = vpop.f32.mrf.mxu0
      %v2544 = vadd.f32 0.0, %v2543
      %v2545 = vpop.f32.mrf.mxu0
      %v2546 = vpop.f32.mrf.mxu0
      %2547 = vdwg.mxu0
      %2548 = vmatprep.subr.bf16.mxu0 0
      %2549 = vmatpush1.bf16.msra.mxu0 0
      %2550 = vmatprep.subr.bf16.mxu0 0
      %2551 = vmatpush1.bf16.msra.mxu0 0
      %2552 = vmatprep.subr.bf16.mxu0 0
      %2553 = vmatpush1.bf16.msra.mxu0 0
      %2554 = vmatprep.subr.bf16.mxu0 0
      %2555 = vmatpush1.bf16.msra.mxu0 0
      %2556 = vmatprep.subr.bf16.mxu0 0
      %2557 = vmatpush1.bf16.msra.mxu0 0
      %2558 = vmatprep.subr.bf16.mxu0 0
      %2559 = vmatpush1.bf16.msra.mxu0 0
      %2560 = vmatprep.subr.bf16.mxu0 0
      %2561 = vmatpush1.bf16.msra.mxu0 0
      %2562 = vmatprep.subr.bf16.mxu0 0
      %2563 = vmatpush1.bf16.msra.mxu0 %v2464
      %2564 = vmatprep.subr.bf16.mxu0 0
      %2565 = vmatpush2.bf16.msra.mxu0 0
      %2566 = vmatprep.subr.bf16.mxu0 0
      %2567 = vmatpush2.bf16.msra.mxu0 0
      %2568 = vmatprep.subr.bf16.mxu0 0
      %2569 = vmatpush2.bf16.msra.mxu0 0
      %2570 = vmatprep.subr.bf16.mxu0 0
      %2571 = vmatpush2.bf16.msra.mxu0 0
      %2572 = vmatprep.subr.bf16.mxu0 0
      %2573 = vmatpush2.bf16.msra.mxu0 0
      %2574 = vmatprep.subr.bf16.mxu0 0
      %2575 = vmatpush2.bf16.msra.mxu0 0
      %2576 = vmatprep.subr.bf16.mxu0 0
      %2577 = vmatpush2.bf16.msra.mxu0 0
      %2578 = vmatprep.subr.bf16.mxu0 0
      %2579 = vmatpush2.bf16.msra.mxu0 0
      %2580 = vmatprep.mubr.bf16.mxu0 0
      %2581 = vmatmul.mubr.bf16.gmra.mxu0 %v2449
      %v2582 = vpop.f32.mrf.mxu0
      %v2583 = vadd.f32 0.0, %v2582
      %v2584 = vpop.f32.mrf.mxu0
      %v2585 = vpop.f32.mrf.mxu0
      %v2586 = vpop.f32.mrf.mxu0
      %2587 = vdwg.mxu0
      %v2588 = vadd.f32 %v2423, %v2501
      %v2589 = vadd.f32 %v2424, %v2503
      %v2590 = vadd.f32 %v2425, %v2542
      %v2591 = vadd.f32 %v2426, %v2544
      %v2592 = vadd.f32 %v2427, %v2583
      %s2593 = scalar_lea.vmem %s0, 56
      %v2594 = vld [vmem:[%s2593] sm:$0xf]
      %2595 = vrot.lane.b32.xlu0 %v294, 21
      %v2596 = vpop.permute.xlu0 %2595
      %2597 = vrot.lane.b32.xlu0 %v295, 21
      %v2598 = vpop.permute.xlu0 %2597
      %2599 = vrot.lane.b32.xlu0 %v296, 21
      %v2600 = vpop.permute.xlu0 %2599
      %2601 = vrot.lane.b32.xlu0 %v297, 21
      %v2602 = vpop.permute.xlu0 %2601
      %2603 = vrot.lane.b32.xlu0 %v298, 21
      %v2604 = vpop.permute.xlu0 %2603
      %2605 = vrot.lane.b32.xlu0 %v449, 21
      %v2606 = vpop.permute.xlu0 %2605
      %vm2607 = vcmask 171008
      %v2608 = vsel %vm2607, %v2596, %v2598
      %v2609 = vsel %vm2607, %v2598, %v2600
      %v2610 = vsel %vm2607, %v2600, %v2602
      %v2611 = vsel %vm2607, %v2602, %v2604
      %v2612 = vsel %vm2607, %v2604, %v2606
      %v2614 = vsel %vm299, %v2594, 0
      %v2617 = vsel %vm303, %v2608, 0
      %v2620 = vsel %vm303, %v2609, 0
      %v2623 = vsel %vm303, %v2610, 0
      %v2626 = vsel %vm303, %v2611, 0
      %v2629 = vsel %vm303, %v2612, 0
      %2631 = vmatprep.subr.bf16.mxu0 0
      %2632 = vmatpush1.bf16.msra.mxu0 0
      %2633 = vmatprep.subr.bf16.mxu0 0
      %2634 = vmatpush1.bf16.msra.mxu0 0
      %2635 = vmatprep.subr.bf16.mxu0 0
      %2636 = vmatpush1.bf16.msra.mxu0 0
      %2637 = vmatprep.subr.bf16.mxu0 0
      %2638 = vmatpush1.bf16.msra.mxu0 0
      %2639 = vmatprep.subr.bf16.mxu0 0
      %2640 = vmatpush1.bf16.msra.mxu0 0
      %2641 = vmatprep.subr.bf16.mxu0 0
      %2642 = vmatpush1.bf16.msra.mxu0 0
      %2643 = vmatprep.subr.bf16.mxu0 0
      %2644 = vmatpush1.bf16.msra.mxu0 0
      %2645 = vmatprep.subr.bf16.mxu0 %v2620
      %2646 = vmatpush1.bf16.msra.mxu0 %v2617
      %2647 = vmatprep.subr.bf16.mxu0 0
      %2648 = vmatpush2.bf16.msra.mxu0 0
      %2649 = vmatprep.subr.bf16.mxu0 0
      %2650 = vmatpush2.bf16.msra.mxu0 0
      %2651 = vmatprep.subr.bf16.mxu0 0
      %2652 = vmatpush2.bf16.msra.mxu0 0
      %2653 = vmatprep.subr.bf16.mxu0 0
      %2654 = vmatpush2.bf16.msra.mxu0 0
      %2655 = vmatprep.subr.bf16.mxu0 0
      %2656 = vmatpush2.bf16.msra.mxu0 0
      %2657 = vmatprep.subr.bf16.mxu0 0
      %2658 = vmatpush2.bf16.msra.mxu0 0
      %2659 = vmatprep.subr.bf16.mxu0 0
      %2660 = vmatpush2.bf16.msra.mxu0 0
      %2661 = vmatprep.subr.bf16.mxu0 0
      %2662 = vmatpush2.bf16.msra.mxu0 0
      %2663 = vmatprep.mubr.bf16.mxu0 0
      %2664 = vmatmul.mubr.bf16.gmra.mxu0 %v2614
      %v2665 = vpop.f32.mrf.mxu0
      %v2666 = vadd.f32 0.0, %v2665
      %v2667 = vpop.f32.mrf.mxu0
      %v2668 = vadd.f32 0.0, %v2667
      %v2669 = vpop.f32.mrf.mxu0
      %v2670 = vpop.f32.mrf.mxu0
      %2671 = vdwg.mxu0
      %2672 = vmatprep.subr.bf16.mxu0 0
      %2673 = vmatpush1.bf16.msra.mxu0 0
      %2674 = vmatprep.subr.bf16.mxu0 0
      %2675 = vmatpush1.bf16.msra.mxu0 0
      %2676 = vmatprep.subr.bf16.mxu0 0
      %2677 = vmatpush1.bf16.msra.mxu0 0
      %2678 = vmatprep.subr.bf16.mxu0 0
      %2679 = vmatpush1.bf16.msra.mxu0 0
      %2680 = vmatprep.subr.bf16.mxu0 0
      %2681 = vmatpush1.bf16.msra.mxu0 0
      %2682 = vmatprep.subr.bf16.mxu0 0
      %2683 = vmatpush1.bf16.msra.mxu0 0
      %2684 = vmatprep.subr.bf16.mxu0 0
      %2685 = vmatpush1.bf16.msra.mxu0 0
      %2686 = vmatprep.subr.bf16.mxu0 %v2626
      %2687 = vmatpush1.bf16.msra.mxu0 %v2623
      %2688 = vmatprep.subr.bf16.mxu0 0
      %2689 = vmatpush2.bf16.msra.mxu0 0
      %2690 = vmatprep.subr.bf16.mxu0 0
      %2691 = vmatpush2.bf16.msra.mxu0 0
      %2692 = vmatprep.subr.bf16.mxu0 0
      %2693 = vmatpush2.bf16.msra.mxu0 0
      %2694 = vmatprep.subr.bf16.mxu0 0
      %2695 = vmatpush2.bf16.msra.mxu0 0
      %2696 = vmatprep.subr.bf16.mxu0 0
      %2697 = vmatpush2.bf16.msra.mxu0 0
      %2698 = vmatprep.subr.bf16.mxu0 0
      %2699 = vmatpush2.bf16.msra.mxu0 0
      %2700 = vmatprep.subr.bf16.mxu0 0
      %2701 = vmatpush2.bf16.msra.mxu0 0
      %2702 = vmatprep.subr.bf16.mxu0 0
      %2703 = vmatpush2.bf16.msra.mxu0 0
      %2704 = vmatprep.mubr.bf16.mxu0 0
      %2705 = vmatmul.mubr.bf16.gmra.mxu0 %v2614
      %v2706 = vpop.f32.mrf.mxu0
      %v2707 = vadd.f32 0.0, %v2706
      %v2708 = vpop.f32.mrf.mxu0
      %v2709 = vadd.f32 0.0, %v2708
      %v2710 = vpop.f32.mrf.mxu0
      %v2711 = vpop.f32.mrf.mxu0
      %2712 = vdwg.mxu0
      %2713 = vmatprep.subr.bf16.mxu0 0
      %2714 = vmatpush1.bf16.msra.mxu0 0
      %2715 = vmatprep.subr.bf16.mxu0 0
      %2716 = vmatpush1.bf16.msra.mxu0 0
      %2717 = vmatprep.subr.bf16.mxu0 0
      %2718 = vmatpush1.bf16.msra.mxu0 0
      %2719 = vmatprep.subr.bf16.mxu0 0
      %2720 = vmatpush1.bf16.msra.mxu0 0
      %2721 = vmatprep.subr.bf16.mxu0 0
      %2722 = vmatpush1.bf16.msra.mxu0 0
      %2723 = vmatprep.subr.bf16.mxu0 0
      %2724 = vmatpush1.bf16.msra.mxu0 0
      %2725 = vmatprep.subr.bf16.mxu0 0
      %2726 = vmatpush1.bf16.msra.mxu0 0
      %2727 = vmatprep.subr.bf16.mxu0 0
      %2728 = vmatpush1.bf16.msra.mxu0 %v2629
      %2729 = vmatprep.subr.bf16.mxu0 0
      %2730 = vmatpush2.bf16.msra.mxu0 0
      %2731 = vmatprep.subr.bf16.mxu0 0
      %2732 = vmatpush2.bf16.msra.mxu0 0
      %2733 = vmatprep.subr.bf16.mxu0 0
      %2734 = vmatpush2.bf16.msra.mxu0 0
      %2735 = vmatprep.subr.bf16.mxu0 0
      %2736 = vmatpush2.bf16.msra.mxu0 0
      %2737 = vmatprep.subr.bf16.mxu0 0
      %2738 = vmatpush2.bf16.msra.mxu0 0
      %2739 = vmatprep.subr.bf16.mxu0 0
      %2740 = vmatpush2.bf16.msra.mxu0 0
      %2741 = vmatprep.subr.bf16.mxu0 0
      %2742 = vmatpush2.bf16.msra.mxu0 0
      %2743 = vmatprep.subr.bf16.mxu0 0
      %2744 = vmatpush2.bf16.msra.mxu0 0
      %2745 = vmatprep.mubr.bf16.mxu0 0
      %2746 = vmatmul.mubr.bf16.gmra.mxu0 %v2614
      %v2747 = vpop.f32.mrf.mxu0
      %v2748 = vadd.f32 0.0, %v2747
      %v2749 = vpop.f32.mrf.mxu0
      %v2750 = vpop.f32.mrf.mxu0
      %v2751 = vpop.f32.mrf.mxu0
      %2752 = vdwg.mxu0
      %v2753 = vadd.f32 %v2588, %v2666
      %v2754 = vadd.f32 %v2589, %v2668
      %v2755 = vadd.f32 %v2590, %v2707
      %v2756 = vadd.f32 %v2591, %v2709
      %v2757 = vadd.f32 %v2592, %v2748
      %s2758 = scalar_lea.vmem %s0, 60
      %v2759 = vld [vmem:[%s2758] sm:$0xf]
      %2760 = vrot.lane.b32.xlu0 %v294, 20
      %v2761 = vpop.permute.xlu0 %2760
      %2762 = vrot.lane.b32.xlu0 %v295, 20
      %v2763 = vpop.permute.xlu0 %2762
      %2764 = vrot.lane.b32.xlu0 %v296, 20
      %v2765 = vpop.permute.xlu0 %2764
      %2766 = vrot.lane.b32.xlu0 %v297, 20
      %v2767 = vpop.permute.xlu0 %2766
      %2768 = vrot.lane.b32.xlu0 %v298, 20
      %v2769 = vpop.permute.xlu0 %2768
      %2770 = vrot.lane.b32.xlu0 %v449, 20
      %v2771 = vpop.permute.xlu0 %2770
      %vm2772 = vcmask 162816
      %v2773 = vsel %vm2772, %v2761, %v2763
      %v2774 = vsel %vm2772, %v2763, %v2765
      %v2775 = vsel %vm2772, %v2765, %v2767
      %v2776 = vsel %vm2772, %v2767, %v2769
      %v2777 = vsel %vm2772, %v2769, %v2771
      %v2779 = vsel %vm299, %v2759, 0
      %v2782 = vsel %vm303, %v2773, 0
      %v2785 = vsel %vm303, %v2774, 0
      %v2788 = vsel %vm303, %v2775, 0
      %v2791 = vsel %vm303, %v2776, 0
      %v2794 = vsel %vm303, %v2777, 0
      %2796 = vmatprep.subr.bf16.mxu0 0
      %2797 = vmatpush1.bf16.msra.mxu0 0
      %2798 = vmatprep.subr.bf16.mxu0 0
      %2799 = vmatpush1.bf16.msra.mxu0 0
      %2800 = vmatprep.subr.bf16.mxu0 0
      %2801 = vmatpush1.bf16.msra.mxu0 0
      %2802 = vmatprep.subr.bf16.mxu0 0
      %2803 = vmatpush1.bf16.msra.mxu0 0
      %2804 = vmatprep.subr.bf16.mxu0 0
      %2805 = vmatpush1.bf16.msra.mxu0 0
      %2806 = vmatprep.subr.bf16.mxu0 0
      %2807 = vmatpush1.bf16.msra.mxu0 0
      %2808 = vmatprep.subr.bf16.mxu0 0
      %2809 = vmatpush1.bf16.msra.mxu0 0
      %2810 = vmatprep.subr.bf16.mxu0 %v2785
      %2811 = vmatpush1.bf16.msra.mxu0 %v2782
      %2812 = vmatprep.subr.bf16.mxu0 0
      %2813 = vmatpush2.bf16.msra.mxu0 0
      %2814 = vmatprep.subr.bf16.mxu0 0
      %2815 = vmatpush2.bf16.msra.mxu0 0
      %2816 = vmatprep.subr.bf16.mxu0 0
      %2817 = vmatpush2.bf16.msra.mxu0 0
      %2818 = vmatprep.subr.bf16.mxu0 0
      %2819 = vmatpush2.bf16.msra.mxu0 0
      %2820 = vmatprep.subr.bf16.mxu0 0
      %2821 = vmatpush2.bf16.msra.mxu0 0
      %2822 = vmatprep.subr.bf16.mxu0 0
      %2823 = vmatpush2.bf16.msra.mxu0 0
      %2824 = vmatprep.subr.bf16.mxu0 0
      %2825 = vmatpush2.bf16.msra.mxu0 0
      %2826 = vmatprep.subr.bf16.mxu0 0
      %2827 = vmatpush2.bf16.msra.mxu0 0
      %2828 = vmatprep.mubr.bf16.mxu0 0
      %2829 = vmatmul.mubr.bf16.gmra.mxu0 %v2779
      %v2830 = vpop.f32.mrf.mxu0
      %v2831 = vadd.f32 0.0, %v2830
      %v2832 = vpop.f32.mrf.mxu0
      %v2833 = vadd.f32 0.0, %v2832
      %v2834 = vpop.f32.mrf.mxu0
      %v2835 = vpop.f32.mrf.mxu0
      %2836 = vdwg.mxu0
      %2837 = vmatprep.subr.bf16.mxu0 0
      %2838 = vmatpush1.bf16.msra.mxu0 0
      %2839 = vmatprep.subr.bf16.mxu0 0
      %2840 = vmatpush1.bf16.msra.mxu0 0
      %2841 = vmatprep.subr.bf16.mxu0 0
      %2842 = vmatpush1.bf16.msra.mxu0 0
      %2843 = vmatprep.subr.bf16.mxu0 0
      %2844 = vmatpush1.bf16.msra.mxu0 0
      %2845 = vmatprep.subr.bf16.mxu0 0
      %2846 = vmatpush1.bf16.msra.mxu0 0
      %2847 = vmatprep.subr.bf16.mxu0 0
      %2848 = vmatpush1.bf16.msra.mxu0 0
      %2849 = vmatprep.subr.bf16.mxu0 0
      %2850 = vmatpush1.bf16.msra.mxu0 0
      %2851 = vmatprep.subr.bf16.mxu0 %v2791
      %2852 = vmatpush1.bf16.msra.mxu0 %v2788
      %2853 = vmatprep.subr.bf16.mxu0 0
      %2854 = vmatpush2.bf16.msra.mxu0 0
      %2855 = vmatprep.subr.bf16.mxu0 0
      %2856 = vmatpush2.bf16.msra.mxu0 0
      %2857 = vmatprep.subr.bf16.mxu0 0
      %2858 = vmatpush2.bf16.msra.mxu0 0
      %2859 = vmatprep.subr.bf16.mxu0 0
      %2860 = vmatpush2.bf16.msra.mxu0 0
      %2861 = vmatprep.subr.bf16.mxu0 0
      %2862 = vmatpush2.bf16.msra.mxu0 0
      %2863 = vmatprep.subr.bf16.mxu0 0
      %2864 = vmatpush2.bf16.msra.mxu0 0
      %2865 = vmatprep.subr.bf16.mxu0 0
      %2866 = vmatpush2.bf16.msra.mxu0 0
      %2867 = vmatprep.subr.bf16.mxu0 0
      %2868 = vmatpush2.bf16.msra.mxu0 0
      %2869 = vmatprep.mubr.bf16.mxu0 0
      %2870 = vmatmul.mubr.bf16.gmra.mxu0 %v2779
      %v2871 = vpop.f32.mrf.mxu0
      %v2872 = vadd.f32 0.0, %v2871
      %v2873 = vpop.f32.mrf.mxu0
      %v2874 = vadd.f32 0.0, %v2873
      %v2875 = vpop.f32.mrf.mxu0
      %v2876 = vpop.f32.mrf.mxu0
      %2877 = vdwg.mxu0
      %2878 = vmatprep.subr.bf16.mxu0 0
      %2879 = vmatpush1.bf16.msra.mxu0 0
      %2880 = vmatprep.subr.bf16.mxu0 0
      %2881 = vmatpush1.bf16.msra.mxu0 0
      %2882 = vmatprep.subr.bf16.mxu0 0
      %2883 = vmatpush1.bf16.msra.mxu0 0
      %2884 = vmatprep.subr.bf16.mxu0 0
      %2885 = vmatpush1.bf16.msra.mxu0 0
      %2886 = vmatprep.subr.bf16.mxu0 0
      %2887 = vmatpush1.bf16.msra.mxu0 0
      %2888 = vmatprep.subr.bf16.mxu0 0
      %2889 = vmatpush1.bf16.msra.mxu0 0
      %2890 = vmatprep.subr.bf16.mxu0 0
      %2891 = vmatpush1.bf16.msra.mxu0 0
      %2892 = vmatprep.subr.bf16.mxu0 0
      %2893 = vmatpush1.bf16.msra.mxu0 %v2794
      %2894 = vmatprep.subr.bf16.mxu0 0
      %2895 = vmatpush2.bf16.msra.mxu0 0
      %2896 = vmatprep.subr.bf16.mxu0 0
      %2897 = vmatpush2.bf16.msra.mxu0 0
      %2898 = vmatprep.subr.bf16.mxu0 0
      %2899 = vmatpush2.bf16.msra.mxu0 0
      %2900 = vmatprep.subr.bf16.mxu0 0
      %2901 = vmatpush2.bf16.msra.mxu0 0
      %2902 = vmatprep.subr.bf16.mxu0 0
      %2903 = vmatpush2.bf16.msra.mxu0 0
      %2904 = vmatprep.subr.bf16.mxu0 0
      %2905 = vmatpush2.bf16.msra.mxu0 0
      %2906 = vmatprep.subr.bf16.mxu0 0
      %2907 = vmatpush2.bf16.msra.mxu0 0
      %2908 = vmatprep.subr.bf16.mxu0 0
      %2909 = vmatpush2.bf16.msra.mxu0 0
      %2910 = vmatprep.mubr.bf16.mxu0 0
      %2911 = vmatmul.mubr.bf16.gmra.mxu0 %v2779
      %v2912 = vpop.f32.mrf.mxu0
      %v2913 = vadd.f32 0.0, %v2912
      %v2914 = vpop.f32.mrf.mxu0
      %v2915 = vpop.f32.mrf.mxu0
      %v2916 = vpop.f32.mrf.mxu0
      %2917 = vdwg.mxu0
      %v2918 = vadd.f32 %v2753, %v2831
      %v2919 = vadd.f32 %v2754, %v2833
      %v2920 = vadd.f32 %v2755, %v2872
      %v2921 = vadd.f32 %v2756, %v2874
      %v2922 = vadd.f32 %v2757, %v2913
      %v2923 = vmax.f32 %v2918, 0.0
      %v2924 = vmax.f32 %v2919, 0.0
      %v2925 = vmax.f32 %v2920, 0.0
      %v2926 = vmax.f32 %v2921, 0.0
      %v2927 = vmax.f32 %v2922, 0.0
      %v2928 = vmin.f32 %v2923, 6.0
      %v2929 = vmin.f32 %v2924, 6.0
      %v2930 = vmin.f32 %v2925, 6.0
      %v2931 = vmin.f32 %v2926, 6.0
      %v2932 = vmin.f32 %v2927, 6.0
      %2933 = vst [vmem:[%s255] sm:$0xff] %v2928
      %2934 = vst [vmem:[%s255 + $0x8] sm:$0xff] %v2929
      %2935 = vst [vmem:[%s255 + $0x10] sm:$0xff] %v2930
      %2936 = vst [vmem:[%s255 + $0x18] sm:$0xff] %v2931
      %2937 = vst [vmem:[%s255 + $0x20] sm:$0xff] %v2932
      %s2938 = smul.u32 5, %s20
      %p2939 = scmp.lt.s32.totalorder %s19, 1
      %s2940 = scalar_select %p2939, %s19, 1
      %p2941 = scmp.lt.s32.totalorder %s2938, 9
      %s2942 = scalar_select %p2941, %s2938, 9
      %s2943 = smul.addr %s2940, 10
      %s2944 = sadd.s32 %s2942, %s2943
      %s2945 = smul.addr %s2944, 8
      %s2946 = scalar_lea.vmem %s4, %s2945
      // Predicated region
      $region37: #{conv_transpose_add_relu6_2d.1} parent=35 // pred_check
        %p2947 = pneg %p143
      $region38: #{conv_transpose_add_relu6_2d.1} parent=35 // pred_check_branch
        %2949 = sbr.rel (%p2947) target = $region40
      $region39: #{conv_transpose_add_relu6_2d.1} parent=35 // pred_region
        %s2950 = smul.u32 5, %s20
      $region40: #{conv_transpose_add_relu6_2d.1} parent=35 // pred_fallthru
        _
    $region36: #{conv_transpose_add_relu6_2d.1} parent=5 // pred_fallthru
      _
    %p2951 = scmp.le.s32.totalorder 2, %s10
    // Predicated region
    $region41: #{conv_transpose_add_relu6_2d.1} parent=5 // pred_check
      %p2952 = pneg %p2951
    $region42: #{conv_transpose_add_relu6_2d.1} parent=5 // pred_check_branch
      %2954 = sbr.rel (%p2952) target = $region44
    $region43: #{conv_transpose_add_relu6_2d.1} parent=5 // pred_region
      %s2955 = ssub.s32 %s10, 2
      // Predicated region
      $region45: #{conv_transpose_add_relu6_2d.1} parent=43 // pred_check
        %p2956 = pneg %p149
      $region46: #{conv_transpose_add_relu6_2d.1} parent=43 // pred_check_branch
        %2958 = sbr.rel (%p2956) target = $region48
      $region47: #{conv_transpose_add_relu6_2d.1} parent=43 // pred_region
        %s2959 = smul.u32 5, %s22
        %p2960 = scmp.lt.s32.totalorder %s21, 1
        %s2961 = scalar_select %p2960, %s21, 1
        %p2962 = scmp.lt.s32.totalorder %s2959, 9
        %s2963 = scalar_select %p2962, %s2959, 9
        %s2964 = smul.addr %s2961, 10
        %s2965 = sadd.s32 %s2963, %s2964
        %s2966 = smul.addr %s2965, 8
        %s2967 = scalar_lea.vmem %s4, %s2966
      $region48: #{conv_transpose_add_relu6_2d.1} parent=43 // pred_fallthru
        _
    $region44: #{conv_transpose_add_relu6_2d.1} parent=5 // pred_fallthru
      _
  $region6: #{conv_transpose_add_relu6_2d.1} parent=0 // loop_footer
    %s14 = sadd.s32 1, %s10
  $region7: #{conv_transpose_add_relu6_2d.1} parent=0 // loop_footer_branch
    %9 = sbr.rel target = $region3
  $region8: #{conv_transpose_add_relu6_2d.1} parent=0 // loop_exit
    _

</llo_original>
